<compile_context>
chip_gen: v7x
topology: tpu7x:2x2x1
jax: 0.10.0
libtpu: 0.0.40
codegen_flags: <defaults>
</compile_context>

<pallas_src>
import functools

import jax
import jax.numpy as jnp
from jax.experimental import pallas as pl
from jax.experimental.pallas import tpu as pltpu


CFG = dict(
    vocab_size=64,
    max_position=32,
    type_vocab=2,
    hidden=32,          # BERT hidden_size
    num_heads=4,
    head_dim=8,
    intermediate=64,
    num_layers=2,
    out_hidden=16,      # args.hidden_size (feedforward_encoder_layer output)
)

SLAB_W = 128  # lane width of the packed parameter-vector slab

# Slab row layout:
#   per layer l (8 rows starting at 8*l):
#     +0 bqkv[3H]  +1 bo[H]  +2 ln1_g[H]  +3 ln1_b[H]
#     +4 b1[I]     +5 b2[H]  +6 ln2_g[H]  +7 ln2_b[H]
#   then: emb_ln_g[H], emb_ln_b[H], head_bias[OUT]
def _slab_used_rows(num_layers):
    return 8 * num_layers + 3


# -----------------------------------------------------------------------------
# Pure-value helpers used inside the kernel
# -----------------------------------------------------------------------------
def _ln(x, g, b, eps):
    mu = jnp.mean(x, axis=-1, keepdims=True)
    xc = x - mu
    var = jnp.mean(xc * xc, axis=-1, keepdims=True)
    return xc * jax.lax.rsqrt(var + eps) * g + b


def _gelu(y):
    # TODO(synk): HF BERT uses erf-based gelu; tanh approximation used here.
    return 0.5 * y * (1.0 + jnp.tanh(0.7978845608028654 * (y + 0.044715 * y * y * y)))


# -----------------------------------------------------------------------------
# Fused Pallas kernel: embed-LN + N transformer layers + Linear/ReLU head
# -----------------------------------------------------------------------------
def _cmsa_kernel(x_ref, bias_ref, wqkv_ref, wo_ref, w1_ref, w2_ref, slab_ref,
                 headw_ref, o_ref, *, batch, seq, num_heads, head_dim,
                 intermediate, num_layers, out_hidden, eps):
    H = num_heads * head_dim
    I = intermediate

    def vec(row, width):
        # (1, width) broadcast row from the packed parameter slab (static slice).
        return slab_ref[row:row + 1, :width]

    x = x_ref[...].astype(jnp.float32)                 # (B*S, H) summed embeddings
    # Embedding LayerNorm (fused prologue).
    x = _ln(x, vec(8 * num_layers, H), vec(8 * num_layers + 1, H), eps)

    bias = bias_ref[...].astype(jnp.float32)           # (B, S) additive key bias
    scale = 1.0 / (head_dim ** 0.5)

    for l in range(num_layers):                        # static unroll (L=2)
        r0 = 8 * l
        # Fused Q|K|V projection over the whole batch: (B*S, H) x (H, 3H).
        qkv = jnp.dot(x, wqkv_ref[l],
                      preferred_element_type=jnp.float32) + vec(r0 + 0, 3 * H)

        # Per-batch / per-head SxS attention (tiny, static unroll); contexts
        # gathered into one (B*S, H) block for a single output projection.
        ctx_rows = []
        for b in range(batch):
            row_lo = b * seq
            bias_b = bias[b:b + 1, :]                  # (1, S) over key axis
            head_ctx = []
            for h in range(num_heads):
                lo = h * head_dim
                hi = lo + head_dim
                q_h = qkv[row_lo:row_lo + seq, lo:hi]              # (S, DH)
                k_h = qkv[row_lo:row_lo + seq, H + lo:H + hi]      # (S, DH)
                v_h = qkv[row_lo:row_lo + seq, 2 * H + lo:2 * H + hi]
                # q @ k^T without an explicit transpose (contract last dims).
                s = jax.lax.dot_general(q_h, k_h, (((1,), (1,)), ((), ())),
                                        preferred_element_type=jnp.float32)
                s = s * scale + bias_b
                s = s - jnp.max(s, axis=-1, keepdims=True)
                p = jnp.exp(s)
                p = p * pl.reciprocal(jnp.sum(p, axis=-1, keepdims=True),
                                      approx=True)
                head_ctx.append(jnp.dot(p, v_h,
                                        preferred_element_type=jnp.float32))
            ctx_rows.append(jnp.concatenate(head_ctx, axis=-1))    # (S, H)
        ctx = jnp.concatenate(ctx_rows, axis=0)                    # (B*S, H)

        # Single output projection (K = H) + residual + LayerNorm 1.
        attn = jnp.dot(ctx, wo_ref[l],
                       preferred_element_type=jnp.float32) + vec(r0 + 1, H)
        h1 = _ln(attn + x, vec(r0 + 2, H), vec(r0 + 3, H), eps)

        # FFN (gelu) + dense + residual + LayerNorm 2.
        ff = jnp.dot(h1, w1_ref[l],
                     preferred_element_type=jnp.float32) + vec(r0 + 4, I)
        ff = _gelu(ff)
        ff = jnp.dot(ff, w2_ref[l],
                     preferred_element_type=jnp.float32) + vec(r0 + 5, H)
        x = _ln(ff + h1, vec(r0 + 6, H), vec(r0 + 7, H), eps)

    # Fused feedforward head: Linear + ReLU (dropout = identity at inference).
    y = jnp.dot(x, headw_ref[...], preferred_element_type=jnp.float32)
    y = y + vec(8 * num_layers + 2, out_hidden)
    o_ref[...] = jnp.maximum(y, 0.0).astype(o_ref.dtype)


def cmsa_fused_call(params, emb_flat, mask_bias):
    B, S = mask_bias.shape
    H, I, L = CFG["hidden"], CFG["intermediate"], CFG["num_layers"]
    NH, DH, OUT = CFG["num_heads"], CFG["head_dim"], CFG["out_hidden"]
    M = B * S
    slab_rows = params["slab"].shape[0]

    def full(shape):
        return pl.BlockSpec(shape, lambda i, _n=len(shape): (0,) * _n)

    # Advisory cost estimate so XLA can overlap the embedding gather.
    flops = (2 * M * H * (3 * H + H + I + I) * L
             + 2 * B * NH * S * S * DH * 2 * L
             + 2 * M * H * OUT)
    transcendentals = L * (B * NH * S * S + M * I) + 4 * M * L + M
    bytes_accessed = 4 * (M * H + B * S
                          + L * (H * 3 * H + H * H + H * I + I * H)
                          + slab_rows * SLAB_W + H * OUT + M * OUT)

    kern = functools.partial(
        _cmsa_kernel, batch=B, seq=S, num_heads=NH, head_dim=DH,
        intermediate=I, num_layers=L, out_hidden=OUT, eps=1e-12)

    return pl.pallas_call(
        kern,
        out_shape=jax.ShapeDtypeStruct((M, OUT), jnp.float32),
        grid=(1,),
        in_specs=[
            full((M, H)),              # summed embeddings (B*S, H)
            full((B, S)),              # additive attention-mask bias
            full((L, H, 3 * H)),       # stacked fused QKV weights
            full((L, H, H)),           # stacked output-projection weights
            full((L, H, I)),           # stacked FFN up weights
            full((L, I, H)),           # stacked FFN down weights
            full((slab_rows, SLAB_W)), # packed bias / LayerNorm slab
            full((H, OUT)),            # feedforward head weight
        ],
        out_specs=full((M, OUT)),
        compiler_params=pltpu.CompilerParams(
            dimension_semantics=("arbitrary",)),
        cost_estimate=pl.CostEstimate(
            flops=int(flops), transcendentals=int(transcendentals),
            bytes_accessed=int(bytes_accessed)),
    )(emb_flat, mask_bias,
      params["wqkv_all"], params["wo_all"], params["w1_all"], params["w2_all"],
      params["slab"], params["ffw"])


# -----------------------------------------------------------------------------
# Mini-BERT + CMSA forward (glue in plain JAX, hot path via the fused kernel)
# -----------------------------------------------------------------------------
def init_params(key):
    H, I, V = CFG["hidden"], CFG["intermediate"], CFG["vocab_size"]
    L, OUT = CFG["num_layers"], CFG["out_hidden"]

    def nrm(k, shape):
        return jax.random.normal(k, shape, jnp.float32) * 0.02

    keys = iter(jax.random.split(key, 64))
    params = dict(
        word_emb=nrm(next(keys), (V, H)),
        pos_emb=nrm(next(keys), (CFG["max_position"], H)),
        type_emb=nrm(next(keys), (CFG["type_vocab"], H)),
        ffw=nrm(next(keys), (H, OUT)),
    )

    used_rows = _slab_used_rows(L)
    slab_rows = ((used_rows + 7) // 8) * 8
    slab = jnp.zeros((slab_rows, SLAB_W), jnp.float32)

    def put(s, r, v):
        return s.at[r, :v.shape[0]].set(v.astype(jnp.float32))

    wqkv, wo, w1, w2 = [], [], [], []
    for l in range(L):
        wqkv.append(nrm(next(keys), (H, 3 * H)))
        wo.append(nrm(next(keys), (H, H)))
        w1.append(nrm(next(keys), (H, I)))
        w2.append(nrm(next(keys), (I, H)))
        r0 = 8 * l
        slab = put(slab, r0 + 0, jnp.zeros((3 * H,)))   # bqkv
        slab = put(slab, r0 + 1, jnp.zeros((H,)))       # bo
        slab = put(slab, r0 + 2, jnp.ones((H,)))        # ln1 gamma
        slab = put(slab, r0 + 3, jnp.zeros((H,)))       # ln1 beta
        slab = put(slab, r0 + 4, jnp.zeros((I,)))       # b1
        slab = put(slab, r0 + 5, jnp.zeros((H,)))       # b2
        slab = put(slab, r0 + 6, jnp.ones((H,)))        # ln2 gamma
        slab = put(slab, r0 + 7, jnp.zeros((H,)))       # ln2 beta
    slab = put(slab, 8 * L + 0, jnp.ones((H,)))         # embedding LN gamma
    slab = put(slab, 8 * L + 1, jnp.zeros((H,)))        # embedding LN beta
    slab = put(slab, 8 * L + 2, jnp.zeros((OUT,)))      # head bias

    params.update(
        wqkv_all=jnp.stack(wqkv),
        wo_all=jnp.stack(wo),
        w1_all=jnp.stack(w1),
        w2_all=jnp.stack(w2),
        slab=slab,
    )
    return params


def cmsa_forward(params, source_token_ids, source_mask, target_label_ids=None):
    B, S = source_token_ids.shape
    H, OUT = CFG["hidden"], CFG["out_hidden"]

    pos_ids = jnp.arange(S, dtype=jnp.int32)
    type_ids = jnp.zeros((B, S), jnp.int32)
    emb = (params["word_emb"][source_token_ids]
           + params["pos_emb"][pos_ids][None, :, :]
           + params["type_emb"][type_ids])
    mask_bias = (1.0 - source_mask.astype(jnp.float32)) * -1e9   # (B, S)

    out = cmsa_fused_call(params, emb.reshape(B * S, H), mask_bias)
    # dropout: identity (inference)
    return out.reshape(B, S, OUT)


# -----------------------------------------------------------------------------
if __name__ == "__main__":
    key = jax.random.PRNGKey(0)
    pkey, tkey = jax.random.split(key)
    params = init_params(pkey)

    B, S = 2, 8
    source_token_ids = jax.random.randint(tkey, (B, S), 0, CFG["vocab_size"],
                                          dtype=jnp.int32)
    source_mask = jnp.ones((B, S), jnp.int32).at[1, 6:].set(0)
    target_label_ids = jnp.zeros((B, S), jnp.int32)  # unused by forward path

    out = cmsa_forward(params, source_token_ids, source_mask, target_label_ids)
    out = jax.block_until_ready(out)
    assert out.shape == (B, S, CFG["out_hidden"])
    assert bool(jnp.all(jnp.isfinite(out)))
    print("KERNEL_OK")
</pallas_src>

<mosaic_0001>
module attributes {stable_mosaic.version = 11 : i64} {
  func.func @_cmsa_kernel(%arg0: i32, %arg1: memref<16x32xf32, #tpu.memory_space<vmem>>, %arg2: memref<2x8xf32, #tpu.memory_space<vmem>>, %arg3: memref<2x32x96xf32, #tpu.memory_space<vmem>>, %arg4: memref<2x32x32xf32, #tpu.memory_space<vmem>>, %arg5: memref<2x32x64xf32, #tpu.memory_space<vmem>>, %arg6: memref<2x64x32xf32, #tpu.memory_space<vmem>>, %arg7: memref<24x128xf32, #tpu.memory_space<vmem>>, %arg8: memref<32x16xf32, #tpu.memory_space<vmem>>, %arg9: memref<16x16xf32, #tpu.memory_space<vmem>>) attributes {dimension_semantics = [#tpu.dimension_semantics<arbitrary>], iteration_bounds = array<i64: 1>, scalar_prefetch = 0 : i64, scratch_operands = 0 : i64, tpu.core_type = #tpu.core_type<tc>, window_params = [{pipeline_mode = #tpu.pipeline_mode<synchronous>, transform_indices = @transform_0, window_bounds = array<i64: 16, 32>}, {pipeline_mode = #tpu.pipeline_mode<synchronous>, transform_indices = @transform_1, window_bounds = array<i64: 2, 8>}, {pipeline_mode = #tpu.pipeline_mode<synchronous>, transform_indices = @transform_2, window_bounds = array<i64: 2, 32, 96>}, {pipeline_mode = #tpu.pipeline_mode<synchronous>, transform_indices = @transform_3, window_bounds = array<i64: 2, 32, 32>}, {pipeline_mode = #tpu.pipeline_mode<synchronous>, transform_indices = @transform_4, window_bounds = array<i64: 2, 32, 64>}, {pipeline_mode = #tpu.pipeline_mode<synchronous>, transform_indices = @transform_5, window_bounds = array<i64: 2, 64, 32>}, {pipeline_mode = #tpu.pipeline_mode<synchronous>, transform_indices = @transform_6, window_bounds = array<i64: 24, 128>}, {pipeline_mode = #tpu.pipeline_mode<synchronous>, transform_indices = @transform_7, window_bounds = array<i64: 32, 16>}, {pipeline_mode = #tpu.pipeline_mode<synchronous>, transform_indices = @transform_8, window_bounds = array<i64: 16, 16>}]} {
    %c0 = arith.constant 0 : index
    %c0_0 = arith.constant 0 : index
    %0 = vector.load %arg1[%c0, %c0_0] : memref<16x32xf32, #tpu.memory_space<vmem>>, vector<16x32xf32>
    %c16 = arith.constant 16 : index
    %c0_1 = arith.constant 0 : index
    %1 = vector.load %arg7[%c16, %c0_1] : memref<24x128xf32, #tpu.memory_space<vmem>>, vector<1x32xf32>
    %c17 = arith.constant 17 : index
    %c0_2 = arith.constant 0 : index
    %2 = vector.load %arg7[%c17, %c0_2] : memref<24x128xf32, #tpu.memory_space<vmem>>, vector<1x32xf32>
    %cst = arith.constant dense<0.000000e+00> : vector<16xf32>
    %3 = vector.multi_reduction <add>, %0, %cst [1] : vector<16x32xf32> to vector<16xf32>
    %4 = vector.shape_cast %3 : vector<16xf32> to vector<16x1xf32>
    %cst_3 = arith.constant 3.200000e+01 : f32
    %5 = vector.broadcast %cst_3 : f32 to vector<16x1xf32>
    %6 = arith.divf %4, %5 : vector<16x1xf32>
    %7 = vector.broadcast %6 : vector<16x1xf32> to vector<16x32xf32>
    %8 = arith.subf %0, %7 : vector<16x32xf32>
    %9 = arith.mulf %8, %8 : vector<16x32xf32>
    %cst_4 = arith.constant dense<0.000000e+00> : vector<16xf32>
    %10 = vector.multi_reduction <add>, %9, %cst_4 [1] : vector<16x32xf32> to vector<16xf32>
    %11 = vector.shape_cast %10 : vector<16xf32> to vector<16x1xf32>
    %cst_5 = arith.constant 3.200000e+01 : f32
    %12 = vector.broadcast %cst_5 : f32 to vector<16x1xf32>
    %13 = arith.divf %11, %12 : vector<16x1xf32>
    %cst_6 = arith.constant 9.99999996E-13 : f32
    %14 = vector.broadcast %cst_6 : f32 to vector<16x1xf32>
    %15 = arith.addf %13, %14 : vector<16x1xf32>
    %16 = math.rsqrt %15 : vector<16x1xf32>
    %17 = vector.broadcast %16 : vector<16x1xf32> to vector<16x32xf32>
    %18 = arith.mulf %8, %17 : vector<16x32xf32>
    %19 = vector.broadcast %1 : vector<1x32xf32> to vector<16x32xf32>
    %20 = arith.mulf %18, %19 : vector<16x32xf32>
    %21 = vector.broadcast %2 : vector<1x32xf32> to vector<16x32xf32>
    %22 = arith.addf %20, %21 : vector<16x32xf32>
    %c0_7 = arith.constant 0 : index
    %c0_8 = arith.constant 0 : index
    %23 = vector.load %arg2[%c0_7, %c0_8] : memref<2x8xf32, #tpu.memory_space<vmem>>, vector<2x8xf32>
    %c0_9 = arith.constant 0 : index
    %c0_10 = arith.constant 0 : index
    %c0_11 = arith.constant 0 : index
    %24 = vector.load %arg3[%c0_9, %c0_10, %c0_11] : memref<2x32x96xf32, #tpu.memory_space<vmem>>, vector<1x32x96xf32>
    %25 = vector.shape_cast %24 : vector<1x32x96xf32> to vector<32x96xf32>
    %cst_12 = arith.constant dense<0.000000e+00> : vector<16x96xf32>
    %26 = tpu.matmul %22, %25, %cst_12 {dimension_numbers = #tpu.dot_dimension_numbers<[1], [0], [0], [1], [0, 0, 1, 1], [], []>} : vector<16x32xf32>, vector<32x96xf32>, vector<16x96xf32> -> vector<16x96xf32>
    %c0_13 = arith.constant 0 : index
    %c0_14 = arith.constant 0 : index
    %27 = vector.load %arg7[%c0_13, %c0_14] : memref<24x128xf32, #tpu.memory_space<vmem>>, vector<1x96xf32>
    %28 = vector.broadcast %27 : vector<1x96xf32> to vector<16x96xf32>
    %29 = arith.addf %26, %28 : vector<16x96xf32>
    %30 = vector.extract_strided_slice %23 {offsets = [0, 0], sizes = [1, 8], strides = [1, 1]} : vector<2x8xf32> to vector<1x8xf32>
    %31 = vector.extract_strided_slice %29 {offsets = [0, 0], sizes = [8, 8], strides = [1, 1]} : vector<16x96xf32> to vector<8x8xf32>
    %32 = vector.extract_strided_slice %29 {offsets = [0, 32], sizes = [8, 8], strides = [1, 1]} : vector<16x96xf32> to vector<8x8xf32>
    %33 = vector.extract_strided_slice %29 {offsets = [0, 64], sizes = [8, 8], strides = [1, 1]} : vector<16x96xf32> to vector<8x8xf32>
    %cst_15 = arith.constant dense<0.000000e+00> : vector<8x8xf32>
    %34 = tpu.matmul %31, %32, %cst_15 {dimension_numbers = #tpu.dot_dimension_numbers<[1], [1], [0], [0], [0, 0, 1, 0], [], []>} : vector<8x8xf32>, vector<8x8xf32>, vector<8x8xf32> -> vector<8x8xf32>
    %cst_16 = arith.constant 0.353553385 : f32
    %35 = vector.broadcast %cst_16 : f32 to vector<8x8xf32>
    %36 = arith.mulf %34, %35 : vector<8x8xf32>
    %37 = vector.broadcast %30 : vector<1x8xf32> to vector<8x8xf32>
    %38 = arith.addf %36, %37 : vector<8x8xf32>
    %cst_17 = arith.constant dense<0xFF800000> : vector<8xf32>
    %39 = vector.multi_reduction <maximumf>, %38, %cst_17 [1] : vector<8x8xf32> to vector<8xf32>
    %40 = vector.shape_cast %39 : vector<8xf32> to vector<8x1xf32>
    %41 = vector.broadcast %40 : vector<8x1xf32> to vector<8x8xf32>
    %42 = arith.subf %38, %41 : vector<8x8xf32>
    %43 = math.exp %42 : vector<8x8xf32>
    %cst_18 = arith.constant dense<0.000000e+00> : vector<8xf32>
    %44 = vector.multi_reduction <add>, %43, %cst_18 [1] : vector<8x8xf32> to vector<8xf32>
    %45 = vector.shape_cast %44 : vector<8xf32> to vector<8x1xf32>
    %46 = tpu.reciprocal %45 {approx = true} : vector<8x1xf32> -> vector<8x1xf32>
    %47 = vector.broadcast %46 : vector<8x1xf32> to vector<8x8xf32>
    %48 = arith.mulf %43, %47 : vector<8x8xf32>
    %cst_19 = arith.constant dense<0.000000e+00> : vector<8x8xf32>
    %49 = tpu.matmul %48, %33, %cst_19 {dimension_numbers = #tpu.dot_dimension_numbers<[1], [0], [0], [1], [0, 0, 1, 1], [], []>} : vector<8x8xf32>, vector<8x8xf32>, vector<8x8xf32> -> vector<8x8xf32>
    %50 = vector.extract_strided_slice %29 {offsets = [0, 8], sizes = [8, 8], strides = [1, 1]} : vector<16x96xf32> to vector<8x8xf32>
    %51 = vector.extract_strided_slice %29 {offsets = [0, 40], sizes = [8, 8], strides = [1, 1]} : vector<16x96xf32> to vector<8x8xf32>
    %52 = vector.extract_strided_slice %29 {offsets = [0, 72], sizes = [8, 8], strides = [1, 1]} : vector<16x96xf32> to vector<8x8xf32>
    %cst_20 = arith.constant dense<0.000000e+00> : vector<8x8xf32>
    %53 = tpu.matmul %50, %51, %cst_20 {dimension_numbers = #tpu.dot_dimension_numbers<[1], [1], [0], [0], [0, 0, 1, 0], [], []>} : vector<8x8xf32>, vector<8x8xf32>, vector<8x8xf32> -> vector<8x8xf32>
    %cst_21 = arith.constant 0.353553385 : f32
    %54 = vector.broadcast %cst_21 : f32 to vector<8x8xf32>
    %55 = arith.mulf %53, %54 : vector<8x8xf32>
    %56 = vector.broadcast %30 : vector<1x8xf32> to vector<8x8xf32>
    %57 = arith.addf %55, %56 : vector<8x8xf32>
    %cst_22 = arith.constant dense<0xFF800000> : vector<8xf32>
    %58 = vector.multi_reduction <maximumf>, %57, %cst_22 [1] : vector<8x8xf32> to vector<8xf32>
    %59 = vector.shape_cast %58 : vector<8xf32> to vector<8x1xf32>
    %60 = vector.broadcast %59 : vector<8x1xf32> to vector<8x8xf32>
    %61 = arith.subf %57, %60 : vector<8x8xf32>
    %62 = math.exp %61 : vector<8x8xf32>
    %cst_23 = arith.constant dense<0.000000e+00> : vector<8xf32>
    %63 = vector.multi_reduction <add>, %62, %cst_23 [1] : vector<8x8xf32> to vector<8xf32>
    %64 = vector.shape_cast %63 : vector<8xf32> to vector<8x1xf32>
    %65 = tpu.reciprocal %64 {approx = true} : vector<8x1xf32> -> vector<8x1xf32>
    %66 = vector.broadcast %65 : vector<8x1xf32> to vector<8x8xf32>
    %67 = arith.mulf %62, %66 : vector<8x8xf32>
    %cst_24 = arith.constant dense<0.000000e+00> : vector<8x8xf32>
    %68 = tpu.matmul %67, %52, %cst_24 {dimension_numbers = #tpu.dot_dimension_numbers<[1], [0], [0], [1], [0, 0, 1, 1], [], []>} : vector<8x8xf32>, vector<8x8xf32>, vector<8x8xf32> -> vector<8x8xf32>
    %69 = vector.extract_strided_slice %29 {offsets = [0, 16], sizes = [8, 8], strides = [1, 1]} : vector<16x96xf32> to vector<8x8xf32>
    %70 = vector.extract_strided_slice %29 {offsets = [0, 48], sizes = [8, 8], strides = [1, 1]} : vector<16x96xf32> to vector<8x8xf32>
    %71 = vector.extract_strided_slice %29 {offsets = [0, 80], sizes = [8, 8], strides = [1, 1]} : vector<16x96xf32> to vector<8x8xf32>
    %cst_25 = arith.constant dense<0.000000e+00> : vector<8x8xf32>
    %72 = tpu.matmul %69, %70, %cst_25 {dimension_numbers = #tpu.dot_dimension_numbers<[1], [1], [0], [0], [0, 0, 1, 0], [], []>} : vector<8x8xf32>, vector<8x8xf32>, vector<8x8xf32> -> vector<8x8xf32>
    %cst_26 = arith.constant 0.353553385 : f32
    %73 = vector.broadcast %cst_26 : f32 to vector<8x8xf32>
    %74 = arith.mulf %72, %73 : vector<8x8xf32>
    %75 = vector.broadcast %30 : vector<1x8xf32> to vector<8x8xf32>
    %76 = arith.addf %74, %75 : vector<8x8xf32>
    %cst_27 = arith.constant dense<0xFF800000> : vector<8xf32>
    %77 = vector.multi_reduction <maximumf>, %76, %cst_27 [1] : vector<8x8xf32> to vector<8xf32>
    %78 = vector.shape_cast %77 : vector<8xf32> to vector<8x1xf32>
    %79 = vector.broadcast %78 : vector<8x1xf32> to vector<8x8xf32>
    %80 = arith.subf %76, %79 : vector<8x8xf32>
    %81 = math.exp %80 : vector<8x8xf32>
    %cst_28 = arith.constant dense<0.000000e+00> : vector<8xf32>
    %82 = vector.multi_reduction <add>, %81, %cst_28 [1] : vector<8x8xf32> to vector<8xf32>
    %83 = vector.shape_cast %82 : vector<8xf32> to vector<8x1xf32>
    %84 = tpu.reciprocal %83 {approx = true} : vector<8x1xf32> -> vector<8x1xf32>
    %85 = vector.broadcast %84 : vector<8x1xf32> to vector<8x8xf32>
    %86 = arith.mulf %81, %85 : vector<8x8xf32>
    %cst_29 = arith.constant dense<0.000000e+00> : vector<8x8xf32>
    %87 = tpu.matmul %86, %71, %cst_29 {dimension_numbers = #tpu.dot_dimension_numbers<[1], [0], [0], [1], [0, 0, 1, 1], [], []>} : vector<8x8xf32>, vector<8x8xf32>, vector<8x8xf32> -> vector<8x8xf32>
    %88 = vector.extract_strided_slice %29 {offsets = [0, 24], sizes = [8, 8], strides = [1, 1]} : vector<16x96xf32> to vector<8x8xf32>
    %89 = vector.extract_strided_slice %29 {offsets = [0, 56], sizes = [8, 8], strides = [1, 1]} : vector<16x96xf32> to vector<8x8xf32>
    %90 = vector.extract_strided_slice %29 {offsets = [0, 88], sizes = [8, 8], strides = [1, 1]} : vector<16x96xf32> to vector<8x8xf32>
    %cst_30 = arith.constant dense<0.000000e+00> : vector<8x8xf32>
    %91 = tpu.matmul %88, %89, %cst_30 {dimension_numbers = #tpu.dot_dimension_numbers<[1], [1], [0], [0], [0, 0, 1, 0], [], []>} : vector<8x8xf32>, vector<8x8xf32>, vector<8x8xf32> -> vector<8x8xf32>
    %cst_31 = arith.constant 0.353553385 : f32
    %92 = vector.broadcast %cst_31 : f32 to vector<8x8xf32>
    %93 = arith.mulf %91, %92 : vector<8x8xf32>
    %94 = vector.broadcast %30 : vector<1x8xf32> to vector<8x8xf32>
    %95 = arith.addf %93, %94 : vector<8x8xf32>
    %cst_32 = arith.constant dense<0xFF800000> : vector<8xf32>
    %96 = vector.multi_reduction <maximumf>, %95, %cst_32 [1] : vector<8x8xf32> to vector<8xf32>
    %97 = vector.shape_cast %96 : vector<8xf32> to vector<8x1xf32>
    %98 = vector.broadcast %97 : vector<8x1xf32> to vector<8x8xf32>
    %99 = arith.subf %95, %98 : vector<8x8xf32>
    %100 = math.exp %99 : vector<8x8xf32>
    %cst_33 = arith.constant dense<0.000000e+00> : vector<8xf32>
    %101 = vector.multi_reduction <add>, %100, %cst_33 [1] : vector<8x8xf32> to vector<8xf32>
    %102 = vector.shape_cast %101 : vector<8xf32> to vector<8x1xf32>
    %103 = tpu.reciprocal %102 {approx = true} : vector<8x1xf32> -> vector<8x1xf32>
    %104 = vector.broadcast %103 : vector<8x1xf32> to vector<8x8xf32>
    %105 = arith.mulf %100, %104 : vector<8x8xf32>
    %cst_34 = arith.constant dense<0.000000e+00> : vector<8x8xf32>
    %106 = tpu.matmul %105, %90, %cst_34 {dimension_numbers = #tpu.dot_dimension_numbers<[1], [0], [0], [1], [0, 0, 1, 1], [], []>} : vector<8x8xf32>, vector<8x8xf32>, vector<8x8xf32> -> vector<8x8xf32>
    %107 = tpu.concatenate %49, %68, %87, %106 in 1 : vector<8x8xf32>, vector<8x8xf32>, vector<8x8xf32>, vector<8x8xf32> -> vector<8x32xf32>
    %108 = vector.extract_strided_slice %23 {offsets = [1, 0], sizes = [1, 8], strides = [1, 1]} : vector<2x8xf32> to vector<1x8xf32>
    %109 = vector.extract_strided_slice %29 {offsets = [8, 0], sizes = [8, 8], strides = [1, 1]} : vector<16x96xf32> to vector<8x8xf32>
    %110 = vector.extract_strided_slice %29 {offsets = [8, 32], sizes = [8, 8], strides = [1, 1]} : vector<16x96xf32> to vector<8x8xf32>
    %111 = vector.extract_strided_slice %29 {offsets = [8, 64], sizes = [8, 8], strides = [1, 1]} : vector<16x96xf32> to vector<8x8xf32>
    %cst_35 = arith.constant dense<0.000000e+00> : vector<8x8xf32>
    %112 = tpu.matmul %109, %110, %cst_35 {dimension_numbers = #tpu.dot_dimension_numbers<[1], [1], [0], [0], [0, 0, 1, 0], [], []>} : vector<8x8xf32>, vector<8x8xf32>, vector<8x8xf32> -> vector<8x8xf32>
    %cst_36 = arith.constant 0.353553385 : f32
    %113 = vector.broadcast %cst_36 : f32 to vector<8x8xf32>
    %114 = arith.mulf %112, %113 : vector<8x8xf32>
    %115 = vector.broadcast %108 : vector<1x8xf32> to vector<8x8xf32>
    %116 = arith.addf %114, %115 : vector<8x8xf32>
    %cst_37 = arith.constant dense<0xFF800000> : vector<8xf32>
    %117 = vector.multi_reduction <maximumf>, %116, %cst_37 [1] : vector<8x8xf32> to vector<8xf32>
    %118 = vector.shape_cast %117 : vector<8xf32> to vector<8x1xf32>
    %119 = vector.broadcast %118 : vector<8x1xf32> to vector<8x8xf32>
    %120 = arith.subf %116, %119 : vector<8x8xf32>
    %121 = math.exp %120 : vector<8x8xf32>
    %cst_38 = arith.constant dense<0.000000e+00> : vector<8xf32>
    %122 = vector.multi_reduction <add>, %121, %cst_38 [1] : vector<8x8xf32> to vector<8xf32>
    %123 = vector.shape_cast %122 : vector<8xf32> to vector<8x1xf32>
    %124 = tpu.reciprocal %123 {approx = true} : vector<8x1xf32> -> vector<8x1xf32>
    %125 = vector.broadcast %124 : vector<8x1xf32> to vector<8x8xf32>
    %126 = arith.mulf %121, %125 : vector<8x8xf32>
    %cst_39 = arith.constant dense<0.000000e+00> : vector<8x8xf32>
    %127 = tpu.matmul %126, %111, %cst_39 {dimension_numbers = #tpu.dot_dimension_numbers<[1], [0], [0], [1], [0, 0, 1, 1], [], []>} : vector<8x8xf32>, vector<8x8xf32>, vector<8x8xf32> -> vector<8x8xf32>
    %128 = vector.extract_strided_slice %29 {offsets = [8, 8], sizes = [8, 8], strides = [1, 1]} : vector<16x96xf32> to vector<8x8xf32>
    %129 = vector.extract_strided_slice %29 {offsets = [8, 40], sizes = [8, 8], strides = [1, 1]} : vector<16x96xf32> to vector<8x8xf32>
    %130 = vector.extract_strided_slice %29 {offsets = [8, 72], sizes = [8, 8], strides = [1, 1]} : vector<16x96xf32> to vector<8x8xf32>
    %cst_40 = arith.constant dense<0.000000e+00> : vector<8x8xf32>
    %131 = tpu.matmul %128, %129, %cst_40 {dimension_numbers = #tpu.dot_dimension_numbers<[1], [1], [0], [0], [0, 0, 1, 0], [], []>} : vector<8x8xf32>, vector<8x8xf32>, vector<8x8xf32> -> vector<8x8xf32>
    %cst_41 = arith.constant 0.353553385 : f32
    %132 = vector.broadcast %cst_41 : f32 to vector<8x8xf32>
    %133 = arith.mulf %131, %132 : vector<8x8xf32>
    %134 = vector.broadcast %108 : vector<1x8xf32> to vector<8x8xf32>
    %135 = arith.addf %133, %134 : vector<8x8xf32>
    %cst_42 = arith.constant dense<0xFF800000> : vector<8xf32>
    %136 = vector.multi_reduction <maximumf>, %135, %cst_42 [1] : vector<8x8xf32> to vector<8xf32>
    %137 = vector.shape_cast %136 : vector<8xf32> to vector<8x1xf32>
    %138 = vector.broadcast %137 : vector<8x1xf32> to vector<8x8xf32>
    %139 = arith.subf %135, %138 : vector<8x8xf32>
    %140 = math.exp %139 : vector<8x8xf32>
    %cst_43 = arith.constant dense<0.000000e+00> : vector<8xf32>
    %141 = vector.multi_reduction <add>, %140, %cst_43 [1] : vector<8x8xf32> to vector<8xf32>
    %142 = vector.shape_cast %141 : vector<8xf32> to vector<8x1xf32>
    %143 = tpu.reciprocal %142 {approx = true} : vector<8x1xf32> -> vector<8x1xf32>
    %144 = vector.broadcast %143 : vector<8x1xf32> to vector<8x8xf32>
    %145 = arith.mulf %140, %144 : vector<8x8xf32>
    %cst_44 = arith.constant dense<0.000000e+00> : vector<8x8xf32>
    %146 = tpu.matmul %145, %130, %cst_44 {dimension_numbers = #tpu.dot_dimension_numbers<[1], [0], [0], [1], [0, 0, 1, 1], [], []>} : vector<8x8xf32>, vector<8x8xf32>, vector<8x8xf32> -> vector<8x8xf32>
    %147 = vector.extract_strided_slice %29 {offsets = [8, 16], sizes = [8, 8], strides = [1, 1]} : vector<16x96xf32> to vector<8x8xf32>
    %148 = vector.extract_strided_slice %29 {offsets = [8, 48], sizes = [8, 8], strides = [1, 1]} : vector<16x96xf32> to vector<8x8xf32>
    %149 = vector.extract_strided_slice %29 {offsets = [8, 80], sizes = [8, 8], strides = [1, 1]} : vector<16x96xf32> to vector<8x8xf32>
    %cst_45 = arith.constant dense<0.000000e+00> : vector<8x8xf32>
    %150 = tpu.matmul %147, %148, %cst_45 {dimension_numbers = #tpu.dot_dimension_numbers<[1], [1], [0], [0], [0, 0, 1, 0], [], []>} : vector<8x8xf32>, vector<8x8xf32>, vector<8x8xf32> -> vector<8x8xf32>
    %cst_46 = arith.constant 0.353553385 : f32
    %151 = vector.broadcast %cst_46 : f32 to vector<8x8xf32>
    %152 = arith.mulf %150, %151 : vector<8x8xf32>
    %153 = vector.broadcast %108 : vector<1x8xf32> to vector<8x8xf32>
    %154 = arith.addf %152, %153 : vector<8x8xf32>
    %cst_47 = arith.constant dense<0xFF800000> : vector<8xf32>
    %155 = vector.multi_reduction <maximumf>, %154, %cst_47 [1] : vector<8x8xf32> to vector<8xf32>
    %156 = vector.shape_cast %155 : vector<8xf32> to vector<8x1xf32>
    %157 = vector.broadcast %156 : vector<8x1xf32> to vector<8x8xf32>
    %158 = arith.subf %154, %157 : vector<8x8xf32>
    %159 = math.exp %158 : vector<8x8xf32>
    %cst_48 = arith.constant dense<0.000000e+00> : vector<8xf32>
    %160 = vector.multi_reduction <add>, %159, %cst_48 [1] : vector<8x8xf32> to vector<8xf32>
    %161 = vector.shape_cast %160 : vector<8xf32> to vector<8x1xf32>
    %162 = tpu.reciprocal %161 {approx = true} : vector<8x1xf32> -> vector<8x1xf32>
    %163 = vector.broadcast %162 : vector<8x1xf32> to vector<8x8xf32>
    %164 = arith.mulf %159, %163 : vector<8x8xf32>
    %cst_49 = arith.constant dense<0.000000e+00> : vector<8x8xf32>
    %165 = tpu.matmul %164, %149, %cst_49 {dimension_numbers = #tpu.dot_dimension_numbers<[1], [0], [0], [1], [0, 0, 1, 1], [], []>} : vector<8x8xf32>, vector<8x8xf32>, vector<8x8xf32> -> vector<8x8xf32>
    %166 = vector.extract_strided_slice %29 {offsets = [8, 24], sizes = [8, 8], strides = [1, 1]} : vector<16x96xf32> to vector<8x8xf32>
    %167 = vector.extract_strided_slice %29 {offsets = [8, 56], sizes = [8, 8], strides = [1, 1]} : vector<16x96xf32> to vector<8x8xf32>
    %168 = vector.extract_strided_slice %29 {offsets = [8, 88], sizes = [8, 8], strides = [1, 1]} : vector<16x96xf32> to vector<8x8xf32>
    %cst_50 = arith.constant dense<0.000000e+00> : vector<8x8xf32>
    %169 = tpu.matmul %166, %167, %cst_50 {dimension_numbers = #tpu.dot_dimension_numbers<[1], [1], [0], [0], [0, 0, 1, 0], [], []>} : vector<8x8xf32>, vector<8x8xf32>, vector<8x8xf32> -> vector<8x8xf32>
    %cst_51 = arith.constant 0.353553385 : f32
    %170 = vector.broadcast %cst_51 : f32 to vector<8x8xf32>
    %171 = arith.mulf %169, %170 : vector<8x8xf32>
    %172 = vector.broadcast %108 : vector<1x8xf32> to vector<8x8xf32>
    %173 = arith.addf %171, %172 : vector<8x8xf32>
    %cst_52 = arith.constant dense<0xFF800000> : vector<8xf32>
    %174 = vector.multi_reduction <maximumf>, %173, %cst_52 [1] : vector<8x8xf32> to vector<8xf32>
    %175 = vector.shape_cast %174 : vector<8xf32> to vector<8x1xf32>
    %176 = vector.broadcast %175 : vector<8x1xf32> to vector<8x8xf32>
    %177 = arith.subf %173, %176 : vector<8x8xf32>
    %178 = math.exp %177 : vector<8x8xf32>
    %cst_53 = arith.constant dense<0.000000e+00> : vector<8xf32>
    %179 = vector.multi_reduction <add>, %178, %cst_53 [1] : vector<8x8xf32> to vector<8xf32>
    %180 = vector.shape_cast %179 : vector<8xf32> to vector<8x1xf32>
    %181 = tpu.reciprocal %180 {approx = true} : vector<8x1xf32> -> vector<8x1xf32>
    %182 = vector.broadcast %181 : vector<8x1xf32> to vector<8x8xf32>
    %183 = arith.mulf %178, %182 : vector<8x8xf32>
    %cst_54 = arith.constant dense<0.000000e+00> : vector<8x8xf32>
    %184 = tpu.matmul %183, %168, %cst_54 {dimension_numbers = #tpu.dot_dimension_numbers<[1], [0], [0], [1], [0, 0, 1, 1], [], []>} : vector<8x8xf32>, vector<8x8xf32>, vector<8x8xf32> -> vector<8x8xf32>
    %185 = tpu.concatenate %127, %146, %165, %184 in 1 : vector<8x8xf32>, vector<8x8xf32>, vector<8x8xf32>, vector<8x8xf32> -> vector<8x32xf32>
    %186 = tpu.concatenate %107, %185 in 0 : vector<8x32xf32>, vector<8x32xf32> -> vector<16x32xf32>
    %c0_55 = arith.constant 0 : index
    %c0_56 = arith.constant 0 : index
    %c0_57 = arith.constant 0 : index
    %187 = vector.load %arg4[%c0_55, %c0_56, %c0_57] : memref<2x32x32xf32, #tpu.memory_space<vmem>>, vector<1x32x32xf32>
    %188 = vector.shape_cast %187 : vector<1x32x32xf32> to vector<32x32xf32>
    %cst_58 = arith.constant dense<0.000000e+00> : vector<16x32xf32>
    %189 = tpu.matmul %186, %188, %cst_58 {dimension_numbers = #tpu.dot_dimension_numbers<[1], [0], [0], [1], [0, 0, 1, 1], [], []>} : vector<16x32xf32>, vector<32x32xf32>, vector<16x32xf32> -> vector<16x32xf32>
    %c1 = arith.constant 1 : index
    %c0_59 = arith.constant 0 : index
    %190 = vector.load %arg7[%c1, %c0_59] : memref<24x128xf32, #tpu.memory_space<vmem>>, vector<1x32xf32>
    %191 = vector.broadcast %190 : vector<1x32xf32> to vector<16x32xf32>
    %192 = arith.addf %189, %191 : vector<16x32xf32>
    %193 = arith.addf %192, %22 : vector<16x32xf32>
    %c2 = arith.constant 2 : index
    %c0_60 = arith.constant 0 : index
    %194 = vector.load %arg7[%c2, %c0_60] : memref<24x128xf32, #tpu.memory_space<vmem>>, vector<1x32xf32>
    %c3 = arith.constant 3 : index
    %c0_61 = arith.constant 0 : index
    %195 = vector.load %arg7[%c3, %c0_61] : memref<24x128xf32, #tpu.memory_space<vmem>>, vector<1x32xf32>
    %cst_62 = arith.constant dense<0.000000e+00> : vector<16xf32>
    %196 = vector.multi_reduction <add>, %193, %cst_62 [1] : vector<16x32xf32> to vector<16xf32>
    %197 = vector.shape_cast %196 : vector<16xf32> to vector<16x1xf32>
    %cst_63 = arith.constant 3.200000e+01 : f32
    %198 = vector.broadcast %cst_63 : f32 to vector<16x1xf32>
    %199 = arith.divf %197, %198 : vector<16x1xf32>
    %200 = vector.broadcast %199 : vector<16x1xf32> to vector<16x32xf32>
    %201 = arith.subf %193, %200 : vector<16x32xf32>
    %202 = arith.mulf %201, %201 : vector<16x32xf32>
    %cst_64 = arith.constant dense<0.000000e+00> : vector<16xf32>
    %203 = vector.multi_reduction <add>, %202, %cst_64 [1] : vector<16x32xf32> to vector<16xf32>
    %204 = vector.shape_cast %203 : vector<16xf32> to vector<16x1xf32>
    %cst_65 = arith.constant 3.200000e+01 : f32
    %205 = vector.broadcast %cst_65 : f32 to vector<16x1xf32>
    %206 = arith.divf %204, %205 : vector<16x1xf32>
    %cst_66 = arith.constant 9.99999996E-13 : f32
    %207 = vector.broadcast %cst_66 : f32 to vector<16x1xf32>
    %208 = arith.addf %206, %207 : vector<16x1xf32>
    %209 = math.rsqrt %208 : vector<16x1xf32>
    %210 = vector.broadcast %209 : vector<16x1xf32> to vector<16x32xf32>
    %211 = arith.mulf %201, %210 : vector<16x32xf32>
    %212 = vector.broadcast %194 : vector<1x32xf32> to vector<16x32xf32>
    %213 = arith.mulf %211, %212 : vector<16x32xf32>
    %214 = vector.broadcast %195 : vector<1x32xf32> to vector<16x32xf32>
    %215 = arith.addf %213, %214 : vector<16x32xf32>
    %c0_67 = arith.constant 0 : index
    %c0_68 = arith.constant 0 : index
    %c0_69 = arith.constant 0 : index
    %216 = vector.load %arg5[%c0_67, %c0_68, %c0_69] : memref<2x32x64xf32, #tpu.memory_space<vmem>>, vector<1x32x64xf32>
    %217 = vector.shape_cast %216 : vector<1x32x64xf32> to vector<32x64xf32>
    %cst_70 = arith.constant dense<0.000000e+00> : vector<16x64xf32>
    %218 = tpu.matmul %215, %217, %cst_70 {dimension_numbers = #tpu.dot_dimension_numbers<[1], [0], [0], [1], [0, 0, 1, 1], [], []>} : vector<16x32xf32>, vector<32x64xf32>, vector<16x64xf32> -> vector<16x64xf32>
    %c4 = arith.constant 4 : index
    %c0_71 = arith.constant 0 : index
    %219 = vector.load %arg7[%c4, %c0_71] : memref<24x128xf32, #tpu.memory_space<vmem>>, vector<1x64xf32>
    %220 = vector.broadcast %219 : vector<1x64xf32> to vector<16x64xf32>
    %221 = arith.addf %218, %220 : vector<16x64xf32>
    %cst_72 = arith.constant 5.000000e-01 : f32
    %222 = vector.broadcast %cst_72 : f32 to vector<16x64xf32>
    %223 = arith.mulf %222, %221 : vector<16x64xf32>
    %cst_73 = arith.constant 4.471500e-02 : f32
    %224 = vector.broadcast %cst_73 : f32 to vector<16x64xf32>
    %225 = arith.mulf %224, %221 : vector<16x64xf32>
    %226 = arith.mulf %225, %221 : vector<16x64xf32>
    %227 = arith.mulf %226, %221 : vector<16x64xf32>
    %228 = arith.addf %221, %227 : vector<16x64xf32>
    %cst_74 = arith.constant 0.797884583 : f32
    %229 = vector.broadcast %cst_74 : f32 to vector<16x64xf32>
    %230 = arith.mulf %229, %228 : vector<16x64xf32>
    %231 = math.tanh %230 : vector<16x64xf32>
    %cst_75 = arith.constant 1.000000e+00 : f32
    %232 = vector.broadcast %cst_75 : f32 to vector<16x64xf32>
    %233 = arith.addf %232, %231 : vector<16x64xf32>
    %234 = arith.mulf %223, %233 : vector<16x64xf32>
    %c0_76 = arith.constant 0 : index
    %c0_77 = arith.constant 0 : index
    %c0_78 = arith.constant 0 : index
    %235 = vector.load %arg6[%c0_76, %c0_77, %c0_78] : memref<2x64x32xf32, #tpu.memory_space<vmem>>, vector<1x64x32xf32>
    %236 = vector.shape_cast %235 : vector<1x64x32xf32> to vector<64x32xf32>
    %cst_79 = arith.constant dense<0.000000e+00> : vector<16x32xf32>
    %237 = tpu.matmul %234, %236, %cst_79 {dimension_numbers = #tpu.dot_dimension_numbers<[1], [0], [0], [1], [0, 0, 1, 1], [], []>} : vector<16x64xf32>, vector<64x32xf32>, vector<16x32xf32> -> vector<16x32xf32>
    %c5 = arith.constant 5 : index
    %c0_80 = arith.constant 0 : index
    %238 = vector.load %arg7[%c5, %c0_80] : memref<24x128xf32, #tpu.memory_space<vmem>>, vector<1x32xf32>
    %239 = vector.broadcast %238 : vector<1x32xf32> to vector<16x32xf32>
    %240 = arith.addf %237, %239 : vector<16x32xf32>
    %241 = arith.addf %240, %215 : vector<16x32xf32>
    %c6 = arith.constant 6 : index
    %c0_81 = arith.constant 0 : index
    %242 = vector.load %arg7[%c6, %c0_81] : memref<24x128xf32, #tpu.memory_space<vmem>>, vector<1x32xf32>
    %c7 = arith.constant 7 : index
    %c0_82 = arith.constant 0 : index
    %243 = vector.load %arg7[%c7, %c0_82] : memref<24x128xf32, #tpu.memory_space<vmem>>, vector<1x32xf32>
    %cst_83 = arith.constant dense<0.000000e+00> : vector<16xf32>
    %244 = vector.multi_reduction <add>, %241, %cst_83 [1] : vector<16x32xf32> to vector<16xf32>
    %245 = vector.shape_cast %244 : vector<16xf32> to vector<16x1xf32>
    %cst_84 = arith.constant 3.200000e+01 : f32
    %246 = vector.broadcast %cst_84 : f32 to vector<16x1xf32>
    %247 = arith.divf %245, %246 : vector<16x1xf32>
    %248 = vector.broadcast %247 : vector<16x1xf32> to vector<16x32xf32>
    %249 = arith.subf %241, %248 : vector<16x32xf32>
    %250 = arith.mulf %249, %249 : vector<16x32xf32>
    %cst_85 = arith.constant dense<0.000000e+00> : vector<16xf32>
    %251 = vector.multi_reduction <add>, %250, %cst_85 [1] : vector<16x32xf32> to vector<16xf32>
    %252 = vector.shape_cast %251 : vector<16xf32> to vector<16x1xf32>
    %cst_86 = arith.constant 3.200000e+01 : f32
    %253 = vector.broadcast %cst_86 : f32 to vector<16x1xf32>
    %254 = arith.divf %252, %253 : vector<16x1xf32>
    %cst_87 = arith.constant 9.99999996E-13 : f32
    %255 = vector.broadcast %cst_87 : f32 to vector<16x1xf32>
    %256 = arith.addf %254, %255 : vector<16x1xf32>
    %257 = math.rsqrt %256 : vector<16x1xf32>
    %258 = vector.broadcast %257 : vector<16x1xf32> to vector<16x32xf32>
    %259 = arith.mulf %249, %258 : vector<16x32xf32>
    %260 = vector.broadcast %242 : vector<1x32xf32> to vector<16x32xf32>
    %261 = arith.mulf %259, %260 : vector<16x32xf32>
    %262 = vector.broadcast %243 : vector<1x32xf32> to vector<16x32xf32>
    %263 = arith.addf %261, %262 : vector<16x32xf32>
    %c1_88 = arith.constant 1 : index
    %c0_89 = arith.constant 0 : index
    %c0_90 = arith.constant 0 : index
    %264 = vector.load %arg3[%c1_88, %c0_89, %c0_90] : memref<2x32x96xf32, #tpu.memory_space<vmem>>, vector<1x32x96xf32>
    %265 = vector.shape_cast %264 : vector<1x32x96xf32> to vector<32x96xf32>
    %cst_91 = arith.constant dense<0.000000e+00> : vector<16x96xf32>
    %266 = tpu.matmul %263, %265, %cst_91 {dimension_numbers = #tpu.dot_dimension_numbers<[1], [0], [0], [1], [0, 0, 1, 1], [], []>} : vector<16x32xf32>, vector<32x96xf32>, vector<16x96xf32> -> vector<16x96xf32>
    %c8 = arith.constant 8 : index
    %c0_92 = arith.constant 0 : index
    %267 = vector.load %arg7[%c8, %c0_92] : memref<24x128xf32, #tpu.memory_space<vmem>>, vector<1x96xf32>
    %268 = vector.broadcast %267 : vector<1x96xf32> to vector<16x96xf32>
    %269 = arith.addf %266, %268 : vector<16x96xf32>
    %270 = vector.extract_strided_slice %23 {offsets = [0, 0], sizes = [1, 8], strides = [1, 1]} : vector<2x8xf32> to vector<1x8xf32>
    %271 = vector.extract_strided_slice %269 {offsets = [0, 0], sizes = [8, 8], strides = [1, 1]} : vector<16x96xf32> to vector<8x8xf32>
    %272 = vector.extract_strided_slice %269 {offsets = [0, 32], sizes = [8, 8], strides = [1, 1]} : vector<16x96xf32> to vector<8x8xf32>
    %273 = vector.extract_strided_slice %269 {offsets = [0, 64], sizes = [8, 8], strides = [1, 1]} : vector<16x96xf32> to vector<8x8xf32>
    %cst_93 = arith.constant dense<0.000000e+00> : vector<8x8xf32>
    %274 = tpu.matmul %271, %272, %cst_93 {dimension_numbers = #tpu.dot_dimension_numbers<[1], [1], [0], [0], [0, 0, 1, 0], [], []>} : vector<8x8xf32>, vector<8x8xf32>, vector<8x8xf32> -> vector<8x8xf32>
    %cst_94 = arith.constant 0.353553385 : f32
    %275 = vector.broadcast %cst_94 : f32 to vector<8x8xf32>
    %276 = arith.mulf %274, %275 : vector<8x8xf32>
    %277 = vector.broadcast %270 : vector<1x8xf32> to vector<8x8xf32>
    %278 = arith.addf %276, %277 : vector<8x8xf32>
    %cst_95 = arith.constant dense<0xFF800000> : vector<8xf32>
    %279 = vector.multi_reduction <maximumf>, %278, %cst_95 [1] : vector<8x8xf32> to vector<8xf32>
    %280 = vector.shape_cast %279 : vector<8xf32> to vector<8x1xf32>
    %281 = vector.broadcast %280 : vector<8x1xf32> to vector<8x8xf32>
    %282 = arith.subf %278, %281 : vector<8x8xf32>
    %283 = math.exp %282 : vector<8x8xf32>
    %cst_96 = arith.constant dense<0.000000e+00> : vector<8xf32>
    %284 = vector.multi_reduction <add>, %283, %cst_96 [1] : vector<8x8xf32> to vector<8xf32>
    %285 = vector.shape_cast %284 : vector<8xf32> to vector<8x1xf32>
    %286 = tpu.reciprocal %285 {approx = true} : vector<8x1xf32> -> vector<8x1xf32>
    %287 = vector.broadcast %286 : vector<8x1xf32> to vector<8x8xf32>
    %288 = arith.mulf %283, %287 : vector<8x8xf32>
    %cst_97 = arith.constant dense<0.000000e+00> : vector<8x8xf32>
    %289 = tpu.matmul %288, %273, %cst_97 {dimension_numbers = #tpu.dot_dimension_numbers<[1], [0], [0], [1], [0, 0, 1, 1], [], []>} : vector<8x8xf32>, vector<8x8xf32>, vector<8x8xf32> -> vector<8x8xf32>
    %290 = vector.extract_strided_slice %269 {offsets = [0, 8], sizes = [8, 8], strides = [1, 1]} : vector<16x96xf32> to vector<8x8xf32>
    %291 = vector.extract_strided_slice %269 {offsets = [0, 40], sizes = [8, 8], strides = [1, 1]} : vector<16x96xf32> to vector<8x8xf32>
    %292 = vector.extract_strided_slice %269 {offsets = [0, 72], sizes = [8, 8], strides = [1, 1]} : vector<16x96xf32> to vector<8x8xf32>
    %cst_98 = arith.constant dense<0.000000e+00> : vector<8x8xf32>
    %293 = tpu.matmul %290, %291, %cst_98 {dimension_numbers = #tpu.dot_dimension_numbers<[1], [1], [0], [0], [0, 0, 1, 0], [], []>} : vector<8x8xf32>, vector<8x8xf32>, vector<8x8xf32> -> vector<8x8xf32>
    %cst_99 = arith.constant 0.353553385 : f32
    %294 = vector.broadcast %cst_99 : f32 to vector<8x8xf32>
    %295 = arith.mulf %293, %294 : vector<8x8xf32>
    %296 = vector.broadcast %270 : vector<1x8xf32> to vector<8x8xf32>
    %297 = arith.addf %295, %296 : vector<8x8xf32>
    %cst_100 = arith.constant dense<0xFF800000> : vector<8xf32>
    %298 = vector.multi_reduction <maximumf>, %297, %cst_100 [1] : vector<8x8xf32> to vector<8xf32>
    %299 = vector.shape_cast %298 : vector<8xf32> to vector<8x1xf32>
    %300 = vector.broadcast %299 : vector<8x1xf32> to vector<8x8xf32>
    %301 = arith.subf %297, %300 : vector<8x8xf32>
    %302 = math.exp %301 : vector<8x8xf32>
    %cst_101 = arith.constant dense<0.000000e+00> : vector<8xf32>
    %303 = vector.multi_reduction <add>, %302, %cst_101 [1] : vector<8x8xf32> to vector<8xf32>
    %304 = vector.shape_cast %303 : vector<8xf32> to vector<8x1xf32>
    %305 = tpu.reciprocal %304 {approx = true} : vector<8x1xf32> -> vector<8x1xf32>
    %306 = vector.broadcast %305 : vector<8x1xf32> to vector<8x8xf32>
    %307 = arith.mulf %302, %306 : vector<8x8xf32>
    %cst_102 = arith.constant dense<0.000000e+00> : vector<8x8xf32>
    %308 = tpu.matmul %307, %292, %cst_102 {dimension_numbers = #tpu.dot_dimension_numbers<[1], [0], [0], [1], [0, 0, 1, 1], [], []>} : vector<8x8xf32>, vector<8x8xf32>, vector<8x8xf32> -> vector<8x8xf32>
    %309 = vector.extract_strided_slice %269 {offsets = [0, 16], sizes = [8, 8], strides = [1, 1]} : vector<16x96xf32> to vector<8x8xf32>
    %310 = vector.extract_strided_slice %269 {offsets = [0, 48], sizes = [8, 8], strides = [1, 1]} : vector<16x96xf32> to vector<8x8xf32>
    %311 = vector.extract_strided_slice %269 {offsets = [0, 80], sizes = [8, 8], strides = [1, 1]} : vector<16x96xf32> to vector<8x8xf32>
    %cst_103 = arith.constant dense<0.000000e+00> : vector<8x8xf32>
    %312 = tpu.matmul %309, %310, %cst_103 {dimension_numbers = #tpu.dot_dimension_numbers<[1], [1], [0], [0], [0, 0, 1, 0], [], []>} : vector<8x8xf32>, vector<8x8xf32>, vector<8x8xf32> -> vector<8x8xf32>
    %cst_104 = arith.constant 0.353553385 : f32
    %313 = vector.broadcast %cst_104 : f32 to vector<8x8xf32>
    %314 = arith.mulf %312, %313 : vector<8x8xf32>
    %315 = vector.broadcast %270 : vector<1x8xf32> to vector<8x8xf32>
    %316 = arith.addf %314, %315 : vector<8x8xf32>
    %cst_105 = arith.constant dense<0xFF800000> : vector<8xf32>
    %317 = vector.multi_reduction <maximumf>, %316, %cst_105 [1] : vector<8x8xf32> to vector<8xf32>
    %318 = vector.shape_cast %317 : vector<8xf32> to vector<8x1xf32>
    %319 = vector.broadcast %318 : vector<8x1xf32> to vector<8x8xf32>
    %320 = arith.subf %316, %319 : vector<8x8xf32>
    %321 = math.exp %320 : vector<8x8xf32>
    %cst_106 = arith.constant dense<0.000000e+00> : vector<8xf32>
    %322 = vector.multi_reduction <add>, %321, %cst_106 [1] : vector<8x8xf32> to vector<8xf32>
    %323 = vector.shape_cast %322 : vector<8xf32> to vector<8x1xf32>
    %324 = tpu.reciprocal %323 {approx = true} : vector<8x1xf32> -> vector<8x1xf32>
    %325 = vector.broadcast %324 : vector<8x1xf32> to vector<8x8xf32>
    %326 = arith.mulf %321, %325 : vector<8x8xf32>
    %cst_107 = arith.constant dense<0.000000e+00> : vector<8x8xf32>
    %327 = tpu.matmul %326, %311, %cst_107 {dimension_numbers = #tpu.dot_dimension_numbers<[1], [0], [0], [1], [0, 0, 1, 1], [], []>} : vector<8x8xf32>, vector<8x8xf32>, vector<8x8xf32> -> vector<8x8xf32>
    %328 = vector.extract_strided_slice %269 {offsets = [0, 24], sizes = [8, 8], strides = [1, 1]} : vector<16x96xf32> to vector<8x8xf32>
    %329 = vector.extract_strided_slice %269 {offsets = [0, 56], sizes = [8, 8], strides = [1, 1]} : vector<16x96xf32> to vector<8x8xf32>
    %330 = vector.extract_strided_slice %269 {offsets = [0, 88], sizes = [8, 8], strides = [1, 1]} : vector<16x96xf32> to vector<8x8xf32>
    %cst_108 = arith.constant dense<0.000000e+00> : vector<8x8xf32>
    %331 = tpu.matmul %328, %329, %cst_108 {dimension_numbers = #tpu.dot_dimension_numbers<[1], [1], [0], [0], [0, 0, 1, 0], [], []>} : vector<8x8xf32>, vector<8x8xf32>, vector<8x8xf32> -> vector<8x8xf32>
    %cst_109 = arith.constant 0.353553385 : f32
    %332 = vector.broadcast %cst_109 : f32 to vector<8x8xf32>
    %333 = arith.mulf %331, %332 : vector<8x8xf32>
    %334 = vector.broadcast %270 : vector<1x8xf32> to vector<8x8xf32>
    %335 = arith.addf %333, %334 : vector<8x8xf32>
    %cst_110 = arith.constant dense<0xFF800000> : vector<8xf32>
    %336 = vector.multi_reduction <maximumf>, %335, %cst_110 [1] : vector<8x8xf32> to vector<8xf32>
    %337 = vector.shape_cast %336 : vector<8xf32> to vector<8x1xf32>
    %338 = vector.broadcast %337 : vector<8x1xf32> to vector<8x8xf32>
    %339 = arith.subf %335, %338 : vector<8x8xf32>
    %340 = math.exp %339 : vector<8x8xf32>
    %cst_111 = arith.constant dense<0.000000e+00> : vector<8xf32>
    %341 = vector.multi_reduction <add>, %340, %cst_111 [1] : vector<8x8xf32> to vector<8xf32>
    %342 = vector.shape_cast %341 : vector<8xf32> to vector<8x1xf32>
    %343 = tpu.reciprocal %342 {approx = true} : vector<8x1xf32> -> vector<8x1xf32>
    %344 = vector.broadcast %343 : vector<8x1xf32> to vector<8x8xf32>
    %345 = arith.mulf %340, %344 : vector<8x8xf32>
    %cst_112 = arith.constant dense<0.000000e+00> : vector<8x8xf32>
    %346 = tpu.matmul %345, %330, %cst_112 {dimension_numbers = #tpu.dot_dimension_numbers<[1], [0], [0], [1], [0, 0, 1, 1], [], []>} : vector<8x8xf32>, vector<8x8xf32>, vector<8x8xf32> -> vector<8x8xf32>
    %347 = tpu.concatenate %289, %308, %327, %346 in 1 : vector<8x8xf32>, vector<8x8xf32>, vector<8x8xf32>, vector<8x8xf32> -> vector<8x32xf32>
    %348 = vector.extract_strided_slice %23 {offsets = [1, 0], sizes = [1, 8], strides = [1, 1]} : vector<2x8xf32> to vector<1x8xf32>
    %349 = vector.extract_strided_slice %269 {offsets = [8, 0], sizes = [8, 8], strides = [1, 1]} : vector<16x96xf32> to vector<8x8xf32>
    %350 = vector.extract_strided_slice %269 {offsets = [8, 32], sizes = [8, 8], strides = [1, 1]} : vector<16x96xf32> to vector<8x8xf32>
    %351 = vector.extract_strided_slice %269 {offsets = [8, 64], sizes = [8, 8], strides = [1, 1]} : vector<16x96xf32> to vector<8x8xf32>
    %cst_113 = arith.constant dense<0.000000e+00> : vector<8x8xf32>
    %352 = tpu.matmul %349, %350, %cst_113 {dimension_numbers = #tpu.dot_dimension_numbers<[1], [1], [0], [0], [0, 0, 1, 0], [], []>} : vector<8x8xf32>, vector<8x8xf32>, vector<8x8xf32> -> vector<8x8xf32>
    %cst_114 = arith.constant 0.353553385 : f32
    %353 = vector.broadcast %cst_114 : f32 to vector<8x8xf32>
    %354 = arith.mulf %352, %353 : vector<8x8xf32>
    %355 = vector.broadcast %348 : vector<1x8xf32> to vector<8x8xf32>
    %356 = arith.addf %354, %355 : vector<8x8xf32>
    %cst_115 = arith.constant dense<0xFF800000> : vector<8xf32>
    %357 = vector.multi_reduction <maximumf>, %356, %cst_115 [1] : vector<8x8xf32> to vector<8xf32>
    %358 = vector.shape_cast %357 : vector<8xf32> to vector<8x1xf32>
    %359 = vector.broadcast %358 : vector<8x1xf32> to vector<8x8xf32>
    %360 = arith.subf %356, %359 : vector<8x8xf32>
    %361 = math.exp %360 : vector<8x8xf32>
    %cst_116 = arith.constant dense<0.000000e+00> : vector<8xf32>
    %362 = vector.multi_reduction <add>, %361, %cst_116 [1] : vector<8x8xf32> to vector<8xf32>
    %363 = vector.shape_cast %362 : vector<8xf32> to vector<8x1xf32>
    %364 = tpu.reciprocal %363 {approx = true} : vector<8x1xf32> -> vector<8x1xf32>
    %365 = vector.broadcast %364 : vector<8x1xf32> to vector<8x8xf32>
    %366 = arith.mulf %361, %365 : vector<8x8xf32>
    %cst_117 = arith.constant dense<0.000000e+00> : vector<8x8xf32>
    %367 = tpu.matmul %366, %351, %cst_117 {dimension_numbers = #tpu.dot_dimension_numbers<[1], [0], [0], [1], [0, 0, 1, 1], [], []>} : vector<8x8xf32>, vector<8x8xf32>, vector<8x8xf32> -> vector<8x8xf32>
    %368 = vector.extract_strided_slice %269 {offsets = [8, 8], sizes = [8, 8], strides = [1, 1]} : vector<16x96xf32> to vector<8x8xf32>
    %369 = vector.extract_strided_slice %269 {offsets = [8, 40], sizes = [8, 8], strides = [1, 1]} : vector<16x96xf32> to vector<8x8xf32>
    %370 = vector.extract_strided_slice %269 {offsets = [8, 72], sizes = [8, 8], strides = [1, 1]} : vector<16x96xf32> to vector<8x8xf32>
    %cst_118 = arith.constant dense<0.000000e+00> : vector<8x8xf32>
    %371 = tpu.matmul %368, %369, %cst_118 {dimension_numbers = #tpu.dot_dimension_numbers<[1], [1], [0], [0], [0, 0, 1, 0], [], []>} : vector<8x8xf32>, vector<8x8xf32>, vector<8x8xf32> -> vector<8x8xf32>
    %cst_119 = arith.constant 0.353553385 : f32
    %372 = vector.broadcast %cst_119 : f32 to vector<8x8xf32>
    %373 = arith.mulf %371, %372 : vector<8x8xf32>
    %374 = vector.broadcast %348 : vector<1x8xf32> to vector<8x8xf32>
    %375 = arith.addf %373, %374 : vector<8x8xf32>
    %cst_120 = arith.constant dense<0xFF800000> : vector<8xf32>
    %376 = vector.multi_reduction <maximumf>, %375, %cst_120 [1] : vector<8x8xf32> to vector<8xf32>
    %377 = vector.shape_cast %376 : vector<8xf32> to vector<8x1xf32>
    %378 = vector.broadcast %377 : vector<8x1xf32> to vector<8x8xf32>
    %379 = arith.subf %375, %378 : vector<8x8xf32>
    %380 = math.exp %379 : vector<8x8xf32>
    %cst_121 = arith.constant dense<0.000000e+00> : vector<8xf32>
    %381 = vector.multi_reduction <add>, %380, %cst_121 [1] : vector<8x8xf32> to vector<8xf32>
    %382 = vector.shape_cast %381 : vector<8xf32> to vector<8x1xf32>
    %383 = tpu.reciprocal %382 {approx = true} : vector<8x1xf32> -> vector<8x1xf32>
    %384 = vector.broadcast %383 : vector<8x1xf32> to vector<8x8xf32>
    %385 = arith.mulf %380, %384 : vector<8x8xf32>
    %cst_122 = arith.constant dense<0.000000e+00> : vector<8x8xf32>
    %386 = tpu.matmul %385, %370, %cst_122 {dimension_numbers = #tpu.dot_dimension_numbers<[1], [0], [0], [1], [0, 0, 1, 1], [], []>} : vector<8x8xf32>, vector<8x8xf32>, vector<8x8xf32> -> vector<8x8xf32>
    %387 = vector.extract_strided_slice %269 {offsets = [8, 16], sizes = [8, 8], strides = [1, 1]} : vector<16x96xf32> to vector<8x8xf32>
    %388 = vector.extract_strided_slice %269 {offsets = [8, 48], sizes = [8, 8], strides = [1, 1]} : vector<16x96xf32> to vector<8x8xf32>
    %389 = vector.extract_strided_slice %269 {offsets = [8, 80], sizes = [8, 8], strides = [1, 1]} : vector<16x96xf32> to vector<8x8xf32>
    %cst_123 = arith.constant dense<0.000000e+00> : vector<8x8xf32>
    %390 = tpu.matmul %387, %388, %cst_123 {dimension_numbers = #tpu.dot_dimension_numbers<[1], [1], [0], [0], [0, 0, 1, 0], [], []>} : vector<8x8xf32>, vector<8x8xf32>, vector<8x8xf32> -> vector<8x8xf32>
    %cst_124 = arith.constant 0.353553385 : f32
    %391 = vector.broadcast %cst_124 : f32 to vector<8x8xf32>
    %392 = arith.mulf %390, %391 : vector<8x8xf32>
    %393 = vector.broadcast %348 : vector<1x8xf32> to vector<8x8xf32>
    %394 = arith.addf %392, %393 : vector<8x8xf32>
    %cst_125 = arith.constant dense<0xFF800000> : vector<8xf32>
    %395 = vector.multi_reduction <maximumf>, %394, %cst_125 [1] : vector<8x8xf32> to vector<8xf32>
    %396 = vector.shape_cast %395 : vector<8xf32> to vector<8x1xf32>
    %397 = vector.broadcast %396 : vector<8x1xf32> to vector<8x8xf32>
    %398 = arith.subf %394, %397 : vector<8x8xf32>
    %399 = math.exp %398 : vector<8x8xf32>
    %cst_126 = arith.constant dense<0.000000e+00> : vector<8xf32>
    %400 = vector.multi_reduction <add>, %399, %cst_126 [1] : vector<8x8xf32> to vector<8xf32>
    %401 = vector.shape_cast %400 : vector<8xf32> to vector<8x1xf32>
    %402 = tpu.reciprocal %401 {approx = true} : vector<8x1xf32> -> vector<8x1xf32>
    %403 = vector.broadcast %402 : vector<8x1xf32> to vector<8x8xf32>
    %404 = arith.mulf %399, %403 : vector<8x8xf32>
    %cst_127 = arith.constant dense<0.000000e+00> : vector<8x8xf32>
    %405 = tpu.matmul %404, %389, %cst_127 {dimension_numbers = #tpu.dot_dimension_numbers<[1], [0], [0], [1], [0, 0, 1, 1], [], []>} : vector<8x8xf32>, vector<8x8xf32>, vector<8x8xf32> -> vector<8x8xf32>
    %406 = vector.extract_strided_slice %269 {offsets = [8, 24], sizes = [8, 8], strides = [1, 1]} : vector<16x96xf32> to vector<8x8xf32>
    %407 = vector.extract_strided_slice %269 {offsets = [8, 56], sizes = [8, 8], strides = [1, 1]} : vector<16x96xf32> to vector<8x8xf32>
    %408 = vector.extract_strided_slice %269 {offsets = [8, 88], sizes = [8, 8], strides = [1, 1]} : vector<16x96xf32> to vector<8x8xf32>
    %cst_128 = arith.constant dense<0.000000e+00> : vector<8x8xf32>
    %409 = tpu.matmul %406, %407, %cst_128 {dimension_numbers = #tpu.dot_dimension_numbers<[1], [1], [0], [0], [0, 0, 1, 0], [], []>} : vector<8x8xf32>, vector<8x8xf32>, vector<8x8xf32> -> vector<8x8xf32>
    %cst_129 = arith.constant 0.353553385 : f32
    %410 = vector.broadcast %cst_129 : f32 to vector<8x8xf32>
    %411 = arith.mulf %409, %410 : vector<8x8xf32>
    %412 = vector.broadcast %348 : vector<1x8xf32> to vector<8x8xf32>
    %413 = arith.addf %411, %412 : vector<8x8xf32>
    %cst_130 = arith.constant dense<0xFF800000> : vector<8xf32>
    %414 = vector.multi_reduction <maximumf>, %413, %cst_130 [1] : vector<8x8xf32> to vector<8xf32>
    %415 = vector.shape_cast %414 : vector<8xf32> to vector<8x1xf32>
    %416 = vector.broadcast %415 : vector<8x1xf32> to vector<8x8xf32>
    %417 = arith.subf %413, %416 : vector<8x8xf32>
    %418 = math.exp %417 : vector<8x8xf32>
    %cst_131 = arith.constant dense<0.000000e+00> : vector<8xf32>
    %419 = vector.multi_reduction <add>, %418, %cst_131 [1] : vector<8x8xf32> to vector<8xf32>
    %420 = vector.shape_cast %419 : vector<8xf32> to vector<8x1xf32>
    %421 = tpu.reciprocal %420 {approx = true} : vector<8x1xf32> -> vector<8x1xf32>
    %422 = vector.broadcast %421 : vector<8x1xf32> to vector<8x8xf32>
    %423 = arith.mulf %418, %422 : vector<8x8xf32>
    %cst_132 = arith.constant dense<0.000000e+00> : vector<8x8xf32>
    %424 = tpu.matmul %423, %408, %cst_132 {dimension_numbers = #tpu.dot_dimension_numbers<[1], [0], [0], [1], [0, 0, 1, 1], [], []>} : vector<8x8xf32>, vector<8x8xf32>, vector<8x8xf32> -> vector<8x8xf32>
    %425 = tpu.concatenate %367, %386, %405, %424 in 1 : vector<8x8xf32>, vector<8x8xf32>, vector<8x8xf32>, vector<8x8xf32> -> vector<8x32xf32>
    %426 = tpu.concatenate %347, %425 in 0 : vector<8x32xf32>, vector<8x32xf32> -> vector<16x32xf32>
    %c1_133 = arith.constant 1 : index
    %c0_134 = arith.constant 0 : index
    %c0_135 = arith.constant 0 : index
    %427 = vector.load %arg4[%c1_133, %c0_134, %c0_135] : memref<2x32x32xf32, #tpu.memory_space<vmem>>, vector<1x32x32xf32>
    %428 = vector.shape_cast %427 : vector<1x32x32xf32> to vector<32x32xf32>
    %cst_136 = arith.constant dense<0.000000e+00> : vector<16x32xf32>
    %429 = tpu.matmul %426, %428, %cst_136 {dimension_numbers = #tpu.dot_dimension_numbers<[1], [0], [0], [1], [0, 0, 1, 1], [], []>} : vector<16x32xf32>, vector<32x32xf32>, vector<16x32xf32> -> vector<16x32xf32>
    %c9 = arith.constant 9 : index
    %c0_137 = arith.constant 0 : index
    %430 = vector.load %arg7[%c9, %c0_137] : memref<24x128xf32, #tpu.memory_space<vmem>>, vector<1x32xf32>
    %431 = vector.broadcast %430 : vector<1x32xf32> to vector<16x32xf32>
    %432 = arith.addf %429, %431 : vector<16x32xf32>
    %433 = arith.addf %432, %263 : vector<16x32xf32>
    %c10 = arith.constant 10 : index
    %c0_138 = arith.constant 0 : index
    %434 = vector.load %arg7[%c10, %c0_138] : memref<24x128xf32, #tpu.memory_space<vmem>>, vector<1x32xf32>
    %c11 = arith.constant 11 : index
    %c0_139 = arith.constant 0 : index
    %435 = vector.load %arg7[%c11, %c0_139] : memref<24x128xf32, #tpu.memory_space<vmem>>, vector<1x32xf32>
    %cst_140 = arith.constant dense<0.000000e+00> : vector<16xf32>
    %436 = vector.multi_reduction <add>, %433, %cst_140 [1] : vector<16x32xf32> to vector<16xf32>
    %437 = vector.shape_cast %436 : vector<16xf32> to vector<16x1xf32>
    %cst_141 = arith.constant 3.200000e+01 : f32
    %438 = vector.broadcast %cst_141 : f32 to vector<16x1xf32>
    %439 = arith.divf %437, %438 : vector<16x1xf32>
    %440 = vector.broadcast %439 : vector<16x1xf32> to vector<16x32xf32>
    %441 = arith.subf %433, %440 : vector<16x32xf32>
    %442 = arith.mulf %441, %441 : vector<16x32xf32>
    %cst_142 = arith.constant dense<0.000000e+00> : vector<16xf32>
    %443 = vector.multi_reduction <add>, %442, %cst_142 [1] : vector<16x32xf32> to vector<16xf32>
    %444 = vector.shape_cast %443 : vector<16xf32> to vector<16x1xf32>
    %cst_143 = arith.constant 3.200000e+01 : f32
    %445 = vector.broadcast %cst_143 : f32 to vector<16x1xf32>
    %446 = arith.divf %444, %445 : vector<16x1xf32>
    %cst_144 = arith.constant 9.99999996E-13 : f32
    %447 = vector.broadcast %cst_144 : f32 to vector<16x1xf32>
    %448 = arith.addf %446, %447 : vector<16x1xf32>
    %449 = math.rsqrt %448 : vector<16x1xf32>
    %450 = vector.broadcast %449 : vector<16x1xf32> to vector<16x32xf32>
    %451 = arith.mulf %441, %450 : vector<16x32xf32>
    %452 = vector.broadcast %434 : vector<1x32xf32> to vector<16x32xf32>
    %453 = arith.mulf %451, %452 : vector<16x32xf32>
    %454 = vector.broadcast %435 : vector<1x32xf32> to vector<16x32xf32>
    %455 = arith.addf %453, %454 : vector<16x32xf32>
    %c1_145 = arith.constant 1 : index
    %c0_146 = arith.constant 0 : index
    %c0_147 = arith.constant 0 : index
    %456 = vector.load %arg5[%c1_145, %c0_146, %c0_147] : memref<2x32x64xf32, #tpu.memory_space<vmem>>, vector<1x32x64xf32>
    %457 = vector.shape_cast %456 : vector<1x32x64xf32> to vector<32x64xf32>
    %cst_148 = arith.constant dense<0.000000e+00> : vector<16x64xf32>
    %458 = tpu.matmul %455, %457, %cst_148 {dimension_numbers = #tpu.dot_dimension_numbers<[1], [0], [0], [1], [0, 0, 1, 1], [], []>} : vector<16x32xf32>, vector<32x64xf32>, vector<16x64xf32> -> vector<16x64xf32>
    %c12 = arith.constant 12 : index
    %c0_149 = arith.constant 0 : index
    %459 = vector.load %arg7[%c12, %c0_149] : memref<24x128xf32, #tpu.memory_space<vmem>>, vector<1x64xf32>
    %460 = vector.broadcast %459 : vector<1x64xf32> to vector<16x64xf32>
    %461 = arith.addf %458, %460 : vector<16x64xf32>
    %cst_150 = arith.constant 5.000000e-01 : f32
    %462 = vector.broadcast %cst_150 : f32 to vector<16x64xf32>
    %463 = arith.mulf %462, %461 : vector<16x64xf32>
    %cst_151 = arith.constant 4.471500e-02 : f32
    %464 = vector.broadcast %cst_151 : f32 to vector<16x64xf32>
    %465 = arith.mulf %464, %461 : vector<16x64xf32>
    %466 = arith.mulf %465, %461 : vector<16x64xf32>
    %467 = arith.mulf %466, %461 : vector<16x64xf32>
    %468 = arith.addf %461, %467 : vector<16x64xf32>
    %cst_152 = arith.constant 0.797884583 : f32
    %469 = vector.broadcast %cst_152 : f32 to vector<16x64xf32>
    %470 = arith.mulf %469, %468 : vector<16x64xf32>
    %471 = math.tanh %470 : vector<16x64xf32>
    %cst_153 = arith.constant 1.000000e+00 : f32
    %472 = vector.broadcast %cst_153 : f32 to vector<16x64xf32>
    %473 = arith.addf %472, %471 : vector<16x64xf32>
    %474 = arith.mulf %463, %473 : vector<16x64xf32>
    %c1_154 = arith.constant 1 : index
    %c0_155 = arith.constant 0 : index
    %c0_156 = arith.constant 0 : index
    %475 = vector.load %arg6[%c1_154, %c0_155, %c0_156] : memref<2x64x32xf32, #tpu.memory_space<vmem>>, vector<1x64x32xf32>
    %476 = vector.shape_cast %475 : vector<1x64x32xf32> to vector<64x32xf32>
    %cst_157 = arith.constant dense<0.000000e+00> : vector<16x32xf32>
    %477 = tpu.matmul %474, %476, %cst_157 {dimension_numbers = #tpu.dot_dimension_numbers<[1], [0], [0], [1], [0, 0, 1, 1], [], []>} : vector<16x64xf32>, vector<64x32xf32>, vector<16x32xf32> -> vector<16x32xf32>
    %c13 = arith.constant 13 : index
    %c0_158 = arith.constant 0 : index
    %478 = vector.load %arg7[%c13, %c0_158] : memref<24x128xf32, #tpu.memory_space<vmem>>, vector<1x32xf32>
    %479 = vector.broadcast %478 : vector<1x32xf32> to vector<16x32xf32>
    %480 = arith.addf %477, %479 : vector<16x32xf32>
    %481 = arith.addf %480, %455 : vector<16x32xf32>
    %c14 = arith.constant 14 : index
    %c0_159 = arith.constant 0 : index
    %482 = vector.load %arg7[%c14, %c0_159] : memref<24x128xf32, #tpu.memory_space<vmem>>, vector<1x32xf32>
    %c15 = arith.constant 15 : index
    %c0_160 = arith.constant 0 : index
    %483 = vector.load %arg7[%c15, %c0_160] : memref<24x128xf32, #tpu.memory_space<vmem>>, vector<1x32xf32>
    %cst_161 = arith.constant dense<0.000000e+00> : vector<16xf32>
    %484 = vector.multi_reduction <add>, %481, %cst_161 [1] : vector<16x32xf32> to vector<16xf32>
    %485 = vector.shape_cast %484 : vector<16xf32> to vector<16x1xf32>
    %cst_162 = arith.constant 3.200000e+01 : f32
    %486 = vector.broadcast %cst_162 : f32 to vector<16x1xf32>
    %487 = arith.divf %485, %486 : vector<16x1xf32>
    %488 = vector.broadcast %487 : vector<16x1xf32> to vector<16x32xf32>
    %489 = arith.subf %481, %488 : vector<16x32xf32>
    %490 = arith.mulf %489, %489 : vector<16x32xf32>
    %cst_163 = arith.constant dense<0.000000e+00> : vector<16xf32>
    %491 = vector.multi_reduction <add>, %490, %cst_163 [1] : vector<16x32xf32> to vector<16xf32>
    %492 = vector.shape_cast %491 : vector<16xf32> to vector<16x1xf32>
    %cst_164 = arith.constant 3.200000e+01 : f32
    %493 = vector.broadcast %cst_164 : f32 to vector<16x1xf32>
    %494 = arith.divf %492, %493 : vector<16x1xf32>
    %cst_165 = arith.constant 9.99999996E-13 : f32
    %495 = vector.broadcast %cst_165 : f32 to vector<16x1xf32>
    %496 = arith.addf %494, %495 : vector<16x1xf32>
    %497 = math.rsqrt %496 : vector<16x1xf32>
    %498 = vector.broadcast %497 : vector<16x1xf32> to vector<16x32xf32>
    %499 = arith.mulf %489, %498 : vector<16x32xf32>
    %500 = vector.broadcast %482 : vector<1x32xf32> to vector<16x32xf32>
    %501 = arith.mulf %499, %500 : vector<16x32xf32>
    %502 = vector.broadcast %483 : vector<1x32xf32> to vector<16x32xf32>
    %503 = arith.addf %501, %502 : vector<16x32xf32>
    %c0_166 = arith.constant 0 : index
    %c0_167 = arith.constant 0 : index
    %504 = vector.load %arg8[%c0_166, %c0_167] : memref<32x16xf32, #tpu.memory_space<vmem>>, vector<32x16xf32>
    %cst_168 = arith.constant dense<0.000000e+00> : vector<16x16xf32>
    %505 = tpu.matmul %503, %504, %cst_168 {dimension_numbers = #tpu.dot_dimension_numbers<[1], [0], [0], [1], [0, 0, 1, 1], [], []>} : vector<16x32xf32>, vector<32x16xf32>, vector<16x16xf32> -> vector<16x16xf32>
    %c18 = arith.constant 18 : index
    %c0_169 = arith.constant 0 : index
    %506 = vector.load %arg7[%c18, %c0_169] : memref<24x128xf32, #tpu.memory_space<vmem>>, vector<1x16xf32>
    %507 = vector.broadcast %506 : vector<1x16xf32> to vector<16x16xf32>
    %508 = arith.addf %505, %507 : vector<16x16xf32>
    %cst_170 = arith.constant 0.000000e+00 : f32
    %509 = vector.broadcast %cst_170 : f32 to vector<16x16xf32>
    %510 = arith.maximumf %508, %509 : vector<16x16xf32>
    %c0_171 = arith.constant 0 : index
    %c0_172 = arith.constant 0 : index
    %511 = vector.load %arg9[%c0_171, %c0_172] : memref<16x16xf32, #tpu.memory_space<vmem>>, vector<16x16xf32>
    tpu.vector_store %arg9[%c0_171, %c0_172], %510 {strides = array<i32>} : memref<16x16xf32, #tpu.memory_space<vmem>>, vector<16x16xf32>,
    return
  }
  func.func @transform_0(%arg0: i32) -> (i32, i32) {
    %c0_i32 = arith.constant 0 : i32
    %c0_i32_0 = arith.constant 0 : i32
    %c0_i32_1 = arith.constant 0 : i32
    return %c0_i32, %c0_i32_0 : i32, i32
  }
  func.func @transform_1(%arg0: i32) -> (i32, i32) {
    %c0_i32 = arith.constant 0 : i32
    %c0_i32_0 = arith.constant 0 : i32
    %c0_i32_1 = arith.constant 0 : i32
    return %c0_i32, %c0_i32_0 : i32, i32
  }
  func.func @transform_2(%arg0: i32) -> (i32, i32, i32) {
    %c0_i32 = arith.constant 0 : i32
    %c0_i32_0 = arith.constant 0 : i32
    %c0_i32_1 = arith.constant 0 : i32
    %c0_i32_2 = arith.constant 0 : i32
    return %c0_i32, %c0_i32_0, %c0_i32_1 : i32, i32, i32
  }
  func.func @transform_3(%arg0: i32) -> (i32, i32, i32) {
    %c0_i32 = arith.constant 0 : i32
    %c0_i32_0 = arith.constant 0 : i32
    %c0_i32_1 = arith.constant 0 : i32
    %c0_i32_2 = arith.constant 0 : i32
    return %c0_i32, %c0_i32_0, %c0_i32_1 : i32, i32, i32
  }
  func.func @transform_4(%arg0: i32) -> (i32, i32, i32) {
    %c0_i32 = arith.constant 0 : i32
    %c0_i32_0 = arith.constant 0 : i32
    %c0_i32_1 = arith.constant 0 : i32
    %c0_i32_2 = arith.constant 0 : i32
    return %c0_i32, %c0_i32_0, %c0_i32_1 : i32, i32, i32
  }
  func.func @transform_5(%arg0: i32) -> (i32, i32, i32) {
    %c0_i32 = arith.constant 0 : i32
    %c0_i32_0 = arith.constant 0 : i32
    %c0_i32_1 = arith.constant 0 : i32
    %c0_i32_2 = arith.constant 0 : i32
    return %c0_i32, %c0_i32_0, %c0_i32_1 : i32, i32, i32
  }
  func.func @transform_6(%arg0: i32) -> (i32, i32) {
    %c0_i32 = arith.constant 0 : i32
    %c0_i32_0 = arith.constant 0 : i32
    %c0_i32_1 = arith.constant 0 : i32
    return %c0_i32, %c0_i32_0 : i32, i32
  }
  func.func @transform_7(%arg0: i32) -> (i32, i32) {
    %c0_i32 = arith.constant 0 : i32
    %c0_i32_0 = arith.constant 0 : i32
    %c0_i32_1 = arith.constant 0 : i32
    return %c0_i32, %c0_i32_0 : i32, i32
  }
  func.func @transform_8(%arg0: i32) -> (i32, i32) {
    %c0_i32 = arith.constant 0 : i32
    %c0_i32_0 = arith.constant 0 : i32
    %c0_i32_1 = arith.constant 0 : i32
    return %c0_i32, %c0_i32_0 : i32, i32
  }
}

</mosaic_0001>

<llo_original>
// kernel: tpu_custom_call.1
$region0: #{tpu_custom_call.1}
  #allocation0 [shape = 'u32[]', space=smem, size = 0x4, offset = 0x4, fixed_abs, tag = 'smem constant byte address 0x4 - core index']
  #allocation1 [shape = 'u32[144,128]{1,0:T(1,128)}', space=vmem, size = 0x12000, scoped, tag = 'internal scratch']
  %s0 = inlined_call_operand.hbm [shape: f32[16,32], index: 0, kind: input, shape index: {}]
  %s1 = inlined_call_operand.vmem [shape: f32[2,8], index: 1, kind: input, shape index: {}]
  %s2 = inlined_call_operand.vmem [shape: f32[2,32,96], index: 2, kind: input, shape index: {}]
  %s3 = inlined_call_operand.vmem [shape: f32[2,32,32], index: 3, kind: input, shape index: {}]
  %s4 = inlined_call_operand.vmem [shape: f32[2,32,64], index: 4, kind: input, shape index: {}]
  %s5 = inlined_call_operand.vmem [shape: f32[2,64,32], index: 5, kind: input, shape index: {}]
  %s6 = inlined_call_operand.hbm [shape: f32[24,128], index: 6, kind: input, shape index: {}]
  %s7 = inlined_call_operand.vmem [shape: f32[32,16], index: 7, kind: input, shape index: {}]
  %s8 = inlined_call_operand.hbm [shape: f32[16,16], index: 8, kind: output, shape index: {}]
  %s9 = sld [smem:[#allocation0]]
  $region50: #{tpu_custom_call.1} parent=0
    _
  %s11 = ssub.s32 1, %s9
  %s12 = scalar_select 0, %s11, %s9
  $region1: #{tpu_custom_call.1} parent=0
    #allocation2 [shape = 'u8[8192]{0}', space=vmem, size = 0x2000, scoped, tag = 'input window, operand 0, single buffered']
    #allocation3 [shape = 's32[1]{0}', space=sflag, size = 0x4, scoped, tag = 'scoped memory for tpu_custom_call.1']
    #allocation4 [shape = 's32[1]{0}', space=sflag, size = 0x4, scoped, tag = 'scoped memory for tpu_custom_call.1']
    #allocation5 [shape = 'u8[12288]{0}', space=vmem, size = 0x3000, scoped, tag = 'input window, operand 6, single buffered']
    #allocation6 [shape = 's32[1]{0}', space=sflag, size = 0x4, scoped, tag = 'scoped memory for tpu_custom_call.1']
    #allocation7 [shape = 'u8[8192]{0}', space=vmem, size = 0x2000, scoped, tag = 'output window, operand 0, single buffered']
    %13 = vsyncpa [#allocation3], 0
    %14 = vsyncpa [#allocation6], 0
    %15 = vsyncpa [#allocation4], 0
    // Predicated region
    $region2: #{tpu_custom_call.1} parent=1 // pred_check
      _
    $region3: #{tpu_custom_call.1} parent=1 // pred_check_branch
      %17 = sbr.rel (0) target = $region5
    $region4: #{tpu_custom_call.1} parent=1 // pred_region
      %s19 = ssub.s32 256, 256
      %20 = vsyncadd [#allocation3], %s19
      %s21 = sshll.u32 [#allocation2], 4
      %s22 = int_to_ptr.vmem [resolvable:$true] %s21
      %27 = dma.hbm_to_vmem [thread:$0]  %s0, 256, %s22, [#allocation3], 128, 128, 8
    $region5: #{tpu_custom_call.1} parent=1 // pred_fallthru
      _
    // Predicated region
    $region6: #{tpu_custom_call.1} parent=1 // pred_check
      _
    $region7: #{tpu_custom_call.1} parent=1 // pred_check_branch
      %29 = sbr.rel (0) target = $region9
    $region8: #{tpu_custom_call.1} parent=1 // pred_region
      _
    $region9: #{tpu_custom_call.1} parent=1 // pred_fallthru
      _
    // Predicated region
    $region10: #{tpu_custom_call.1} parent=1 // pred_check
      _
    $region11: #{tpu_custom_call.1} parent=1 // pred_check_branch
      %31 = sbr.rel (0) target = $region13
    $region12: #{tpu_custom_call.1} parent=1 // pred_region
      _
    $region13: #{tpu_custom_call.1} parent=1 // pred_fallthru
      _
    // Predicated region
    $region14: #{tpu_custom_call.1} parent=1 // pred_check
      _
    $region15: #{tpu_custom_call.1} parent=1 // pred_check_branch
      %33 = sbr.rel (0) target = $region17
    $region16: #{tpu_custom_call.1} parent=1 // pred_region
      _
    $region17: #{tpu_custom_call.1} parent=1 // pred_fallthru
      _
    // Predicated region
    $region18: #{tpu_custom_call.1} parent=1 // pred_check
      _
    $region19: #{tpu_custom_call.1} parent=1 // pred_check_branch
      %35 = sbr.rel (0) target = $region21
    $region20: #{tpu_custom_call.1} parent=1 // pred_region
      _
    $region21: #{tpu_custom_call.1} parent=1 // pred_fallthru
      _
    // Predicated region
    $region22: #{tpu_custom_call.1} parent=1 // pred_check
      _
    $region23: #{tpu_custom_call.1} parent=1 // pred_check_branch
      %37 = sbr.rel (0) target = $region25
    $region24: #{tpu_custom_call.1} parent=1 // pred_region
      _
    $region25: #{tpu_custom_call.1} parent=1 // pred_fallthru
      _
    // Predicated region
    $region26: #{tpu_custom_call.1} parent=1 // pred_check
      _
    $region27: #{tpu_custom_call.1} parent=1 // pred_check_branch
      %39 = sbr.rel (0) target = $region29
    $region28: #{tpu_custom_call.1} parent=1 // pred_region
      %s41 = ssub.s32 384, 384
      %42 = vsyncadd [#allocation6], %s41
      %s43 = sshll.u32 [#allocation5], 4
      %s44 = int_to_ptr.vmem [resolvable:$true] %s43
      %49 = dma.hbm_to_vmem [thread:$0]  %s6, 384, %s44, [#allocation6], 128, 128, 8
    $region29: #{tpu_custom_call.1} parent=1 // pred_fallthru
      _
    // Predicated region
    $region30: #{tpu_custom_call.1} parent=1 // pred_check
      _
    $region31: #{tpu_custom_call.1} parent=1 // pred_check_branch
      %51 = sbr.rel (0) target = $region33
    $region32: #{tpu_custom_call.1} parent=1 // pred_region
      _
    $region33: #{tpu_custom_call.1} parent=1 // pred_fallthru
      _
    // Predicated region
    $region34: #{tpu_custom_call.1} parent=1 // pred_check
      _
    $region35: #{tpu_custom_call.1} parent=1 // pred_check_branch
      %53 = sbr.rel (0) target = $region37
    $region36: #{tpu_custom_call.1} parent=1 // pred_region
      %54 = dma.done [#allocation3], 256
    $region37: #{tpu_custom_call.1} parent=1 // pred_fallthru
      _
    // Predicated region
    $region38: #{tpu_custom_call.1} parent=1 // pred_check
      _
    $region39: #{tpu_custom_call.1} parent=1 // pred_check_branch
      %56 = sbr.rel (0) target = $region41
    $region40: #{tpu_custom_call.1} parent=1 // pred_region
      %57 = dma.done [#allocation6], 384
    $region41: #{tpu_custom_call.1} parent=1 // pred_fallthru
      _
    %v58 = vld [vmem:[#allocation2] sm:$0xff]
    %v59 = vld [vmem:[#allocation2 + $0x8] sm:$0xff]
    %v60 = vld [vmem:[#allocation5 + $0x10] sm:$0x1]
    %v61 = vld [vmem:[#allocation5 + $0x11] sm:$0x1]
    %vm62 = vcmask 261120
    %v63 = vsel %vm62, %v58, 0.0
    %64 = vadd.xlane.f32.xlu0 %v63
    %v65 = vpop.xlane.xlu0 %64
    %v66 = vsel %vm62, %v59, 0.0
    %67 = vadd.xlane.f32.xlu0 %v66
    %v68 = vpop.xlane.xlu0 %67
    %v69 = vrcp.pop 32.0
    %v70 = vmul.f32 %v65, %v69
    %v71 = vmul.f32 %v68, %v69
    %v72 = vsub.f32 %v58, %v70
    %v73 = vsub.f32 %v59, %v71
    %v74 = vmul.f32 %v72, %v72
    %v75 = vmul.f32 %v73, %v73
    %v76 = vsel %vm62, %v74, 0.0
    %77 = vadd.xlane.f32.xlu0 %v76
    %v78 = vpop.xlane.xlu0 %77
    %v79 = vsel %vm62, %v75, 0.0
    %80 = vadd.xlane.f32.xlu0 %v79
    %v81 = vpop.xlane.xlu0 %80
    %v82 = vmul.f32 %v78, %v69
    %v83 = vmul.f32 %v81, %v69
    %v84 = vadd.f32 %v82, 1e-12
    %v85 = vadd.f32 %v83, 1e-12
    %v86 = vrsqrt.pop %v84
    %v87 = vrsqrt.pop %v85
    %v88 = vmul.f32 %v72, %v86
    %v89 = vmul.f32 %v73, %v87
    %v90 = vlaneseq
    %v91 = vshrl.u32 %v90, 7
    %v92 = vsub.s32 0, %v91
    %v93 = vrot.slane %v60, %v92
    %v94 = vmul.f32 %v88, %v93
    %v95 = vmul.f32 %v89, %v93
    %v96 = vlaneseq
    %v97 = vshrl.u32 %v96, 7
    %v98 = vsub.s32 0, %v97
    %v99 = vrot.slane %v61, %v98
    %v100 = vadd.f32 %v94, %v99
    %v101 = vadd.f32 %v95, %v99
    %v102 = vld [vmem:[%s1] sm:$0x3]
    %v103 = vld [vmem:[%s2] sm:$0xff]
    %v104 = vld [vmem:[%s2 + $0x8] sm:$0xff]
    %v105 = vld [vmem:[%s2 + $0x10] sm:$0xff]
    %v106 = vld [vmem:[%s2 + $0x18] sm:$0xff]
    %v107 = vld [vmem:[#allocation5] sm:$0x1]
    %v108 = vlaneseq
    %v109 = vshrl.u32 %v108, 7
    %v110 = vsub.s32 0, %v109
    %v111 = vrot.slane %v107, %v110
    %v113 = vsel %vm62, %v100, 0
    %v116 = vsel %vm62, %v101, 0
    %118 = vmatprep.subr.mxu0 0.0
    %119 = vmatpush1.msra.mxu0 %v103
    %120 = vmatprep.subr.mxu0 0.0
    %121 = vmatpush1.msra.mxu0 %v104
    %122 = vmatprep.subr.mxu0 0.0
    %123 = vmatpush1.msra.mxu0 %v105
    %124 = vmatprep.subr.mxu0 0.0
    %125 = vmatpush1.msra.mxu0 %v106
    %126 = vmatprep.subr.mxu0 0.0
    %127 = vmatpush1.msra.mxu0 0.0
    %128 = vmatprep.subr.mxu0 0.0
    %129 = vmatpush1.msra.mxu0 0.0
    %130 = vmatprep.subr.mxu0 0.0
    %131 = vmatpush1.msra.mxu0 0.0
    %132 = vmatprep.subr.mxu0 0.0
    %133 = vmatpush1.msra.mxu0 0.0
    %134 = vmatprep.subr.mxu0 0.0
    %135 = vmatpush1.msra.mxu0 0.0
    %136 = vmatprep.subr.mxu0 0.0
    %137 = vmatpush1.msra.mxu0 0.0
    %138 = vmatprep.subr.mxu0 0.0
    %139 = vmatpush1.msra.mxu0 0.0
    %140 = vmatprep.subr.mxu0 0.0
    %141 = vmatpush1.msra.mxu0 0.0
    %142 = vmatprep.subr.mxu0 0.0
    %143 = vmatpush1.msra.mxu0 0.0
    %144 = vmatprep.subr.mxu0 0.0
    %145 = vmatpush1.msra.mxu0 0.0
    %146 = vmatprep.subr.mxu0 0.0
    %147 = vmatpush1.msra.mxu0 0.0
    %148 = vmatprep.subr.mxu0 0.0
    %149 = vmatpush1.msra.mxu0 0.0
    %150 = vmatprep.subr.mxu0 0.0
    %151 = vmatpush1.msra.mxu0 0.0
    %152 = vmatprep.subr.mxu0 0.0
    %153 = vmatpush1.msra.mxu0 0.0
    %154 = vmatprep.subr.mxu0 0.0
    %155 = vmatpush1.msra.mxu0 0.0
    %156 = vmatprep.subr.mxu0 0.0
    %157 = vmatpush1.msra.mxu0 0.0
    %158 = vmatprep.subr.mxu0 0.0
    %159 = vmatpush1.msra.mxu0 0.0
    %160 = vmatprep.subr.mxu0 0.0
    %161 = vmatpush1.msra.mxu0 0.0
    %162 = vmatprep.subr.mxu0 0.0
    %163 = vmatpush1.msra.mxu0 0.0
    %164 = vmatprep.subr.mxu0 0.0
    %165 = vmatpush1.msra.mxu0 0.0
    %166 = vmatprep.subr.mxu0 0.0
    %167 = vmatpush1.msra.mxu0 0.0
    %168 = vmatprep.subr.mxu0 0.0
    %169 = vmatpush1.msra.mxu0 0.0
    %170 = vmatprep.subr.mxu0 0.0
    %171 = vmatpush1.msra.mxu0 0.0
    %172 = vmatprep.subr.mxu0 0.0
    %173 = vmatpush1.msra.mxu0 0.0
    %174 = vmatprep.subr.mxu0 0.0
    %175 = vmatpush1.msra.mxu0 0.0
    %176 = vmatprep.subr.mxu0 0.0
    %177 = vmatpush1.msra.mxu0 0.0
    %178 = vmatprep.subr.mxu0 0.0
    %179 = vmatpush1.msra.mxu0 0.0
    %180 = vmatprep.subr.mxu0 0.0
    %181 = vmatpush1.msra.mxu0 0.0
    %182 = vmatprep.mubr.f32.mxu0 0.0
    %183 = vmatmul.mubr.f32.gmra.mrb[0].mxu0 %v113
    %v184 = vpop.f32.mrb[0].mxu0
    %v185 = vadd.f32 %v111, %v184
    %v186 = vpop.f32.mrb[0].mxu0
    %187 = vmatprep.mubr.f32.mxu0 0.0
    %188 = vmatmul.mubr.f32.gmra.mrb[0].mxu0 %v116
    %v189 = vpop.f32.mrb[0].mxu0
    %v190 = vadd.f32 %v111, %v189
    %v191 = vpop.f32.mrb[0].mxu0
    %192 = vdwg.mxu0
    %194 = vrot.lane.b32.xlu0 %v185, 96
    %v195 = vpop.permute.xlu0 %194
    %vm196 = vcmask 64512
    %v197 = vsel %vm196, %v185, 0
    %v199 = vsel %vm196, %v195, 0
    %201 = vmatprep.subr.mxu0 0.0
    %202 = vmatpush1.xpose.msra.mxu0 %v199
    %203 = vmatprep.subr.mxu0 0.0
    %204 = vmatpush1.xpose.msra.mxu0 0.0
    %205 = vmatprep.subr.mxu0 0.0
    %206 = vmatpush1.xpose.msra.mxu0 0.0
    %207 = vmatprep.subr.mxu0 0.0
    %208 = vmatpush1.xpose.msra.mxu0 0.0
    %209 = vmatprep.subr.mxu0 0.0
    %210 = vmatpush1.xpose.msra.mxu0 0.0
    %211 = vmatprep.subr.mxu0 0.0
    %212 = vmatpush1.xpose.msra.mxu0 0.0
    %213 = vmatprep.subr.mxu0 0.0
    %214 = vmatpush1.xpose.msra.mxu0 0.0
    %215 = vmatprep.subr.mxu0 0.0
    %216 = vmatpush1.xpose.msra.mxu0 0.0
    %217 = vmatprep.subr.mxu0 0.0
    %218 = vmatpush1.xpose.msra.mxu0 0.0
    %219 = vmatprep.subr.mxu0 0.0
    %220 = vmatpush1.xpose.msra.mxu0 0.0
    %221 = vmatprep.subr.mxu0 0.0
    %222 = vmatpush1.xpose.msra.mxu0 0.0
    %223 = vmatprep.subr.mxu0 0.0
    %224 = vmatpush1.xpose.msra.mxu0 0.0
    %225 = vmatprep.subr.mxu0 0.0
    %226 = vmatpush1.xpose.msra.mxu0 0.0
    %227 = vmatprep.subr.mxu0 0.0
    %228 = vmatpush1.xpose.msra.mxu0 0.0
    %229 = vmatprep.subr.mxu0 0.0
    %230 = vmatpush1.xpose.msra.mxu0 0.0
    %231 = vmatprep.subr.mxu0 0.0
    %232 = vmatpush1.xpose.msra.mxu0 0.0
    %233 = vmatprep.subr.mxu0 0.0
    %234 = vmatpush1.xpose.msra.mxu0 0.0
    %235 = vmatprep.subr.mxu0 0.0
    %236 = vmatpush1.xpose.msra.mxu0 0.0
    %237 = vmatprep.subr.mxu0 0.0
    %238 = vmatpush1.xpose.msra.mxu0 0.0
    %239 = vmatprep.subr.mxu0 0.0
    %240 = vmatpush1.xpose.msra.mxu0 0.0
    %241 = vmatprep.subr.mxu0 0.0
    %242 = vmatpush1.xpose.msra.mxu0 0.0
    %243 = vmatprep.subr.mxu0 0.0
    %244 = vmatpush1.xpose.msra.mxu0 0.0
    %245 = vmatprep.subr.mxu0 0.0
    %246 = vmatpush1.xpose.msra.mxu0 0.0
    %247 = vmatprep.subr.mxu0 0.0
    %248 = vmatpush1.xpose.msra.mxu0 0.0
    %249 = vmatprep.subr.mxu0 0.0
    %250 = vmatpush1.xpose.msra.mxu0 0.0
    %251 = vmatprep.subr.mxu0 0.0
    %252 = vmatpush1.xpose.msra.mxu0 0.0
    %253 = vmatprep.subr.mxu0 0.0
    %254 = vmatpush1.xpose.msra.mxu0 0.0
    %255 = vmatprep.subr.mxu0 0.0
    %256 = vmatpush1.xpose.msra.mxu0 0.0
    %257 = vmatprep.subr.mxu0 0.0
    %258 = vmatpush1.xpose.msra.mxu0 0.0
    %259 = vmatprep.subr.mxu0 0.0
    %260 = vmatpush1.xpose.msra.mxu0 0.0
    %261 = vmatprep.subr.mxu0 0.0
    %262 = vmatpush1.xpose.msra.mxu0 0.0
    %263 = vmatprep.subr.mxu0 0.0
    %264 = vmatpush1.xpose.msra.mxu0 0.0
    %265 = vmatprep.mubr.f32.mxu0 0.0
    %266 = vmatmul.mubr.f32.gmra.mrb[0].mxu0 %v197
    %v267 = vpop.f32.mrb[0].mxu0
    %v268 = vadd.f32 0.0, %v267
    %v269 = vpop.f32.mrb[0].mxu0
    %270 = vdwg.mxu0
    %v271 = vmul.f32 %v268, 0.35355338
    %v272 = vlaneseq
    %v273 = vshrl.u32 %v272, 7
    %v274 = vsub.s32 0, %v273
    %v275 = vrot.slane %v102, %v274
    %v276 = vadd.f32 %v271, %v275
    %v277 = vsel %vm196, %v276, -inf
    %278 = vmax.xlane.f32.xlu0 %v277
    %v279 = vpop.xlane.xlu0 %278
    %v280 = vsub.f32 %v276, %v279
    %v281 = vmul.f32 %v280, 1.442695
    %v282 = vpow.pop %v281
    %v283 = vsel %vm196, %v282, 0.0
    %284 = vadd.xlane.f32.xlu0 %v283
    %v285 = vpop.xlane.xlu0 %284
    %v286 = vrcp.pop %v285
    %v287 = vmul.f32 %v282, %v286
    %288 = vrot.lane.b32.xlu0 %v185, 64
    %v289 = vpop.permute.xlu0 %288
    %v292 = vsel %vm196, %v287, 0
    %294 = vmatprep.subr.mxu0 0.0
    %295 = vmatpush1.msra.mxu0 %v289
    %296 = vmatprep.subr.mxu0 0.0
    %297 = vmatpush1.msra.mxu0 0.0
    %298 = vmatprep.subr.mxu0 0.0
    %299 = vmatpush1.msra.mxu0 0.0
    %300 = vmatprep.subr.mxu0 0.0
    %301 = vmatpush1.msra.mxu0 0.0
    %302 = vmatprep.subr.mxu0 0.0
    %303 = vmatpush1.msra.mxu0 0.0
    %304 = vmatprep.subr.mxu0 0.0
    %305 = vmatpush1.msra.mxu0 0.0
    %306 = vmatprep.subr.mxu0 0.0
    %307 = vmatpush1.msra.mxu0 0.0
    %308 = vmatprep.subr.mxu0 0.0
    %309 = vmatpush1.msra.mxu0 0.0
    %310 = vmatprep.subr.mxu0 0.0
    %311 = vmatpush1.msra.mxu0 0.0
    %312 = vmatprep.subr.mxu0 0.0
    %313 = vmatpush1.msra.mxu0 0.0
    %314 = vmatprep.subr.mxu0 0.0
    %315 = vmatpush1.msra.mxu0 0.0
    %316 = vmatprep.subr.mxu0 0.0
    %317 = vmatpush1.msra.mxu0 0.0
    %318 = vmatprep.subr.mxu0 0.0
    %319 = vmatpush1.msra.mxu0 0.0
    %320 = vmatprep.subr.mxu0 0.0
    %321 = vmatpush1.msra.mxu0 0.0
    %322 = vmatprep.subr.mxu0 0.0
    %323 = vmatpush1.msra.mxu0 0.0
    %324 = vmatprep.subr.mxu0 0.0
    %325 = vmatpush1.msra.mxu0 0.0
    %326 = vmatprep.subr.mxu0 0.0
    %327 = vmatpush1.msra.mxu0 0.0
    %328 = vmatprep.subr.mxu0 0.0
    %329 = vmatpush1.msra.mxu0 0.0
    %330 = vmatprep.subr.mxu0 0.0
    %331 = vmatpush1.msra.mxu0 0.0
    %332 = vmatprep.subr.mxu0 0.0
    %333 = vmatpush1.msra.mxu0 0.0
    %334 = vmatprep.subr.mxu0 0.0
    %335 = vmatpush1.msra.mxu0 0.0
    %336 = vmatprep.subr.mxu0 0.0
    %337 = vmatpush1.msra.mxu0 0.0
    %338 = vmatprep.subr.mxu0 0.0
    %339 = vmatpush1.msra.mxu0 0.0
    %340 = vmatprep.subr.mxu0 0.0
    %341 = vmatpush1.msra.mxu0 0.0
    %342 = vmatprep.subr.mxu0 0.0
    %343 = vmatpush1.msra.mxu0 0.0
    %344 = vmatprep.subr.mxu0 0.0
    %345 = vmatpush1.msra.mxu0 0.0
    %346 = vmatprep.subr.mxu0 0.0
    %347 = vmatpush1.msra.mxu0 0.0
    %348 = vmatprep.subr.mxu0 0.0
    %349 = vmatpush1.msra.mxu0 0.0
    %350 = vmatprep.subr.mxu0 0.0
    %351 = vmatpush1.msra.mxu0 0.0
    %352 = vmatprep.subr.mxu0 0.0
    %353 = vmatpush1.msra.mxu0 0.0
    %354 = vmatprep.subr.mxu0 0.0
    %355 = vmatpush1.msra.mxu0 0.0
    %356 = vmatprep.subr.mxu0 0.0
    %357 = vmatpush1.msra.mxu0 0.0
    %358 = vmatprep.mubr.f32.mxu0 0.0
    %359 = vmatmul.mubr.f32.gmra.mrb[0].mxu0 %v292
    %v360 = vpop.f32.mrb[0].mxu0
    %v361 = vadd.f32 0.0, %v360
    %v362 = vpop.f32.mrb[0].mxu0
    %363 = vdwg.mxu0
    %364 = vrot.lane.b32.xlu0 %v185, 120
    %v365 = vpop.permute.xlu0 %364
    %366 = vrot.lane.b32.xlu0 %v185, 88
    %v367 = vpop.permute.xlu0 %366
    %v368 = vsel %vm196, %v365, 0
    %v370 = vsel %vm196, %v367, 0
    %372 = vmatprep.subr.mxu0 0.0
    %373 = vmatpush1.xpose.msra.mxu0 %v370
    %374 = vmatprep.subr.mxu0 0.0
    %375 = vmatpush1.xpose.msra.mxu0 0.0
    %376 = vmatprep.subr.mxu0 0.0
    %377 = vmatpush1.xpose.msra.mxu0 0.0
    %378 = vmatprep.subr.mxu0 0.0
    %379 = vmatpush1.xpose.msra.mxu0 0.0
    %380 = vmatprep.subr.mxu0 0.0
    %381 = vmatpush1.xpose.msra.mxu0 0.0
    %382 = vmatprep.subr.mxu0 0.0
    %383 = vmatpush1.xpose.msra.mxu0 0.0
    %384 = vmatprep.subr.mxu0 0.0
    %385 = vmatpush1.xpose.msra.mxu0 0.0
    %386 = vmatprep.subr.mxu0 0.0
    %387 = vmatpush1.xpose.msra.mxu0 0.0
    %388 = vmatprep.subr.mxu0 0.0
    %389 = vmatpush1.xpose.msra.mxu0 0.0
    %390 = vmatprep.subr.mxu0 0.0
    %391 = vmatpush1.xpose.msra.mxu0 0.0
    %392 = vmatprep.subr.mxu0 0.0
    %393 = vmatpush1.xpose.msra.mxu0 0.0
    %394 = vmatprep.subr.mxu0 0.0
    %395 = vmatpush1.xpose.msra.mxu0 0.0
    %396 = vmatprep.subr.mxu0 0.0
    %397 = vmatpush1.xpose.msra.mxu0 0.0
    %398 = vmatprep.subr.mxu0 0.0
    %399 = vmatpush1.xpose.msra.mxu0 0.0
    %400 = vmatprep.subr.mxu0 0.0
    %401 = vmatpush1.xpose.msra.mxu0 0.0
    %402 = vmatprep.subr.mxu0 0.0
    %403 = vmatpush1.xpose.msra.mxu0 0.0
    %404 = vmatprep.subr.mxu0 0.0
    %405 = vmatpush1.xpose.msra.mxu0 0.0
    %406 = vmatprep.subr.mxu0 0.0
    %407 = vmatpush1.xpose.msra.mxu0 0.0
    %408 = vmatprep.subr.mxu0 0.0
    %409 = vmatpush1.xpose.msra.mxu0 0.0
    %410 = vmatprep.subr.mxu0 0.0
    %411 = vmatpush1.xpose.msra.mxu0 0.0
    %412 = vmatprep.subr.mxu0 0.0
    %413 = vmatpush1.xpose.msra.mxu0 0.0
    %414 = vmatprep.subr.mxu0 0.0
    %415 = vmatpush1.xpose.msra.mxu0 0.0
    %416 = vmatprep.subr.mxu0 0.0
    %417 = vmatpush1.xpose.msra.mxu0 0.0
    %418 = vmatprep.subr.mxu0 0.0
    %419 = vmatpush1.xpose.msra.mxu0 0.0
    %420 = vmatprep.subr.mxu0 0.0
    %421 = vmatpush1.xpose.msra.mxu0 0.0
    %422 = vmatprep.subr.mxu0 0.0
    %423 = vmatpush1.xpose.msra.mxu0 0.0
    %424 = vmatprep.subr.mxu0 0.0
    %425 = vmatpush1.xpose.msra.mxu0 0.0
    %426 = vmatprep.subr.mxu0 0.0
    %427 = vmatpush1.xpose.msra.mxu0 0.0
    %428 = vmatprep.subr.mxu0 0.0
    %429 = vmatpush1.xpose.msra.mxu0 0.0
    %430 = vmatprep.subr.mxu0 0.0
    %431 = vmatpush1.xpose.msra.mxu0 0.0
    %432 = vmatprep.subr.mxu0 0.0
    %433 = vmatpush1.xpose.msra.mxu0 0.0
    %434 = vmatprep.subr.mxu0 0.0
    %435 = vmatpush1.xpose.msra.mxu0 0.0
    %436 = vmatprep.mubr.f32.mxu0 0.0
    %437 = vmatmul.mubr.f32.gmra.mrb[0].mxu0 %v368
    %v438 = vpop.f32.mrb[0].mxu0
    %v439 = vadd.f32 0.0, %v438
    %v440 = vpop.f32.mrb[0].mxu0
    %441 = vdwg.mxu0
    %v442 = vmul.f32 %v439, 0.35355338
    %v443 = vadd.f32 %v442, %v275
    %v444 = vsel %vm196, %v443, -inf
    %445 = vmax.xlane.f32.xlu0 %v444
    %v446 = vpop.xlane.xlu0 %445
    %v447 = vsub.f32 %v443, %v446
    %v448 = vmul.f32 %v447, 1.442695
    %v449 = vpow.pop %v448
    %v450 = vsel %vm196, %v449, 0.0
    %451 = vadd.xlane.f32.xlu0 %v450
    %v452 = vpop.xlane.xlu0 %451
    %v453 = vrcp.pop %v452
    %v454 = vmul.f32 %v449, %v453
    %455 = vrot.lane.b32.xlu0 %v185, 56
    %v456 = vpop.permute.xlu0 %455
    %v459 = vsel %vm196, %v454, 0
    %461 = vmatprep.subr.mxu0 0.0
    %462 = vmatpush1.msra.mxu0 %v456
    %463 = vmatprep.subr.mxu0 0.0
    %464 = vmatpush1.msra.mxu0 0.0
    %465 = vmatprep.subr.mxu0 0.0
    %466 = vmatpush1.msra.mxu0 0.0
    %467 = vmatprep.subr.mxu0 0.0
    %468 = vmatpush1.msra.mxu0 0.0
    %469 = vmatprep.subr.mxu0 0.0
    %470 = vmatpush1.msra.mxu0 0.0
    %471 = vmatprep.subr.mxu0 0.0
    %472 = vmatpush1.msra.mxu0 0.0
    %473 = vmatprep.subr.mxu0 0.0
    %474 = vmatpush1.msra.mxu0 0.0
    %475 = vmatprep.subr.mxu0 0.0
    %476 = vmatpush1.msra.mxu0 0.0
    %477 = vmatprep.subr.mxu0 0.0
    %478 = vmatpush1.msra.mxu0 0.0
    %479 = vmatprep.subr.mxu0 0.0
    %480 = vmatpush1.msra.mxu0 0.0
    %481 = vmatprep.subr.mxu0 0.0
    %482 = vmatpush1.msra.mxu0 0.0
    %483 = vmatprep.subr.mxu0 0.0
    %484 = vmatpush1.msra.mxu0 0.0
    %485 = vmatprep.subr.mxu0 0.0
    %486 = vmatpush1.msra.mxu0 0.0
    %487 = vmatprep.subr.mxu0 0.0
    %488 = vmatpush1.msra.mxu0 0.0
    %489 = vmatprep.subr.mxu0 0.0
    %490 = vmatpush1.msra.mxu0 0.0
    %491 = vmatprep.subr.mxu0 0.0
    %492 = vmatpush1.msra.mxu0 0.0
    %493 = vmatprep.subr.mxu0 0.0
    %494 = vmatpush1.msra.mxu0 0.0
    %495 = vmatprep.subr.mxu0 0.0
    %496 = vmatpush1.msra.mxu0 0.0
    %497 = vmatprep.subr.mxu0 0.0
    %498 = vmatpush1.msra.mxu0 0.0
    %499 = vmatprep.subr.mxu0 0.0
    %500 = vmatpush1.msra.mxu0 0.0
    %501 = vmatprep.subr.mxu0 0.0
    %502 = vmatpush1.msra.mxu0 0.0
    %503 = vmatprep.subr.mxu0 0.0
    %504 = vmatpush1.msra.mxu0 0.0
    %505 = vmatprep.subr.mxu0 0.0
    %506 = vmatpush1.msra.mxu0 0.0
    %507 = vmatprep.subr.mxu0 0.0
    %508 = vmatpush1.msra.mxu0 0.0
    %509 = vmatprep.subr.mxu0 0.0
    %510 = vmatpush1.msra.mxu0 0.0
    %511 = vmatprep.subr.mxu0 0.0
    %512 = vmatpush1.msra.mxu0 0.0
    %513 = vmatprep.subr.mxu0 0.0
    %514 = vmatpush1.msra.mxu0 0.0
    %515 = vmatprep.subr.mxu0 0.0
    %516 = vmatpush1.msra.mxu0 0.0
    %517 = vmatprep.subr.mxu0 0.0
    %518 = vmatpush1.msra.mxu0 0.0
    %519 = vmatprep.subr.mxu0 0.0
    %520 = vmatpush1.msra.mxu0 0.0
    %521 = vmatprep.subr.mxu0 0.0
    %522 = vmatpush1.msra.mxu0 0.0
    %523 = vmatprep.subr.mxu0 0.0
    %524 = vmatpush1.msra.mxu0 0.0
    %525 = vmatprep.mubr.f32.mxu0 0.0
    %526 = vmatmul.mubr.f32.gmra.mrb[0].mxu0 %v459
    %v527 = vpop.f32.mrb[0].mxu0
    %v528 = vadd.f32 0.0, %v527
    %v529 = vpop.f32.mrb[0].mxu0
    %530 = vdwg.mxu0
    %531 = vrot.lane.b32.xlu0 %v185, 112
    %v532 = vpop.permute.xlu0 %531
    %533 = vrot.lane.b32.xlu0 %v185, 80
    %v534 = vpop.permute.xlu0 %533
    %v535 = vsel %vm196, %v532, 0
    %v537 = vsel %vm196, %v534, 0
    %539 = vmatprep.subr.mxu0 0.0
    %540 = vmatpush1.xpose.msra.mxu0 %v537
    %541 = vmatprep.subr.mxu0 0.0
    %542 = vmatpush1.xpose.msra.mxu0 0.0
    %543 = vmatprep.subr.mxu0 0.0
    %544 = vmatpush1.xpose.msra.mxu0 0.0
    %545 = vmatprep.subr.mxu0 0.0
    %546 = vmatpush1.xpose.msra.mxu0 0.0
    %547 = vmatprep.subr.mxu0 0.0
    %548 = vmatpush1.xpose.msra.mxu0 0.0
    %549 = vmatprep.subr.mxu0 0.0
    %550 = vmatpush1.xpose.msra.mxu0 0.0
    %551 = vmatprep.subr.mxu0 0.0
    %552 = vmatpush1.xpose.msra.mxu0 0.0
    %553 = vmatprep.subr.mxu0 0.0
    %554 = vmatpush1.xpose.msra.mxu0 0.0
    %555 = vmatprep.subr.mxu0 0.0
    %556 = vmatpush1.xpose.msra.mxu0 0.0
    %557 = vmatprep.subr.mxu0 0.0
    %558 = vmatpush1.xpose.msra.mxu0 0.0
    %559 = vmatprep.subr.mxu0 0.0
    %560 = vmatpush1.xpose.msra.mxu0 0.0
    %561 = vmatprep.subr.mxu0 0.0
    %562 = vmatpush1.xpose.msra.mxu0 0.0
    %563 = vmatprep.subr.mxu0 0.0
    %564 = vmatpush1.xpose.msra.mxu0 0.0
    %565 = vmatprep.subr.mxu0 0.0
    %566 = vmatpush1.xpose.msra.mxu0 0.0
    %567 = vmatprep.subr.mxu0 0.0
    %568 = vmatpush1.xpose.msra.mxu0 0.0
    %569 = vmatprep.subr.mxu0 0.0
    %570 = vmatpush1.xpose.msra.mxu0 0.0
    %571 = vmatprep.subr.mxu0 0.0
    %572 = vmatpush1.xpose.msra.mxu0 0.0
    %573 = vmatprep.subr.mxu0 0.0
    %574 = vmatpush1.xpose.msra.mxu0 0.0
    %575 = vmatprep.subr.mxu0 0.0
    %576 = vmatpush1.xpose.msra.mxu0 0.0
    %577 = vmatprep.subr.mxu0 0.0
    %578 = vmatpush1.xpose.msra.mxu0 0.0
    %579 = vmatprep.subr.mxu0 0.0
    %580 = vmatpush1.xpose.msra.mxu0 0.0
    %581 = vmatprep.subr.mxu0 0.0
    %582 = vmatpush1.xpose.msra.mxu0 0.0
    %583 = vmatprep.subr.mxu0 0.0
    %584 = vmatpush1.xpose.msra.mxu0 0.0
    %585 = vmatprep.subr.mxu0 0.0
    %586 = vmatpush1.xpose.msra.mxu0 0.0
    %587 = vmatprep.subr.mxu0 0.0
    %588 = vmatpush1.xpose.msra.mxu0 0.0
    %589 = vmatprep.subr.mxu0 0.0
    %590 = vmatpush1.xpose.msra.mxu0 0.0
    %591 = vmatprep.subr.mxu0 0.0
    %592 = vmatpush1.xpose.msra.mxu0 0.0
    %593 = vmatprep.subr.mxu0 0.0
    %594 = vmatpush1.xpose.msra.mxu0 0.0
    %595 = vmatprep.subr.mxu0 0.0
    %596 = vmatpush1.xpose.msra.mxu0 0.0
    %597 = vmatprep.subr.mxu0 0.0
    %598 = vmatpush1.xpose.msra.mxu0 0.0
    %599 = vmatprep.subr.mxu0 0.0
    %600 = vmatpush1.xpose.msra.mxu0 0.0
    %601 = vmatprep.subr.mxu0 0.0
    %602 = vmatpush1.xpose.msra.mxu0 0.0
    %603 = vmatprep.mubr.f32.mxu0 0.0
    %604 = vmatmul.mubr.f32.gmra.mrb[0].mxu0 %v535
    %v605 = vpop.f32.mrb[0].mxu0
    %v606 = vadd.f32 0.0, %v605
    %v607 = vpop.f32.mrb[0].mxu0
    %608 = vdwg.mxu0
    %v609 = vmul.f32 %v606, 0.35355338
    %v610 = vadd.f32 %v609, %v275
    %v611 = vsel %vm196, %v610, -inf
    %612 = vmax.xlane.f32.xlu0 %v611
    %v613 = vpop.xlane.xlu0 %612
    %v614 = vsub.f32 %v610, %v613
    %v615 = vmul.f32 %v614, 1.442695
    %v616 = vpow.pop %v615
    %v617 = vsel %vm196, %v616, 0.0
    %618 = vadd.xlane.f32.xlu0 %v617
    %v619 = vpop.xlane.xlu0 %618
    %v620 = vrcp.pop %v619
    %v621 = vmul.f32 %v616, %v620
    %622 = vrot.lane.b32.xlu0 %v185, 48
    %v623 = vpop.permute.xlu0 %622
    %v626 = vsel %vm196, %v621, 0
    %628 = vmatprep.subr.mxu0 0.0
    %629 = vmatpush1.msra.mxu0 %v623
    %630 = vmatprep.subr.mxu0 0.0
    %631 = vmatpush1.msra.mxu0 0.0
    %632 = vmatprep.subr.mxu0 0.0
    %633 = vmatpush1.msra.mxu0 0.0
    %634 = vmatprep.subr.mxu0 0.0
    %635 = vmatpush1.msra.mxu0 0.0
    %636 = vmatprep.subr.mxu0 0.0
    %637 = vmatpush1.msra.mxu0 0.0
    %638 = vmatprep.subr.mxu0 0.0
    %639 = vmatpush1.msra.mxu0 0.0
    %640 = vmatprep.subr.mxu0 0.0
    %641 = vmatpush1.msra.mxu0 0.0
    %642 = vmatprep.subr.mxu0 0.0
    %643 = vmatpush1.msra.mxu0 0.0
    %644 = vmatprep.subr.mxu0 0.0
    %645 = vmatpush1.msra.mxu0 0.0
    %646 = vmatprep.subr.mxu0 0.0
    %647 = vmatpush1.msra.mxu0 0.0
    %648 = vmatprep.subr.mxu0 0.0
    %649 = vmatpush1.msra.mxu0 0.0
    %650 = vmatprep.subr.mxu0 0.0
    %651 = vmatpush1.msra.mxu0 0.0
    %652 = vmatprep.subr.mxu0 0.0
    %653 = vmatpush1.msra.mxu0 0.0
    %654 = vmatprep.subr.mxu0 0.0
    %655 = vmatpush1.msra.mxu0 0.0
    %656 = vmatprep.subr.mxu0 0.0
    %657 = vmatpush1.msra.mxu0 0.0
    %658 = vmatprep.subr.mxu0 0.0
    %659 = vmatpush1.msra.mxu0 0.0
    %660 = vmatprep.subr.mxu0 0.0
    %661 = vmatpush1.msra.mxu0 0.0
    %662 = vmatprep.subr.mxu0 0.0
    %663 = vmatpush1.msra.mxu0 0.0
    %664 = vmatprep.subr.mxu0 0.0
    %665 = vmatpush1.msra.mxu0 0.0
    %666 = vmatprep.subr.mxu0 0.0
    %667 = vmatpush1.msra.mxu0 0.0
    %668 = vmatprep.subr.mxu0 0.0
    %669 = vmatpush1.msra.mxu0 0.0
    %670 = vmatprep.subr.mxu0 0.0
    %671 = vmatpush1.msra.mxu0 0.0
    %672 = vmatprep.subr.mxu0 0.0
    %673 = vmatpush1.msra.mxu0 0.0
    %674 = vmatprep.subr.mxu0 0.0
    %675 = vmatpush1.msra.mxu0 0.0
    %676 = vmatprep.subr.mxu0 0.0
    %677 = vmatpush1.msra.mxu0 0.0
    %678 = vmatprep.subr.mxu0 0.0
    %679 = vmatpush1.msra.mxu0 0.0
    %680 = vmatprep.subr.mxu0 0.0
    %681 = vmatpush1.msra.mxu0 0.0
    %682 = vmatprep.subr.mxu0 0.0
    %683 = vmatpush1.msra.mxu0 0.0
    %684 = vmatprep.subr.mxu0 0.0
    %685 = vmatpush1.msra.mxu0 0.0
    %686 = vmatprep.subr.mxu0 0.0
    %687 = vmatpush1.msra.mxu0 0.0
    %688 = vmatprep.subr.mxu0 0.0
    %689 = vmatpush1.msra.mxu0 0.0
    %690 = vmatprep.subr.mxu0 0.0
    %691 = vmatpush1.msra.mxu0 0.0
    %692 = vmatprep.mubr.f32.mxu0 0.0
    %693 = vmatmul.mubr.f32.gmra.mrb[0].mxu0 %v626
    %v694 = vpop.f32.mrb[0].mxu0
    %v695 = vadd.f32 0.0, %v694
    %v696 = vpop.f32.mrb[0].mxu0
    %697 = vdwg.mxu0
    %698 = vrot.lane.b32.xlu0 %v185, 104
    %v699 = vpop.permute.xlu0 %698
    %700 = vrot.lane.b32.xlu0 %v185, 72
    %v701 = vpop.permute.xlu0 %700
    %v702 = vsel %vm196, %v699, 0
    %v704 = vsel %vm196, %v701, 0
    %706 = vmatprep.subr.mxu0 0.0
    %707 = vmatpush1.xpose.msra.mxu0 %v704
    %708 = vmatprep.subr.mxu0 0.0
    %709 = vmatpush1.xpose.msra.mxu0 0.0
    %710 = vmatprep.subr.mxu0 0.0
    %711 = vmatpush1.xpose.msra.mxu0 0.0
    %712 = vmatprep.subr.mxu0 0.0
    %713 = vmatpush1.xpose.msra.mxu0 0.0
    %714 = vmatprep.subr.mxu0 0.0
    %715 = vmatpush1.xpose.msra.mxu0 0.0
    %716 = vmatprep.subr.mxu0 0.0
    %717 = vmatpush1.xpose.msra.mxu0 0.0
    %718 = vmatprep.subr.mxu0 0.0
    %719 = vmatpush1.xpose.msra.mxu0 0.0
    %720 = vmatprep.subr.mxu0 0.0
    %721 = vmatpush1.xpose.msra.mxu0 0.0
    %722 = vmatprep.subr.mxu0 0.0
    %723 = vmatpush1.xpose.msra.mxu0 0.0
    %724 = vmatprep.subr.mxu0 0.0
    %725 = vmatpush1.xpose.msra.mxu0 0.0
    %726 = vmatprep.subr.mxu0 0.0
    %727 = vmatpush1.xpose.msra.mxu0 0.0
    %728 = vmatprep.subr.mxu0 0.0
    %729 = vmatpush1.xpose.msra.mxu0 0.0
    %730 = vmatprep.subr.mxu0 0.0
    %731 = vmatpush1.xpose.msra.mxu0 0.0
    %732 = vmatprep.subr.mxu0 0.0
    %733 = vmatpush1.xpose.msra.mxu0 0.0
    %734 = vmatprep.subr.mxu0 0.0
    %735 = vmatpush1.xpose.msra.mxu0 0.0
    %736 = vmatprep.subr.mxu0 0.0
    %737 = vmatpush1.xpose.msra.mxu0 0.0
    %738 = vmatprep.subr.mxu0 0.0
    %739 = vmatpush1.xpose.msra.mxu0 0.0
    %740 = vmatprep.subr.mxu0 0.0
    %741 = vmatpush1.xpose.msra.mxu0 0.0
    %742 = vmatprep.subr.mxu0 0.0
    %743 = vmatpush1.xpose.msra.mxu0 0.0
    %744 = vmatprep.subr.mxu0 0.0
    %745 = vmatpush1.xpose.msra.mxu0 0.0
    %746 = vmatprep.subr.mxu0 0.0
    %747 = vmatpush1.xpose.msra.mxu0 0.0
    %748 = vmatprep.subr.mxu0 0.0
    %749 = vmatpush1.xpose.msra.mxu0 0.0
    %750 = vmatprep.subr.mxu0 0.0
    %751 = vmatpush1.xpose.msra.mxu0 0.0
    %752 = vmatprep.subr.mxu0 0.0
    %753 = vmatpush1.xpose.msra.mxu0 0.0
    %754 = vmatprep.subr.mxu0 0.0
    %755 = vmatpush1.xpose.msra.mxu0 0.0
    %756 = vmatprep.subr.mxu0 0.0
    %757 = vmatpush1.xpose.msra.mxu0 0.0
    %758 = vmatprep.subr.mxu0 0.0
    %759 = vmatpush1.xpose.msra.mxu0 0.0
    %760 = vmatprep.subr.mxu0 0.0
    %761 = vmatpush1.xpose.msra.mxu0 0.0
    %762 = vmatprep.subr.mxu0 0.0
    %763 = vmatpush1.xpose.msra.mxu0 0.0
    %764 = vmatprep.subr.mxu0 0.0
    %765 = vmatpush1.xpose.msra.mxu0 0.0
    %766 = vmatprep.subr.mxu0 0.0
    %767 = vmatpush1.xpose.msra.mxu0 0.0
    %768 = vmatprep.subr.mxu0 0.0
    %769 = vmatpush1.xpose.msra.mxu0 0.0
    %770 = vmatprep.mubr.f32.mxu0 0.0
    %771 = vmatmul.mubr.f32.gmra.mrb[0].mxu0 %v702
    %v772 = vpop.f32.mrb[0].mxu0
    %v773 = vadd.f32 0.0, %v772
    %v774 = vpop.f32.mrb[0].mxu0
    %775 = vdwg.mxu0
    %v776 = vmul.f32 %v773, 0.35355338
    %v777 = vadd.f32 %v776, %v275
    %v778 = vsel %vm196, %v777, -inf
    %779 = vmax.xlane.f32.xlu0 %v778
    %v780 = vpop.xlane.xlu0 %779
    %v781 = vsub.f32 %v777, %v780
    %v782 = vmul.f32 %v781, 1.442695
    %v783 = vpow.pop %v782
    %v784 = vsel %vm196, %v783, 0.0
    %785 = vadd.xlane.f32.xlu0 %v784
    %v786 = vpop.xlane.xlu0 %785
    %v787 = vrcp.pop %v786
    %v788 = vmul.f32 %v783, %v787
    %789 = vrot.lane.b32.xlu0 %v185, 40
    %v790 = vpop.permute.xlu0 %789
    %v793 = vsel %vm196, %v788, 0
    %795 = vmatprep.subr.mxu0 0.0
    %796 = vmatpush1.msra.mxu0 %v790
    %797 = vmatprep.subr.mxu0 0.0
    %798 = vmatpush1.msra.mxu0 0.0
    %799 = vmatprep.subr.mxu0 0.0
    %800 = vmatpush1.msra.mxu0 0.0
    %801 = vmatprep.subr.mxu0 0.0
    %802 = vmatpush1.msra.mxu0 0.0
    %803 = vmatprep.subr.mxu0 0.0
    %804 = vmatpush1.msra.mxu0 0.0
    %805 = vmatprep.subr.mxu0 0.0
    %806 = vmatpush1.msra.mxu0 0.0
    %807 = vmatprep.subr.mxu0 0.0
    %808 = vmatpush1.msra.mxu0 0.0
    %809 = vmatprep.subr.mxu0 0.0
    %810 = vmatpush1.msra.mxu0 0.0
    %811 = vmatprep.subr.mxu0 0.0
    %812 = vmatpush1.msra.mxu0 0.0
    %813 = vmatprep.subr.mxu0 0.0
    %814 = vmatpush1.msra.mxu0 0.0
    %815 = vmatprep.subr.mxu0 0.0
    %816 = vmatpush1.msra.mxu0 0.0
    %817 = vmatprep.subr.mxu0 0.0
    %818 = vmatpush1.msra.mxu0 0.0
    %819 = vmatprep.subr.mxu0 0.0
    %820 = vmatpush1.msra.mxu0 0.0
    %821 = vmatprep.subr.mxu0 0.0
    %822 = vmatpush1.msra.mxu0 0.0
    %823 = vmatprep.subr.mxu0 0.0
    %824 = vmatpush1.msra.mxu0 0.0
    %825 = vmatprep.subr.mxu0 0.0
    %826 = vmatpush1.msra.mxu0 0.0
    %827 = vmatprep.subr.mxu0 0.0
    %828 = vmatpush1.msra.mxu0 0.0
    %829 = vmatprep.subr.mxu0 0.0
    %830 = vmatpush1.msra.mxu0 0.0
    %831 = vmatprep.subr.mxu0 0.0
    %832 = vmatpush1.msra.mxu0 0.0
    %833 = vmatprep.subr.mxu0 0.0
    %834 = vmatpush1.msra.mxu0 0.0
    %835 = vmatprep.subr.mxu0 0.0
    %836 = vmatpush1.msra.mxu0 0.0
    %837 = vmatprep.subr.mxu0 0.0
    %838 = vmatpush1.msra.mxu0 0.0
    %839 = vmatprep.subr.mxu0 0.0
    %840 = vmatpush1.msra.mxu0 0.0
    %841 = vmatprep.subr.mxu0 0.0
    %842 = vmatpush1.msra.mxu0 0.0
    %843 = vmatprep.subr.mxu0 0.0
    %844 = vmatpush1.msra.mxu0 0.0
    %845 = vmatprep.subr.mxu0 0.0
    %846 = vmatpush1.msra.mxu0 0.0
    %847 = vmatprep.subr.mxu0 0.0
    %848 = vmatpush1.msra.mxu0 0.0
    %849 = vmatprep.subr.mxu0 0.0
    %850 = vmatpush1.msra.mxu0 0.0
    %851 = vmatprep.subr.mxu0 0.0
    %852 = vmatpush1.msra.mxu0 0.0
    %853 = vmatprep.subr.mxu0 0.0
    %854 = vmatpush1.msra.mxu0 0.0
    %855 = vmatprep.subr.mxu0 0.0
    %856 = vmatpush1.msra.mxu0 0.0
    %857 = vmatprep.subr.mxu0 0.0
    %858 = vmatpush1.msra.mxu0 0.0
    %859 = vmatprep.mubr.f32.mxu0 0.0
    %860 = vmatmul.mubr.f32.gmra.mrb[0].mxu0 %v793
    %v861 = vpop.f32.mrb[0].mxu0
    %v862 = vadd.f32 0.0, %v861
    %v863 = vpop.f32.mrb[0].mxu0
    %864 = vdwg.mxu0
    %866 = vrot.lane.b32.xlu0 %v528, 8
    %v867 = vpop.permute.xlu0 %866
    %870 = vrot.lane.b32.xlu0 %v695, 16
    %v871 = vpop.permute.xlu0 %870
    %874 = vrot.lane.b32.xlu0 %v862, 24
    %v875 = vpop.permute.xlu0 %874
    %v877 = vsel %vm196, %v361, %v867
    %vm878 = vcmask 130048
    %v879 = vsel %vm878, %v877, %v871
    %vm880 = vcmask 195584
    %v881 = vsel %vm880, %v879, %v875
    %883 = vrot.lane.b32.xlu0 %v190, 96
    %v884 = vpop.permute.xlu0 %883
    %v885 = vsel %vm196, %v190, 0
    %v887 = vsel %vm196, %v884, 0
    %889 = vmatprep.subr.mxu0 0.0
    %890 = vmatpush1.xpose.msra.mxu0 %v887
    %891 = vmatprep.subr.mxu0 0.0
    %892 = vmatpush1.xpose.msra.mxu0 0.0
    %893 = vmatprep.subr.mxu0 0.0
    %894 = vmatpush1.xpose.msra.mxu0 0.0
    %895 = vmatprep.subr.mxu0 0.0
    %896 = vmatpush1.xpose.msra.mxu0 0.0
    %897 = vmatprep.subr.mxu0 0.0
    %898 = vmatpush1.xpose.msra.mxu0 0.0
    %899 = vmatprep.subr.mxu0 0.0
    %900 = vmatpush1.xpose.msra.mxu0 0.0
    %901 = vmatprep.subr.mxu0 0.0
    %902 = vmatpush1.xpose.msra.mxu0 0.0
    %903 = vmatprep.subr.mxu0 0.0
    %904 = vmatpush1.xpose.msra.mxu0 0.0
    %905 = vmatprep.subr.mxu0 0.0
    %906 = vmatpush1.xpose.msra.mxu0 0.0
    %907 = vmatprep.subr.mxu0 0.0
    %908 = vmatpush1.xpose.msra.mxu0 0.0
    %909 = vmatprep.subr.mxu0 0.0
    %910 = vmatpush1.xpose.msra.mxu0 0.0
    %911 = vmatprep.subr.mxu0 0.0
    %912 = vmatpush1.xpose.msra.mxu0 0.0
    %913 = vmatprep.subr.mxu0 0.0
    %914 = vmatpush1.xpose.msra.mxu0 0.0
    %915 = vmatprep.subr.mxu0 0.0
    %916 = vmatpush1.xpose.msra.mxu0 0.0
    %917 = vmatprep.subr.mxu0 0.0
    %918 = vmatpush1.xpose.msra.mxu0 0.0
    %919 = vmatprep.subr.mxu0 0.0
    %920 = vmatpush1.xpose.msra.mxu0 0.0
    %921 = vmatprep.subr.mxu0 0.0
    %922 = vmatpush1.xpose.msra.mxu0 0.0
    %923 = vmatprep.subr.mxu0 0.0
    %924 = vmatpush1.xpose.msra.mxu0 0.0
    %925 = vmatprep.subr.mxu0 0.0
    %926 = vmatpush1.xpose.msra.mxu0 0.0
    %927 = vmatprep.subr.mxu0 0.0
    %928 = vmatpush1.xpose.msra.mxu0 0.0
    %929 = vmatprep.subr.mxu0 0.0
    %930 = vmatpush1.xpose.msra.mxu0 0.0
    %931 = vmatprep.subr.mxu0 0.0
    %932 = vmatpush1.xpose.msra.mxu0 0.0
    %933 = vmatprep.subr.mxu0 0.0
    %934 = vmatpush1.xpose.msra.mxu0 0.0
    %935 = vmatprep.subr.mxu0 0.0
    %936 = vmatpush1.xpose.msra.mxu0 0.0
    %937 = vmatprep.subr.mxu0 0.0
    %938 = vmatpush1.xpose.msra.mxu0 0.0
    %939 = vmatprep.subr.mxu0 0.0
    %940 = vmatpush1.xpose.msra.mxu0 0.0
    %941 = vmatprep.subr.mxu0 0.0
    %942 = vmatpush1.xpose.msra.mxu0 0.0
    %943 = vmatprep.subr.mxu0 0.0
    %944 = vmatpush1.xpose.msra.mxu0 0.0
    %945 = vmatprep.subr.mxu0 0.0
    %946 = vmatpush1.xpose.msra.mxu0 0.0
    %947 = vmatprep.subr.mxu0 0.0
    %948 = vmatpush1.xpose.msra.mxu0 0.0
    %949 = vmatprep.subr.mxu0 0.0
    %950 = vmatpush1.xpose.msra.mxu0 0.0
    %951 = vmatprep.subr.mxu0 0.0
    %952 = vmatpush1.xpose.msra.mxu0 0.0
    %953 = vmatprep.mubr.f32.mxu0 0.0
    %954 = vmatmul.mubr.f32.gmra.mrb[0].mxu0 %v885
    %v955 = vpop.f32.mrb[0].mxu0
    %v956 = vadd.f32 0.0, %v955
    %v957 = vpop.f32.mrb[0].mxu0
    %958 = vdwg.mxu0
    %v959 = vmul.f32 %v956, 0.35355338
    %v960 = vlaneseq
    %v961 = vshrl.u32 %v960, 7
    %v962 = vsub.s32 1, %v961
    %v963 = vrot.slane %v102, %v962
    %v964 = vadd.f32 %v959, %v963
    %v965 = vsel %vm196, %v964, -inf
    %966 = vmax.xlane.f32.xlu0 %v965
    %v967 = vpop.xlane.xlu0 %966
    %v968 = vsub.f32 %v964, %v967
    %v969 = vmul.f32 %v968, 1.442695
    %v970 = vpow.pop %v969
    %v971 = vsel %vm196, %v970, 0.0
    %972 = vadd.xlane.f32.xlu0 %v971
    %v973 = vpop.xlane.xlu0 %972
    %v974 = vrcp.pop %v973
    %v975 = vmul.f32 %v970, %v974
    %976 = vrot.lane.b32.xlu0 %v190, 64
    %v977 = vpop.permute.xlu0 %976
    %v980 = vsel %vm196, %v975, 0
    %982 = vmatprep.subr.mxu0 0.0
    %983 = vmatpush1.msra.mxu0 %v977
    %984 = vmatprep.subr.mxu0 0.0
    %985 = vmatpush1.msra.mxu0 0.0
    %986 = vmatprep.subr.mxu0 0.0
    %987 = vmatpush1.msra.mxu0 0.0
    %988 = vmatprep.subr.mxu0 0.0
    %989 = vmatpush1.msra.mxu0 0.0
    %990 = vmatprep.subr.mxu0 0.0
    %991 = vmatpush1.msra.mxu0 0.0
    %992 = vmatprep.subr.mxu0 0.0
    %993 = vmatpush1.msra.mxu0 0.0
    %994 = vmatprep.subr.mxu0 0.0
    %995 = vmatpush1.msra.mxu0 0.0
    %996 = vmatprep.subr.mxu0 0.0
    %997 = vmatpush1.msra.mxu0 0.0
    %998 = vmatprep.subr.mxu0 0.0
    %999 = vmatpush1.msra.mxu0 0.0
    %1000 = vmatprep.subr.mxu0 0.0
    %1001 = vmatpush1.msra.mxu0 0.0
    %1002 = vmatprep.subr.mxu0 0.0
    %1003 = vmatpush1.msra.mxu0 0.0
    %1004 = vmatprep.subr.mxu0 0.0
    %1005 = vmatpush1.msra.mxu0 0.0
    %1006 = vmatprep.subr.mxu0 0.0
    %1007 = vmatpush1.msra.mxu0 0.0
    %1008 = vmatprep.subr.mxu0 0.0
    %1009 = vmatpush1.msra.mxu0 0.0
    %1010 = vmatprep.subr.mxu0 0.0
    %1011 = vmatpush1.msra.mxu0 0.0
    %1012 = vmatprep.subr.mxu0 0.0
    %1013 = vmatpush1.msra.mxu0 0.0
    %1014 = vmatprep.subr.mxu0 0.0
    %1015 = vmatpush1.msra.mxu0 0.0
    %1016 = vmatprep.subr.mxu0 0.0
    %1017 = vmatpush1.msra.mxu0 0.0
    %1018 = vmatprep.subr.mxu0 0.0
    %1019 = vmatpush1.msra.mxu0 0.0
    %1020 = vmatprep.subr.mxu0 0.0
    %1021 = vmatpush1.msra.mxu0 0.0
    %1022 = vmatprep.subr.mxu0 0.0
    %1023 = vmatpush1.msra.mxu0 0.0
    %1024 = vmatprep.subr.mxu0 0.0
    %1025 = vmatpush1.msra.mxu0 0.0
    %1026 = vmatprep.subr.mxu0 0.0
    %1027 = vmatpush1.msra.mxu0 0.0
    %1028 = vmatprep.subr.mxu0 0.0
    %1029 = vmatpush1.msra.mxu0 0.0
    %1030 = vmatprep.subr.mxu0 0.0
    %1031 = vmatpush1.msra.mxu0 0.0
    %1032 = vmatprep.subr.mxu0 0.0
    %1033 = vmatpush1.msra.mxu0 0.0
    %1034 = vmatprep.subr.mxu0 0.0
    %1035 = vmatpush1.msra.mxu0 0.0
    %1036 = vmatprep.subr.mxu0 0.0
    %1037 = vmatpush1.msra.mxu0 0.0
    %1038 = vmatprep.subr.mxu0 0.0
    %1039 = vmatpush1.msra.mxu0 0.0
    %1040 = vmatprep.subr.mxu0 0.0
    %1041 = vmatpush1.msra.mxu0 0.0
    %1042 = vmatprep.subr.mxu0 0.0
    %1043 = vmatpush1.msra.mxu0 0.0
    %1044 = vmatprep.subr.mxu0 0.0
    %1045 = vmatpush1.msra.mxu0 0.0
    %1046 = vmatprep.mubr.f32.mxu0 0.0
    %1047 = vmatmul.mubr.f32.gmra.mrb[0].mxu0 %v980
    %v1048 = vpop.f32.mrb[0].mxu0
    %v1049 = vadd.f32 0.0, %v1048
    %v1050 = vpop.f32.mrb[0].mxu0
    %1051 = vdwg.mxu0
    %1052 = vrot.lane.b32.xlu0 %v190, 120
    %v1053 = vpop.permute.xlu0 %1052
    %1054 = vrot.lane.b32.xlu0 %v190, 88
    %v1055 = vpop.permute.xlu0 %1054
    %v1056 = vsel %vm196, %v1053, 0
    %v1058 = vsel %vm196, %v1055, 0
    %1060 = vmatprep.subr.mxu0 0.0
    %1061 = vmatpush1.xpose.msra.mxu0 %v1058
    %1062 = vmatprep.subr.mxu0 0.0
    %1063 = vmatpush1.xpose.msra.mxu0 0.0
    %1064 = vmatprep.subr.mxu0 0.0
    %1065 = vmatpush1.xpose.msra.mxu0 0.0
    %1066 = vmatprep.subr.mxu0 0.0
    %1067 = vmatpush1.xpose.msra.mxu0 0.0
    %1068 = vmatprep.subr.mxu0 0.0
    %1069 = vmatpush1.xpose.msra.mxu0 0.0
    %1070 = vmatprep.subr.mxu0 0.0
    %1071 = vmatpush1.xpose.msra.mxu0 0.0
    %1072 = vmatprep.subr.mxu0 0.0
    %1073 = vmatpush1.xpose.msra.mxu0 0.0
    %1074 = vmatprep.subr.mxu0 0.0
    %1075 = vmatpush1.xpose.msra.mxu0 0.0
    %1076 = vmatprep.subr.mxu0 0.0
    %1077 = vmatpush1.xpose.msra.mxu0 0.0
    %1078 = vmatprep.subr.mxu0 0.0
    %1079 = vmatpush1.xpose.msra.mxu0 0.0
    %1080 = vmatprep.subr.mxu0 0.0
    %1081 = vmatpush1.xpose.msra.mxu0 0.0
    %1082 = vmatprep.subr.mxu0 0.0
    %1083 = vmatpush1.xpose.msra.mxu0 0.0
    %1084 = vmatprep.subr.mxu0 0.0
    %1085 = vmatpush1.xpose.msra.mxu0 0.0
    %1086 = vmatprep.subr.mxu0 0.0
    %1087 = vmatpush1.xpose.msra.mxu0 0.0
    %1088 = vmatprep.subr.mxu0 0.0
    %1089 = vmatpush1.xpose.msra.mxu0 0.0
    %1090 = vmatprep.subr.mxu0 0.0
    %1091 = vmatpush1.xpose.msra.mxu0 0.0
    %1092 = vmatprep.subr.mxu0 0.0
    %1093 = vmatpush1.xpose.msra.mxu0 0.0
    %1094 = vmatprep.subr.mxu0 0.0
    %1095 = vmatpush1.xpose.msra.mxu0 0.0
    %1096 = vmatprep.subr.mxu0 0.0
    %1097 = vmatpush1.xpose.msra.mxu0 0.0
    %1098 = vmatprep.subr.mxu0 0.0
    %1099 = vmatpush1.xpose.msra.mxu0 0.0
    %1100 = vmatprep.subr.mxu0 0.0
    %1101 = vmatpush1.xpose.msra.mxu0 0.0
    %1102 = vmatprep.subr.mxu0 0.0
    %1103 = vmatpush1.xpose.msra.mxu0 0.0
    %1104 = vmatprep.subr.mxu0 0.0
    %1105 = vmatpush1.xpose.msra.mxu0 0.0
    %1106 = vmatprep.subr.mxu0 0.0
    %1107 = vmatpush1.xpose.msra.mxu0 0.0
    %1108 = vmatprep.subr.mxu0 0.0
    %1109 = vmatpush1.xpose.msra.mxu0 0.0
    %1110 = vmatprep.subr.mxu0 0.0
    %1111 = vmatpush1.xpose.msra.mxu0 0.0
    %1112 = vmatprep.subr.mxu0 0.0
    %1113 = vmatpush1.xpose.msra.mxu0 0.0
    %1114 = vmatprep.subr.mxu0 0.0
    %1115 = vmatpush1.xpose.msra.mxu0 0.0
    %1116 = vmatprep.subr.mxu0 0.0
    %1117 = vmatpush1.xpose.msra.mxu0 0.0
    %1118 = vmatprep.subr.mxu0 0.0
    %1119 = vmatpush1.xpose.msra.mxu0 0.0
    %1120 = vmatprep.subr.mxu0 0.0
    %1121 = vmatpush1.xpose.msra.mxu0 0.0
    %1122 = vmatprep.subr.mxu0 0.0
    %1123 = vmatpush1.xpose.msra.mxu0 0.0
    %1124 = vmatprep.mubr.f32.mxu0 0.0
    %1125 = vmatmul.mubr.f32.gmra.mrb[0].mxu0 %v1056
    %v1126 = vpop.f32.mrb[0].mxu0
    %v1127 = vadd.f32 0.0, %v1126
    %v1128 = vpop.f32.mrb[0].mxu0
    %1129 = vdwg.mxu0
    %v1130 = vmul.f32 %v1127, 0.35355338
    %v1131 = vadd.f32 %v1130, %v963
    %v1132 = vsel %vm196, %v1131, -inf
    %1133 = vmax.xlane.f32.xlu0 %v1132
    %v1134 = vpop.xlane.xlu0 %1133
    %v1135 = vsub.f32 %v1131, %v1134
    %v1136 = vmul.f32 %v1135, 1.442695
    %v1137 = vpow.pop %v1136
    %v1138 = vsel %vm196, %v1137, 0.0
    %1139 = vadd.xlane.f32.xlu0 %v1138
    %v1140 = vpop.xlane.xlu0 %1139
    %v1141 = vrcp.pop %v1140
    %v1142 = vmul.f32 %v1137, %v1141
    %1143 = vrot.lane.b32.xlu0 %v190, 56
    %v1144 = vpop.permute.xlu0 %1143
    %v1147 = vsel %vm196, %v1142, 0
    %1149 = vmatprep.subr.mxu0 0.0
    %1150 = vmatpush1.msra.mxu0 %v1144
    %1151 = vmatprep.subr.mxu0 0.0
    %1152 = vmatpush1.msra.mxu0 0.0
    %1153 = vmatprep.subr.mxu0 0.0
    %1154 = vmatpush1.msra.mxu0 0.0
    %1155 = vmatprep.subr.mxu0 0.0
    %1156 = vmatpush1.msra.mxu0 0.0
    %1157 = vmatprep.subr.mxu0 0.0
    %1158 = vmatpush1.msra.mxu0 0.0
    %1159 = vmatprep.subr.mxu0 0.0
    %1160 = vmatpush1.msra.mxu0 0.0
    %1161 = vmatprep.subr.mxu0 0.0
    %1162 = vmatpush1.msra.mxu0 0.0
    %1163 = vmatprep.subr.mxu0 0.0
    %1164 = vmatpush1.msra.mxu0 0.0
    %1165 = vmatprep.subr.mxu0 0.0
    %1166 = vmatpush1.msra.mxu0 0.0
    %1167 = vmatprep.subr.mxu0 0.0
    %1168 = vmatpush1.msra.mxu0 0.0
    %1169 = vmatprep.subr.mxu0 0.0
    %1170 = vmatpush1.msra.mxu0 0.0
    %1171 = vmatprep.subr.mxu0 0.0
    %1172 = vmatpush1.msra.mxu0 0.0
    %1173 = vmatprep.subr.mxu0 0.0
    %1174 = vmatpush1.msra.mxu0 0.0
    %1175 = vmatprep.subr.mxu0 0.0
    %1176 = vmatpush1.msra.mxu0 0.0
    %1177 = vmatprep.subr.mxu0 0.0
    %1178 = vmatpush1.msra.mxu0 0.0
    %1179 = vmatprep.subr.mxu0 0.0
    %1180 = vmatpush1.msra.mxu0 0.0
    %1181 = vmatprep.subr.mxu0 0.0
    %1182 = vmatpush1.msra.mxu0 0.0
    %1183 = vmatprep.subr.mxu0 0.0
    %1184 = vmatpush1.msra.mxu0 0.0
    %1185 = vmatprep.subr.mxu0 0.0
    %1186 = vmatpush1.msra.mxu0 0.0
    %1187 = vmatprep.subr.mxu0 0.0
    %1188 = vmatpush1.msra.mxu0 0.0
    %1189 = vmatprep.subr.mxu0 0.0
    %1190 = vmatpush1.msra.mxu0 0.0
    %1191 = vmatprep.subr.mxu0 0.0
    %1192 = vmatpush1.msra.mxu0 0.0
    %1193 = vmatprep.subr.mxu0 0.0
    %1194 = vmatpush1.msra.mxu0 0.0
    %1195 = vmatprep.subr.mxu0 0.0
    %1196 = vmatpush1.msra.mxu0 0.0
    %1197 = vmatprep.subr.mxu0 0.0
    %1198 = vmatpush1.msra.mxu0 0.0
    %1199 = vmatprep.subr.mxu0 0.0
    %1200 = vmatpush1.msra.mxu0 0.0
    %1201 = vmatprep.subr.mxu0 0.0
    %1202 = vmatpush1.msra.mxu0 0.0
    %1203 = vmatprep.subr.mxu0 0.0
    %1204 = vmatpush1.msra.mxu0 0.0
    %1205 = vmatprep.subr.mxu0 0.0
    %1206 = vmatpush1.msra.mxu0 0.0
    %1207 = vmatprep.subr.mxu0 0.0
    %1208 = vmatpush1.msra.mxu0 0.0
    %1209 = vmatprep.subr.mxu0 0.0
    %1210 = vmatpush1.msra.mxu0 0.0
    %1211 = vmatprep.subr.mxu0 0.0
    %1212 = vmatpush1.msra.mxu0 0.0
    %1213 = vmatprep.mubr.f32.mxu0 0.0
    %1214 = vmatmul.mubr.f32.gmra.mrb[0].mxu0 %v1147
    %v1215 = vpop.f32.mrb[0].mxu0
    %v1216 = vadd.f32 0.0, %v1215
    %v1217 = vpop.f32.mrb[0].mxu0
    %1218 = vdwg.mxu0
    %1219 = vrot.lane.b32.xlu0 %v190, 112
    %v1220 = vpop.permute.xlu0 %1219
    %1221 = vrot.lane.b32.xlu0 %v190, 80
    %v1222 = vpop.permute.xlu0 %1221
    %v1223 = vsel %vm196, %v1220, 0
    %v1225 = vsel %vm196, %v1222, 0
    %1227 = vmatprep.subr.mxu0 0.0
    %1228 = vmatpush1.xpose.msra.mxu0 %v1225
    %1229 = vmatprep.subr.mxu0 0.0
    %1230 = vmatpush1.xpose.msra.mxu0 0.0
    %1231 = vmatprep.subr.mxu0 0.0
    %1232 = vmatpush1.xpose.msra.mxu0 0.0
    %1233 = vmatprep.subr.mxu0 0.0
    %1234 = vmatpush1.xpose.msra.mxu0 0.0
    %1235 = vmatprep.subr.mxu0 0.0
    %1236 = vmatpush1.xpose.msra.mxu0 0.0
    %1237 = vmatprep.subr.mxu0 0.0
    %1238 = vmatpush1.xpose.msra.mxu0 0.0
    %1239 = vmatprep.subr.mxu0 0.0
    %1240 = vmatpush1.xpose.msra.mxu0 0.0
    %1241 = vmatprep.subr.mxu0 0.0
    %1242 = vmatpush1.xpose.msra.mxu0 0.0
    %1243 = vmatprep.subr.mxu0 0.0
    %1244 = vmatpush1.xpose.msra.mxu0 0.0
    %1245 = vmatprep.subr.mxu0 0.0
    %1246 = vmatpush1.xpose.msra.mxu0 0.0
    %1247 = vmatprep.subr.mxu0 0.0
    %1248 = vmatpush1.xpose.msra.mxu0 0.0
    %1249 = vmatprep.subr.mxu0 0.0
    %1250 = vmatpush1.xpose.msra.mxu0 0.0
    %1251 = vmatprep.subr.mxu0 0.0
    %1252 = vmatpush1.xpose.msra.mxu0 0.0
    %1253 = vmatprep.subr.mxu0 0.0
    %1254 = vmatpush1.xpose.msra.mxu0 0.0
    %1255 = vmatprep.subr.mxu0 0.0
    %1256 = vmatpush1.xpose.msra.mxu0 0.0
    %1257 = vmatprep.subr.mxu0 0.0
    %1258 = vmatpush1.xpose.msra.mxu0 0.0
    %1259 = vmatprep.subr.mxu0 0.0
    %1260 = vmatpush1.xpose.msra.mxu0 0.0
    %1261 = vmatprep.subr.mxu0 0.0
    %1262 = vmatpush1.xpose.msra.mxu0 0.0
    %1263 = vmatprep.subr.mxu0 0.0
    %1264 = vmatpush1.xpose.msra.mxu0 0.0
    %1265 = vmatprep.subr.mxu0 0.0
    %1266 = vmatpush1.xpose.msra.mxu0 0.0
    %1267 = vmatprep.subr.mxu0 0.0
    %1268 = vmatpush1.xpose.msra.mxu0 0.0
    %1269 = vmatprep.subr.mxu0 0.0
    %1270 = vmatpush1.xpose.msra.mxu0 0.0
    %1271 = vmatprep.subr.mxu0 0.0
    %1272 = vmatpush1.xpose.msra.mxu0 0.0
    %1273 = vmatprep.subr.mxu0 0.0
    %1274 = vmatpush1.xpose.msra.mxu0 0.0
    %1275 = vmatprep.subr.mxu0 0.0
    %1276 = vmatpush1.xpose.msra.mxu0 0.0
    %1277 = vmatprep.subr.mxu0 0.0
    %1278 = vmatpush1.xpose.msra.mxu0 0.0
    %1279 = vmatprep.subr.mxu0 0.0
    %1280 = vmatpush1.xpose.msra.mxu0 0.0
    %1281 = vmatprep.subr.mxu0 0.0
    %1282 = vmatpush1.xpose.msra.mxu0 0.0
    %1283 = vmatprep.subr.mxu0 0.0
    %1284 = vmatpush1.xpose.msra.mxu0 0.0
    %1285 = vmatprep.subr.mxu0 0.0
    %1286 = vmatpush1.xpose.msra.mxu0 0.0
    %1287 = vmatprep.subr.mxu0 0.0
    %1288 = vmatpush1.xpose.msra.mxu0 0.0
    %1289 = vmatprep.subr.mxu0 0.0
    %1290 = vmatpush1.xpose.msra.mxu0 0.0
    %1291 = vmatprep.mubr.f32.mxu0 0.0
    %1292 = vmatmul.mubr.f32.gmra.mrb[0].mxu0 %v1223
    %v1293 = vpop.f32.mrb[0].mxu0
    %v1294 = vadd.f32 0.0, %v1293
    %v1295 = vpop.f32.mrb[0].mxu0
    %1296 = vdwg.mxu0
    %v1297 = vmul.f32 %v1294, 0.35355338
    %v1298 = vadd.f32 %v1297, %v963
    %v1299 = vsel %vm196, %v1298, -inf
    %1300 = vmax.xlane.f32.xlu0 %v1299
    %v1301 = vpop.xlane.xlu0 %1300
    %v1302 = vsub.f32 %v1298, %v1301
    %v1303 = vmul.f32 %v1302, 1.442695
    %v1304 = vpow.pop %v1303
    %v1305 = vsel %vm196, %v1304, 0.0
    %1306 = vadd.xlane.f32.xlu0 %v1305
    %v1307 = vpop.xlane.xlu0 %1306
    %v1308 = vrcp.pop %v1307
    %v1309 = vmul.f32 %v1304, %v1308
    %1310 = vrot.lane.b32.xlu0 %v190, 48
    %v1311 = vpop.permute.xlu0 %1310
    %v1314 = vsel %vm196, %v1309, 0
    %1316 = vmatprep.subr.mxu0 0.0
    %1317 = vmatpush1.msra.mxu0 %v1311
    %1318 = vmatprep.subr.mxu0 0.0
    %1319 = vmatpush1.msra.mxu0 0.0
    %1320 = vmatprep.subr.mxu0 0.0
    %1321 = vmatpush1.msra.mxu0 0.0
    %1322 = vmatprep.subr.mxu0 0.0
    %1323 = vmatpush1.msra.mxu0 0.0
    %1324 = vmatprep.subr.mxu0 0.0
    %1325 = vmatpush1.msra.mxu0 0.0
    %1326 = vmatprep.subr.mxu0 0.0
    %1327 = vmatpush1.msra.mxu0 0.0
    %1328 = vmatprep.subr.mxu0 0.0
    %1329 = vmatpush1.msra.mxu0 0.0
    %1330 = vmatprep.subr.mxu0 0.0
    %1331 = vmatpush1.msra.mxu0 0.0
    %1332 = vmatprep.subr.mxu0 0.0
    %1333 = vmatpush1.msra.mxu0 0.0
    %1334 = vmatprep.subr.mxu0 0.0
    %1335 = vmatpush1.msra.mxu0 0.0
    %1336 = vmatprep.subr.mxu0 0.0
    %1337 = vmatpush1.msra.mxu0 0.0
    %1338 = vmatprep.subr.mxu0 0.0
    %1339 = vmatpush1.msra.mxu0 0.0
    %1340 = vmatprep.subr.mxu0 0.0
    %1341 = vmatpush1.msra.mxu0 0.0
    %1342 = vmatprep.subr.mxu0 0.0
    %1343 = vmatpush1.msra.mxu0 0.0
    %1344 = vmatprep.subr.mxu0 0.0
    %1345 = vmatpush1.msra.mxu0 0.0
    %1346 = vmatprep.subr.mxu0 0.0
    %1347 = vmatpush1.msra.mxu0 0.0
    %1348 = vmatprep.subr.mxu0 0.0
    %1349 = vmatpush1.msra.mxu0 0.0
    %1350 = vmatprep.subr.mxu0 0.0
    %1351 = vmatpush1.msra.mxu0 0.0
    %1352 = vmatprep.subr.mxu0 0.0
    %1353 = vmatpush1.msra.mxu0 0.0
    %1354 = vmatprep.subr.mxu0 0.0
    %1355 = vmatpush1.msra.mxu0 0.0
    %1356 = vmatprep.subr.mxu0 0.0
    %1357 = vmatpush1.msra.mxu0 0.0
    %1358 = vmatprep.subr.mxu0 0.0
    %1359 = vmatpush1.msra.mxu0 0.0
    %1360 = vmatprep.subr.mxu0 0.0
    %1361 = vmatpush1.msra.mxu0 0.0
    %1362 = vmatprep.subr.mxu0 0.0
    %1363 = vmatpush1.msra.mxu0 0.0
    %1364 = vmatprep.subr.mxu0 0.0
    %1365 = vmatpush1.msra.mxu0 0.0
    %1366 = vmatprep.subr.mxu0 0.0
    %1367 = vmatpush1.msra.mxu0 0.0
    %1368 = vmatprep.subr.mxu0 0.0
    %1369 = vmatpush1.msra.mxu0 0.0
    %1370 = vmatprep.subr.mxu0 0.0
    %1371 = vmatpush1.msra.mxu0 0.0
    %1372 = vmatprep.subr.mxu0 0.0
    %1373 = vmatpush1.msra.mxu0 0.0
    %1374 = vmatprep.subr.mxu0 0.0
    %1375 = vmatpush1.msra.mxu0 0.0
    %1376 = vmatprep.subr.mxu0 0.0
    %1377 = vmatpush1.msra.mxu0 0.0
    %1378 = vmatprep.subr.mxu0 0.0
    %1379 = vmatpush1.msra.mxu0 0.0
    %1380 = vmatprep.mubr.f32.mxu0 0.0
    %1381 = vmatmul.mubr.f32.gmra.mrb[0].mxu0 %v1314
    %v1382 = vpop.f32.mrb[0].mxu0
    %v1383 = vadd.f32 0.0, %v1382
    %v1384 = vpop.f32.mrb[0].mxu0
    %1385 = vdwg.mxu0
    %1386 = vrot.lane.b32.xlu0 %v190, 104
    %v1387 = vpop.permute.xlu0 %1386
    %1388 = vrot.lane.b32.xlu0 %v190, 72
    %v1389 = vpop.permute.xlu0 %1388
    %v1390 = vsel %vm196, %v1387, 0
    %v1392 = vsel %vm196, %v1389, 0
    %1394 = vmatprep.subr.mxu0 0.0
    %1395 = vmatpush1.xpose.msra.mxu0 %v1392
    %1396 = vmatprep.subr.mxu0 0.0
    %1397 = vmatpush1.xpose.msra.mxu0 0.0
    %1398 = vmatprep.subr.mxu0 0.0
    %1399 = vmatpush1.xpose.msra.mxu0 0.0
    %1400 = vmatprep.subr.mxu0 0.0
    %1401 = vmatpush1.xpose.msra.mxu0 0.0
    %1402 = vmatprep.subr.mxu0 0.0
    %1403 = vmatpush1.xpose.msra.mxu0 0.0
    %1404 = vmatprep.subr.mxu0 0.0
    %1405 = vmatpush1.xpose.msra.mxu0 0.0
    %1406 = vmatprep.subr.mxu0 0.0
    %1407 = vmatpush1.xpose.msra.mxu0 0.0
    %1408 = vmatprep.subr.mxu0 0.0
    %1409 = vmatpush1.xpose.msra.mxu0 0.0
    %1410 = vmatprep.subr.mxu0 0.0
    %1411 = vmatpush1.xpose.msra.mxu0 0.0
    %1412 = vmatprep.subr.mxu0 0.0
    %1413 = vmatpush1.xpose.msra.mxu0 0.0
    %1414 = vmatprep.subr.mxu0 0.0
    %1415 = vmatpush1.xpose.msra.mxu0 0.0
    %1416 = vmatprep.subr.mxu0 0.0
    %1417 = vmatpush1.xpose.msra.mxu0 0.0
    %1418 = vmatprep.subr.mxu0 0.0
    %1419 = vmatpush1.xpose.msra.mxu0 0.0
    %1420 = vmatprep.subr.mxu0 0.0
    %1421 = vmatpush1.xpose.msra.mxu0 0.0
    %1422 = vmatprep.subr.mxu0 0.0
    %1423 = vmatpush1.xpose.msra.mxu0 0.0
    %1424 = vmatprep.subr.mxu0 0.0
    %1425 = vmatpush1.xpose.msra.mxu0 0.0
    %1426 = vmatprep.subr.mxu0 0.0
    %1427 = vmatpush1.xpose.msra.mxu0 0.0
    %1428 = vmatprep.subr.mxu0 0.0
    %1429 = vmatpush1.xpose.msra.mxu0 0.0
    %1430 = vmatprep.subr.mxu0 0.0
    %1431 = vmatpush1.xpose.msra.mxu0 0.0
    %1432 = vmatprep.subr.mxu0 0.0
    %1433 = vmatpush1.xpose.msra.mxu0 0.0
    %1434 = vmatprep.subr.mxu0 0.0
    %1435 = vmatpush1.xpose.msra.mxu0 0.0
    %1436 = vmatprep.subr.mxu0 0.0
    %1437 = vmatpush1.xpose.msra.mxu0 0.0
    %1438 = vmatprep.subr.mxu0 0.0
    %1439 = vmatpush1.xpose.msra.mxu0 0.0
    %1440 = vmatprep.subr.mxu0 0.0
    %1441 = vmatpush1.xpose.msra.mxu0 0.0
    %1442 = vmatprep.subr.mxu0 0.0
    %1443 = vmatpush1.xpose.msra.mxu0 0.0
    %1444 = vmatprep.subr.mxu0 0.0
    %1445 = vmatpush1.xpose.msra.mxu0 0.0
    %1446 = vmatprep.subr.mxu0 0.0
    %1447 = vmatpush1.xpose.msra.mxu0 0.0
    %1448 = vmatprep.subr.mxu0 0.0
    %1449 = vmatpush1.xpose.msra.mxu0 0.0
    %1450 = vmatprep.subr.mxu0 0.0
    %1451 = vmatpush1.xpose.msra.mxu0 0.0
    %1452 = vmatprep.subr.mxu0 0.0
    %1453 = vmatpush1.xpose.msra.mxu0 0.0
    %1454 = vmatprep.subr.mxu0 0.0
    %1455 = vmatpush1.xpose.msra.mxu0 0.0
    %1456 = vmatprep.subr.mxu0 0.0
    %1457 = vmatpush1.xpose.msra.mxu0 0.0
    %1458 = vmatprep.mubr.f32.mxu0 0.0
    %1459 = vmatmul.mubr.f32.gmra.mrb[0].mxu0 %v1390
    %v1460 = vpop.f32.mrb[0].mxu0
    %v1461 = vadd.f32 0.0, %v1460
    %v1462 = vpop.f32.mrb[0].mxu0
    %1463 = vdwg.mxu0
    %v1464 = vmul.f32 %v1461, 0.35355338
    %v1465 = vadd.f32 %v1464, %v963
    %v1466 = vsel %vm196, %v1465, -inf
    %1467 = vmax.xlane.f32.xlu0 %v1466
    %v1468 = vpop.xlane.xlu0 %1467
    %v1469 = vsub.f32 %v1465, %v1468
    %v1470 = vmul.f32 %v1469, 1.442695
    %v1471 = vpow.pop %v1470
    %v1472 = vsel %vm196, %v1471, 0.0
    %1473 = vadd.xlane.f32.xlu0 %v1472
    %v1474 = vpop.xlane.xlu0 %1473
    %v1475 = vrcp.pop %v1474
    %v1476 = vmul.f32 %v1471, %v1475
    %1477 = vrot.lane.b32.xlu0 %v190, 40
    %v1478 = vpop.permute.xlu0 %1477
    %v1481 = vsel %vm196, %v1476, 0
    %1483 = vmatprep.subr.mxu0 0.0
    %1484 = vmatpush1.msra.mxu0 %v1478
    %1485 = vmatprep.subr.mxu0 0.0
    %1486 = vmatpush1.msra.mxu0 0.0
    %1487 = vmatprep.subr.mxu0 0.0
    %1488 = vmatpush1.msra.mxu0 0.0
    %1489 = vmatprep.subr.mxu0 0.0
    %1490 = vmatpush1.msra.mxu0 0.0
    %1491 = vmatprep.subr.mxu0 0.0
    %1492 = vmatpush1.msra.mxu0 0.0
    %1493 = vmatprep.subr.mxu0 0.0
    %1494 = vmatpush1.msra.mxu0 0.0
    %1495 = vmatprep.subr.mxu0 0.0
    %1496 = vmatpush1.msra.mxu0 0.0
    %1497 = vmatprep.subr.mxu0 0.0
    %1498 = vmatpush1.msra.mxu0 0.0
    %1499 = vmatprep.subr.mxu0 0.0
    %1500 = vmatpush1.msra.mxu0 0.0
    %1501 = vmatprep.subr.mxu0 0.0
    %1502 = vmatpush1.msra.mxu0 0.0
    %1503 = vmatprep.subr.mxu0 0.0
    %1504 = vmatpush1.msra.mxu0 0.0
    %1505 = vmatprep.subr.mxu0 0.0
    %1506 = vmatpush1.msra.mxu0 0.0
    %1507 = vmatprep.subr.mxu0 0.0
    %1508 = vmatpush1.msra.mxu0 0.0
    %1509 = vmatprep.subr.mxu0 0.0
    %1510 = vmatpush1.msra.mxu0 0.0
    %1511 = vmatprep.subr.mxu0 0.0
    %1512 = vmatpush1.msra.mxu0 0.0
    %1513 = vmatprep.subr.mxu0 0.0
    %1514 = vmatpush1.msra.mxu0 0.0
    %1515 = vmatprep.subr.mxu0 0.0
    %1516 = vmatpush1.msra.mxu0 0.0
    %1517 = vmatprep.subr.mxu0 0.0
    %1518 = vmatpush1.msra.mxu0 0.0
    %1519 = vmatprep.subr.mxu0 0.0
    %1520 = vmatpush1.msra.mxu0 0.0
    %1521 = vmatprep.subr.mxu0 0.0
    %1522 = vmatpush1.msra.mxu0 0.0
    %1523 = vmatprep.subr.mxu0 0.0
    %1524 = vmatpush1.msra.mxu0 0.0
    %1525 = vmatprep.subr.mxu0 0.0
    %1526 = vmatpush1.msra.mxu0 0.0
    %1527 = vmatprep.subr.mxu0 0.0
    %1528 = vmatpush1.msra.mxu0 0.0
    %1529 = vmatprep.subr.mxu0 0.0
    %1530 = vmatpush1.msra.mxu0 0.0
    %1531 = vmatprep.subr.mxu0 0.0
    %1532 = vmatpush1.msra.mxu0 0.0
    %1533 = vmatprep.subr.mxu0 0.0
    %1534 = vmatpush1.msra.mxu0 0.0
    %1535 = vmatprep.subr.mxu0 0.0
    %1536 = vmatpush1.msra.mxu0 0.0
    %1537 = vmatprep.subr.mxu0 0.0
    %1538 = vmatpush1.msra.mxu0 0.0
    %1539 = vmatprep.subr.mxu0 0.0
    %1540 = vmatpush1.msra.mxu0 0.0
    %1541 = vmatprep.subr.mxu0 0.0
    %1542 = vmatpush1.msra.mxu0 0.0
    %1543 = vmatprep.subr.mxu0 0.0
    %1544 = vmatpush1.msra.mxu0 0.0
    %1545 = vmatprep.subr.mxu0 0.0
    %1546 = vmatpush1.msra.mxu0 0.0
    %1547 = vmatprep.mubr.f32.mxu0 0.0
    %1548 = vmatmul.mubr.f32.gmra.mrb[0].mxu0 %v1481
    %v1549 = vpop.f32.mrb[0].mxu0
    %v1550 = vadd.f32 0.0, %v1549
    %v1551 = vpop.f32.mrb[0].mxu0
    %1552 = vdwg.mxu0
    %1554 = vrot.lane.b32.xlu0 %v1216, 8
    %v1555 = vpop.permute.xlu0 %1554
    %1558 = vrot.lane.b32.xlu0 %v1383, 16
    %v1559 = vpop.permute.xlu0 %1558
    %1562 = vrot.lane.b32.xlu0 %v1550, 24
    %v1563 = vpop.permute.xlu0 %1562
    %v1565 = vsel %vm196, %v1049, %v1555
    %v1566 = vsel %vm878, %v1565, %v1559
    %v1567 = vsel %vm880, %v1566, %v1563
    %v1568 = vld [vmem:[%s3] sm:$0xff]
    %v1569 = vld [vmem:[%s3 + $0x8] sm:$0xff]
    %v1570 = vld [vmem:[%s3 + $0x10] sm:$0xff]
    %v1571 = vld [vmem:[%s3 + $0x18] sm:$0xff]
    %v1572 = vld [vmem:[#allocation5 + $0x1] sm:$0x1]
    %v1573 = vlaneseq
    %v1574 = vshrl.u32 %v1573, 7
    %v1575 = vsub.s32 0, %v1574
    %v1576 = vrot.slane %v1572, %v1575
    %v1578 = vsel %vm62, %v881, 0
    %v1581 = vsel %vm62, %v1567, 0
    %1583 = vmatprep.subr.mxu0 0.0
    %1584 = vmatpush1.msra.mxu0 %v1568
    %1585 = vmatprep.subr.mxu0 0.0
    %1586 = vmatpush1.msra.mxu0 %v1569
    %1587 = vmatprep.subr.mxu0 0.0
    %1588 = vmatpush1.msra.mxu0 %v1570
    %1589 = vmatprep.subr.mxu0 0.0
    %1590 = vmatpush1.msra.mxu0 %v1571
    %1591 = vmatprep.subr.mxu0 0.0
    %1592 = vmatpush1.msra.mxu0 0.0
    %1593 = vmatprep.subr.mxu0 0.0
    %1594 = vmatpush1.msra.mxu0 0.0
    %1595 = vmatprep.subr.mxu0 0.0
    %1596 = vmatpush1.msra.mxu0 0.0
    %1597 = vmatprep.subr.mxu0 0.0
    %1598 = vmatpush1.msra.mxu0 0.0
    %1599 = vmatprep.subr.mxu0 0.0
    %1600 = vmatpush1.msra.mxu0 0.0
    %1601 = vmatprep.subr.mxu0 0.0
    %1602 = vmatpush1.msra.mxu0 0.0
    %1603 = vmatprep.subr.mxu0 0.0
    %1604 = vmatpush1.msra.mxu0 0.0
    %1605 = vmatprep.subr.mxu0 0.0
    %1606 = vmatpush1.msra.mxu0 0.0
    %1607 = vmatprep.subr.mxu0 0.0
    %1608 = vmatpush1.msra.mxu0 0.0
    %1609 = vmatprep.subr.mxu0 0.0
    %1610 = vmatpush1.msra.mxu0 0.0
    %1611 = vmatprep.subr.mxu0 0.0
    %1612 = vmatpush1.msra.mxu0 0.0
    %1613 = vmatprep.subr.mxu0 0.0
    %1614 = vmatpush1.msra.mxu0 0.0
    %1615 = vmatprep.subr.mxu0 0.0
    %1616 = vmatpush1.msra.mxu0 0.0
    %1617 = vmatprep.subr.mxu0 0.0
    %1618 = vmatpush1.msra.mxu0 0.0
    %1619 = vmatprep.subr.mxu0 0.0
    %1620 = vmatpush1.msra.mxu0 0.0
    %1621 = vmatprep.subr.mxu0 0.0
    %1622 = vmatpush1.msra.mxu0 0.0
    %1623 = vmatprep.subr.mxu0 0.0
    %1624 = vmatpush1.msra.mxu0 0.0
    %1625 = vmatprep.subr.mxu0 0.0
    %1626 = vmatpush1.msra.mxu0 0.0
    %1627 = vmatprep.subr.mxu0 0.0
    %1628 = vmatpush1.msra.mxu0 0.0
    %1629 = vmatprep.subr.mxu0 0.0
    %1630 = vmatpush1.msra.mxu0 0.0
    %1631 = vmatprep.subr.mxu0 0.0
    %1632 = vmatpush1.msra.mxu0 0.0
    %1633 = vmatprep.subr.mxu0 0.0
    %1634 = vmatpush1.msra.mxu0 0.0
    %1635 = vmatprep.subr.mxu0 0.0
    %1636 = vmatpush1.msra.mxu0 0.0
    %1637 = vmatprep.subr.mxu0 0.0
    %1638 = vmatpush1.msra.mxu0 0.0
    %1639 = vmatprep.subr.mxu0 0.0
    %1640 = vmatpush1.msra.mxu0 0.0
    %1641 = vmatprep.subr.mxu0 0.0
    %1642 = vmatpush1.msra.mxu0 0.0
    %1643 = vmatprep.subr.mxu0 0.0
    %1644 = vmatpush1.msra.mxu0 0.0
    %1645 = vmatprep.subr.mxu0 0.0
    %1646 = vmatpush1.msra.mxu0 0.0
    %1647 = vmatprep.mubr.f32.mxu0 0.0
    %1648 = vmatmul.mubr.f32.gmra.mrb[0].mxu0 %v1578
    %v1649 = vpop.f32.mrb[0].mxu0
    %v1650 = vadd.f32 %v1576, %v1649
    %v1651 = vpop.f32.mrb[0].mxu0
    %1652 = vmatprep.mubr.f32.mxu0 0.0
    %1653 = vmatmul.mubr.f32.gmra.mrb[0].mxu0 %v1581
    %v1654 = vpop.f32.mrb[0].mxu0
    %v1655 = vadd.f32 %v1576, %v1654
    %v1656 = vpop.f32.mrb[0].mxu0
    %1657 = vdwg.mxu0
    %v1658 = vadd.f32 %v1650, %v100
    %v1659 = vadd.f32 %v1655, %v101
    %v1660 = vld [vmem:[#allocation5 + $0x2] sm:$0x1]
    %v1661 = vld [vmem:[#allocation5 + $0x3] sm:$0x1]
    %v1662 = vsel %vm62, %v1658, 0.0
    %1663 = vadd.xlane.f32.xlu0 %v1662
    %v1664 = vpop.xlane.xlu0 %1663
    %v1665 = vsel %vm62, %v1659, 0.0
    %1666 = vadd.xlane.f32.xlu0 %v1665
    %v1667 = vpop.xlane.xlu0 %1666
    %v1668 = vmul.f32 %v1664, %v69
    %v1669 = vmul.f32 %v1667, %v69
    %v1670 = vsub.f32 %v1658, %v1668
    %v1671 = vsub.f32 %v1659, %v1669
    %v1672 = vmul.f32 %v1670, %v1670
    %v1673 = vmul.f32 %v1671, %v1671
    %v1674 = vsel %vm62, %v1672, 0.0
    %1675 = vadd.xlane.f32.xlu0 %v1674
    %v1676 = vpop.xlane.xlu0 %1675
    %v1677 = vsel %vm62, %v1673, 0.0
    %1678 = vadd.xlane.f32.xlu0 %v1677
    %v1679 = vpop.xlane.xlu0 %1678
    %v1680 = vmul.f32 %v1676, %v69
    %v1681 = vmul.f32 %v1679, %v69
    %v1682 = vadd.f32 %v1680, 1e-12
    %v1683 = vadd.f32 %v1681, 1e-12
    %v1684 = vrsqrt.pop %v1682
    %v1685 = vrsqrt.pop %v1683
    %v1686 = vmul.f32 %v1670, %v1684
    %v1687 = vmul.f32 %v1671, %v1685
    %v1688 = vlaneseq
    %v1689 = vshrl.u32 %v1688, 7
    %v1690 = vsub.s32 0, %v1689
    %v1691 = vrot.slane %v1660, %v1690
    %v1692 = vmul.f32 %v1686, %v1691
    %v1693 = vmul.f32 %v1687, %v1691
    %v1694 = vlaneseq
    %v1695 = vshrl.u32 %v1694, 7
    %v1696 = vsub.s32 0, %v1695
    %v1697 = vrot.slane %v1661, %v1696
    %v1698 = vadd.f32 %v1692, %v1697
    %v1699 = vadd.f32 %v1693, %v1697
    %v1700 = vld [vmem:[%s4] sm:$0xff]
    %v1701 = vld [vmem:[%s4 + $0x8] sm:$0xff]
    %v1702 = vld [vmem:[%s4 + $0x10] sm:$0xff]
    %v1703 = vld [vmem:[%s4 + $0x18] sm:$0xff]
    %v1704 = vld [vmem:[#allocation5 + $0x4] sm:$0x1]
    %v1705 = vlaneseq
    %v1706 = vshrl.u32 %v1705, 7
    %v1707 = vsub.s32 0, %v1706
    %v1708 = vrot.slane %v1704, %v1707
    %v1710 = vsel %vm62, %v1698, 0
    %v1713 = vsel %vm62, %v1699, 0
    %1715 = vmatprep.subr.mxu0 0.0
    %1716 = vmatpush1.msra.mxu0 %v1700
    %1717 = vmatprep.subr.mxu0 0.0
    %1718 = vmatpush1.msra.mxu0 %v1701
    %1719 = vmatprep.subr.mxu0 0.0
    %1720 = vmatpush1.msra.mxu0 %v1702
    %1721 = vmatprep.subr.mxu0 0.0
    %1722 = vmatpush1.msra.mxu0 %v1703
    %1723 = vmatprep.subr.mxu0 0.0
    %1724 = vmatpush1.msra.mxu0 0.0
    %1725 = vmatprep.subr.mxu0 0.0
    %1726 = vmatpush1.msra.mxu0 0.0
    %1727 = vmatprep.subr.mxu0 0.0
    %1728 = vmatpush1.msra.mxu0 0.0
    %1729 = vmatprep.subr.mxu0 0.0
    %1730 = vmatpush1.msra.mxu0 0.0
    %1731 = vmatprep.subr.mxu0 0.0
    %1732 = vmatpush1.msra.mxu0 0.0
    %1733 = vmatprep.subr.mxu0 0.0
    %1734 = vmatpush1.msra.mxu0 0.0
    %1735 = vmatprep.subr.mxu0 0.0
    %1736 = vmatpush1.msra.mxu0 0.0
    %1737 = vmatprep.subr.mxu0 0.0
    %1738 = vmatpush1.msra.mxu0 0.0
    %1739 = vmatprep.subr.mxu0 0.0
    %1740 = vmatpush1.msra.mxu0 0.0
    %1741 = vmatprep.subr.mxu0 0.0
    %1742 = vmatpush1.msra.mxu0 0.0
    %1743 = vmatprep.subr.mxu0 0.0
    %1744 = vmatpush1.msra.mxu0 0.0
    %1745 = vmatprep.subr.mxu0 0.0
    %1746 = vmatpush1.msra.mxu0 0.0
    %1747 = vmatprep.subr.mxu0 0.0
    %1748 = vmatpush1.msra.mxu0 0.0
    %1749 = vmatprep.subr.mxu0 0.0
    %1750 = vmatpush1.msra.mxu0 0.0
    %1751 = vmatprep.subr.mxu0 0.0
    %1752 = vmatpush1.msra.mxu0 0.0
    %1753 = vmatprep.subr.mxu0 0.0
    %1754 = vmatpush1.msra.mxu0 0.0
    %1755 = vmatprep.subr.mxu0 0.0
    %1756 = vmatpush1.msra.mxu0 0.0
    %1757 = vmatprep.subr.mxu0 0.0
    %1758 = vmatpush1.msra.mxu0 0.0
    %1759 = vmatprep.subr.mxu0 0.0
    %1760 = vmatpush1.msra.mxu0 0.0
    %1761 = vmatprep.subr.mxu0 0.0
    %1762 = vmatpush1.msra.mxu0 0.0
    %1763 = vmatprep.subr.mxu0 0.0
    %1764 = vmatpush1.msra.mxu0 0.0
    %1765 = vmatprep.subr.mxu0 0.0
    %1766 = vmatpush1.msra.mxu0 0.0
    %1767 = vmatprep.subr.mxu0 0.0
    %1768 = vmatpush1.msra.mxu0 0.0
    %1769 = vmatprep.subr.mxu0 0.0
    %1770 = vmatpush1.msra.mxu0 0.0
    %1771 = vmatprep.subr.mxu0 0.0
    %1772 = vmatpush1.msra.mxu0 0.0
    %1773 = vmatprep.subr.mxu0 0.0
    %1774 = vmatpush1.msra.mxu0 0.0
    %1775 = vmatprep.subr.mxu0 0.0
    %1776 = vmatpush1.msra.mxu0 0.0
    %1777 = vmatprep.subr.mxu0 0.0
    %1778 = vmatpush1.msra.mxu0 0.0
    %1779 = vmatprep.mubr.f32.mxu0 0.0
    %1780 = vmatmul.mubr.f32.gmra.mrb[0].mxu0 %v1710
    %v1781 = vpop.f32.mrb[0].mxu0
    %v1782 = vadd.f32 %v1708, %v1781
    %v1783 = vpop.f32.mrb[0].mxu0
    %1784 = vmatprep.mubr.f32.mxu0 0.0
    %1785 = vmatmul.mubr.f32.gmra.mrb[0].mxu0 %v1713
    %v1786 = vpop.f32.mrb[0].mxu0
    %v1787 = vadd.f32 %v1708, %v1786
    %v1788 = vpop.f32.mrb[0].mxu0
    %1789 = vdwg.mxu0
    %v1790 = vmul.f32 %v1782, 0.5
    %v1791 = vmul.f32 %v1787, 0.5
    %v1792 = vmul.f32 %v1782, 0.044715
    %v1793 = vmul.f32 %v1787, 0.044715
    %v1794 = vmul.f32 %v1792, %v1782
    %v1795 = vmul.f32 %v1793, %v1787
    %v1796 = vmul.f32 %v1794, %v1782
    %v1797 = vmul.f32 %v1795, %v1787
    %v1798 = vadd.f32 %v1782, %v1796
    %v1799 = vadd.f32 %v1787, %v1797
    %v1800 = vmul.f32 %v1798, 0.7978846
    %v1801 = vmul.f32 %v1799, 0.7978846
    %v1802 = vtanh.pop %v1800
    %v1803 = vtanh.pop %v1801
    %v1804 = vadd.f32 %v1802, 1.0
    %v1805 = vadd.f32 %v1803, 1.0
    %v1806 = vmul.f32 %v1790, %v1804
    %v1807 = vmul.f32 %v1791, %v1805
    %v1808 = vld [vmem:[%s5] sm:$0xff]
    %v1809 = vld [vmem:[%s5 + $0x8] sm:$0xff]
    %v1810 = vld [vmem:[%s5 + $0x10] sm:$0xff]
    %v1811 = vld [vmem:[%s5 + $0x18] sm:$0xff]
    %v1812 = vld [vmem:[%s5 + $0x20] sm:$0xff]
    %v1813 = vld [vmem:[%s5 + $0x28] sm:$0xff]
    %v1814 = vld [vmem:[%s5 + $0x30] sm:$0xff]
    %v1815 = vld [vmem:[%s5 + $0x38] sm:$0xff]
    %v1816 = vld [vmem:[#allocation5 + $0x5] sm:$0x1]
    %v1817 = vlaneseq
    %v1818 = vshrl.u32 %v1817, 7
    %v1819 = vsub.s32 0, %v1818
    %v1820 = vrot.slane %v1816, %v1819
    %vm1821 = vcmask 523264
    %v1823 = vsel %vm1821, %v1806, 0
    %v1826 = vsel %vm1821, %v1807, 0
    %1828 = vmatprep.subr.mxu0 0.0
    %1829 = vmatpush1.msra.mxu0 %v1808
    %1830 = vmatprep.subr.mxu0 0.0
    %1831 = vmatpush1.msra.mxu0 %v1809
    %1832 = vmatprep.subr.mxu0 0.0
    %1833 = vmatpush1.msra.mxu0 %v1810
    %1834 = vmatprep.subr.mxu0 0.0
    %1835 = vmatpush1.msra.mxu0 %v1811
    %1836 = vmatprep.subr.mxu0 0.0
    %1837 = vmatpush1.msra.mxu0 %v1812
    %1838 = vmatprep.subr.mxu0 0.0
    %1839 = vmatpush1.msra.mxu0 %v1813
    %1840 = vmatprep.subr.mxu0 0.0
    %1841 = vmatpush1.msra.mxu0 %v1814
    %1842 = vmatprep.subr.mxu0 0.0
    %1843 = vmatpush1.msra.mxu0 %v1815
    %1844 = vmatprep.subr.mxu0 0.0
    %1845 = vmatpush1.msra.mxu0 0.0
    %1846 = vmatprep.subr.mxu0 0.0
    %1847 = vmatpush1.msra.mxu0 0.0
    %1848 = vmatprep.subr.mxu0 0.0
    %1849 = vmatpush1.msra.mxu0 0.0
    %1850 = vmatprep.subr.mxu0 0.0
    %1851 = vmatpush1.msra.mxu0 0.0
    %1852 = vmatprep.subr.mxu0 0.0
    %1853 = vmatpush1.msra.mxu0 0.0
    %1854 = vmatprep.subr.mxu0 0.0
    %1855 = vmatpush1.msra.mxu0 0.0
    %1856 = vmatprep.subr.mxu0 0.0
    %1857 = vmatpush1.msra.mxu0 0.0
    %1858 = vmatprep.subr.mxu0 0.0
    %1859 = vmatpush1.msra.mxu0 0.0
    %1860 = vmatprep.subr.mxu0 0.0
    %1861 = vmatpush1.msra.mxu0 0.0
    %1862 = vmatprep.subr.mxu0 0.0
    %1863 = vmatpush1.msra.mxu0 0.0
    %1864 = vmatprep.subr.mxu0 0.0
    %1865 = vmatpush1.msra.mxu0 0.0
    %1866 = vmatprep.subr.mxu0 0.0
    %1867 = vmatpush1.msra.mxu0 0.0
    %1868 = vmatprep.subr.mxu0 0.0
    %1869 = vmatpush1.msra.mxu0 0.0
    %1870 = vmatprep.subr.mxu0 0.0
    %1871 = vmatpush1.msra.mxu0 0.0
    %1872 = vmatprep.subr.mxu0 0.0
    %1873 = vmatpush1.msra.mxu0 0.0
    %1874 = vmatprep.subr.mxu0 0.0
    %1875 = vmatpush1.msra.mxu0 0.0
    %1876 = vmatprep.subr.mxu0 0.0
    %1877 = vmatpush1.msra.mxu0 0.0
    %1878 = vmatprep.subr.mxu0 0.0
    %1879 = vmatpush1.msra.mxu0 0.0
    %1880 = vmatprep.subr.mxu0 0.0
    %1881 = vmatpush1.msra.mxu0 0.0
    %1882 = vmatprep.subr.mxu0 0.0
    %1883 = vmatpush1.msra.mxu0 0.0
    %1884 = vmatprep.subr.mxu0 0.0
    %1885 = vmatpush1.msra.mxu0 0.0
    %1886 = vmatprep.subr.mxu0 0.0
    %1887 = vmatpush1.msra.mxu0 0.0
    %1888 = vmatprep.subr.mxu0 0.0
    %1889 = vmatpush1.msra.mxu0 0.0
    %1890 = vmatprep.subr.mxu0 0.0
    %1891 = vmatpush1.msra.mxu0 0.0
    %1892 = vmatprep.mubr.f32.mxu0 0.0
    %1893 = vmatmul.mubr.f32.gmra.mrb[0].mxu0 %v1823
    %v1894 = vpop.f32.mrb[0].mxu0
    %v1895 = vadd.f32 %v1820, %v1894
    %v1896 = vpop.f32.mrb[0].mxu0
    %1897 = vmatprep.mubr.f32.mxu0 0.0
    %1898 = vmatmul.mubr.f32.gmra.mrb[0].mxu0 %v1826
    %v1899 = vpop.f32.mrb[0].mxu0
    %v1900 = vadd.f32 %v1820, %v1899
    %v1901 = vpop.f32.mrb[0].mxu0
    %1902 = vdwg.mxu0
    %v1903 = vadd.f32 %v1895, %v1698
    %v1904 = vadd.f32 %v1900, %v1699
    %v1905 = vld [vmem:[#allocation5 + $0x6] sm:$0x1]
    %v1906 = vld [vmem:[#allocation5 + $0x7] sm:$0x1]
    %v1907 = vsel %vm62, %v1903, 0.0
    %1908 = vadd.xlane.f32.xlu0 %v1907
    %v1909 = vpop.xlane.xlu0 %1908
    %v1910 = vsel %vm62, %v1904, 0.0
    %1911 = vadd.xlane.f32.xlu0 %v1910
    %v1912 = vpop.xlane.xlu0 %1911
    %v1913 = vmul.f32 %v1909, %v69
    %v1914 = vmul.f32 %v1912, %v69
    %v1915 = vsub.f32 %v1903, %v1913
    %v1916 = vsub.f32 %v1904, %v1914
    %v1917 = vmul.f32 %v1915, %v1915
    %v1918 = vmul.f32 %v1916, %v1916
    %v1919 = vsel %vm62, %v1917, 0.0
    %1920 = vadd.xlane.f32.xlu0 %v1919
    %v1921 = vpop.xlane.xlu0 %1920
    %v1922 = vsel %vm62, %v1918, 0.0
    %1923 = vadd.xlane.f32.xlu0 %v1922
    %v1924 = vpop.xlane.xlu0 %1923
    %v1925 = vmul.f32 %v1921, %v69
    %v1926 = vmul.f32 %v1924, %v69
    %v1927 = vadd.f32 %v1925, 1e-12
    %v1928 = vadd.f32 %v1926, 1e-12
    %v1929 = vrsqrt.pop %v1927
    %v1930 = vrsqrt.pop %v1928
    %v1931 = vmul.f32 %v1915, %v1929
    %v1932 = vmul.f32 %v1916, %v1930
    %v1933 = vlaneseq
    %v1934 = vshrl.u32 %v1933, 7
    %v1935 = vsub.s32 0, %v1934
    %v1936 = vrot.slane %v1905, %v1935
    %v1937 = vmul.f32 %v1931, %v1936
    %v1938 = vmul.f32 %v1932, %v1936
    %v1939 = vlaneseq
    %v1940 = vshrl.u32 %v1939, 7
    %v1941 = vsub.s32 0, %v1940
    %v1942 = vrot.slane %v1906, %v1941
    %v1943 = vadd.f32 %v1937, %v1942
    %v1944 = vadd.f32 %v1938, %v1942
    %s1945 = scalar_lea.vmem %s2, 32
    %v1946 = vld [vmem:[%s1945] sm:$0xff]
    %v1947 = vld [vmem:[%s1945 + $0x8] sm:$0xff]
    %v1948 = vld [vmem:[%s1945 + $0x10] sm:$0xff]
    %v1949 = vld [vmem:[%s1945 + $0x18] sm:$0xff]
    %v1950 = vld [vmem:[#allocation5 + $0x8] sm:$0x1]
    %v1951 = vlaneseq
    %v1952 = vshrl.u32 %v1951, 7
    %v1953 = vsub.s32 0, %v1952
    %v1954 = vrot.slane %v1950, %v1953
    %v1956 = vsel %vm62, %v1943, 0
    %v1959 = vsel %vm62, %v1944, 0
    %1961 = vmatprep.subr.mxu0 0.0
    %1962 = vmatpush1.msra.mxu0 %v1946
    %1963 = vmatprep.subr.mxu0 0.0
    %1964 = vmatpush1.msra.mxu0 %v1947
    %1965 = vmatprep.subr.mxu0 0.0
    %1966 = vmatpush1.msra.mxu0 %v1948
    %1967 = vmatprep.subr.mxu0 0.0
    %1968 = vmatpush1.msra.mxu0 %v1949
    %1969 = vmatprep.subr.mxu0 0.0
    %1970 = vmatpush1.msra.mxu0 0.0
    %1971 = vmatprep.subr.mxu0 0.0
    %1972 = vmatpush1.msra.mxu0 0.0
    %1973 = vmatprep.subr.mxu0 0.0
    %1974 = vmatpush1.msra.mxu0 0.0
    %1975 = vmatprep.subr.mxu0 0.0
    %1976 = vmatpush1.msra.mxu0 0.0
    %1977 = vmatprep.subr.mxu0 0.0
    %1978 = vmatpush1.msra.mxu0 0.0
    %1979 = vmatprep.subr.mxu0 0.0
    %1980 = vmatpush1.msra.mxu0 0.0
    %1981 = vmatprep.subr.mxu0 0.0
    %1982 = vmatpush1.msra.mxu0 0.0
    %1983 = vmatprep.subr.mxu0 0.0
    %1984 = vmatpush1.msra.mxu0 0.0
    %1985 = vmatprep.subr.mxu0 0.0
    %1986 = vmatpush1.msra.mxu0 0.0
    %1987 = vmatprep.subr.mxu0 0.0
    %1988 = vmatpush1.msra.mxu0 0.0
    %1989 = vmatprep.subr.mxu0 0.0
    %1990 = vmatpush1.msra.mxu0 0.0
    %1991 = vmatprep.subr.mxu0 0.0
    %1992 = vmatpush1.msra.mxu0 0.0
    %1993 = vmatprep.subr.mxu0 0.0
    %1994 = vmatpush1.msra.mxu0 0.0
    %1995 = vmatprep.subr.mxu0 0.0
    %1996 = vmatpush1.msra.mxu0 0.0
    %1997 = vmatprep.subr.mxu0 0.0
    %1998 = vmatpush1.msra.mxu0 0.0
    %1999 = vmatprep.subr.mxu0 0.0
    %2000 = vmatpush1.msra.mxu0 0.0
    %2001 = vmatprep.subr.mxu0 0.0
    %2002 = vmatpush1.msra.mxu0 0.0
    %2003 = vmatprep.subr.mxu0 0.0
    %2004 = vmatpush1.msra.mxu0 0.0
    %2005 = vmatprep.subr.mxu0 0.0
    %2006 = vmatpush1.msra.mxu0 0.0
    %2007 = vmatprep.subr.mxu0 0.0
    %2008 = vmatpush1.msra.mxu0 0.0
    %2009 = vmatprep.subr.mxu0 0.0
    %2010 = vmatpush1.msra.mxu0 0.0
    %2011 = vmatprep.subr.mxu0 0.0
    %2012 = vmatpush1.msra.mxu0 0.0
    %2013 = vmatprep.subr.mxu0 0.0
    %2014 = vmatpush1.msra.mxu0 0.0
    %2015 = vmatprep.subr.mxu0 0.0
    %2016 = vmatpush1.msra.mxu0 0.0
    %2017 = vmatprep.subr.mxu0 0.0
    %2018 = vmatpush1.msra.mxu0 0.0
    %2019 = vmatprep.subr.mxu0 0.0
    %2020 = vmatpush1.msra.mxu0 0.0
    %2021 = vmatprep.subr.mxu0 0.0
    %2022 = vmatpush1.msra.mxu0 0.0
    %2023 = vmatprep.subr.mxu0 0.0
    %2024 = vmatpush1.msra.mxu0 0.0
    %2025 = vmatprep.mubr.f32.mxu0 0.0
    %2026 = vmatmul.mubr.f32.gmra.mrb[0].mxu0 %v1956
    %v2027 = vpop.f32.mrb[0].mxu0
    %v2028 = vadd.f32 %v1954, %v2027
    %v2029 = vpop.f32.mrb[0].mxu0
    %2030 = vmatprep.mubr.f32.mxu0 0.0
    %2031 = vmatmul.mubr.f32.gmra.mrb[0].mxu0 %v1959
    %v2032 = vpop.f32.mrb[0].mxu0
    %v2033 = vadd.f32 %v1954, %v2032
    %v2034 = vpop.f32.mrb[0].mxu0
    %2035 = vdwg.mxu0
    %2037 = vrot.lane.b32.xlu0 %v2028, 96
    %v2038 = vpop.permute.xlu0 %2037
    %v2039 = vsel %vm196, %v2028, 0
    %v2041 = vsel %vm196, %v2038, 0
    %2043 = vmatprep.subr.mxu0 0.0
    %2044 = vmatpush1.xpose.msra.mxu0 %v2041
    %2045 = vmatprep.subr.mxu0 0.0
    %2046 = vmatpush1.xpose.msra.mxu0 0.0
    %2047 = vmatprep.subr.mxu0 0.0
    %2048 = vmatpush1.xpose.msra.mxu0 0.0
    %2049 = vmatprep.subr.mxu0 0.0
    %2050 = vmatpush1.xpose.msra.mxu0 0.0
    %2051 = vmatprep.subr.mxu0 0.0
    %2052 = vmatpush1.xpose.msra.mxu0 0.0
    %2053 = vmatprep.subr.mxu0 0.0
    %2054 = vmatpush1.xpose.msra.mxu0 0.0
    %2055 = vmatprep.subr.mxu0 0.0
    %2056 = vmatpush1.xpose.msra.mxu0 0.0
    %2057 = vmatprep.subr.mxu0 0.0
    %2058 = vmatpush1.xpose.msra.mxu0 0.0
    %2059 = vmatprep.subr.mxu0 0.0
    %2060 = vmatpush1.xpose.msra.mxu0 0.0
    %2061 = vmatprep.subr.mxu0 0.0
    %2062 = vmatpush1.xpose.msra.mxu0 0.0
    %2063 = vmatprep.subr.mxu0 0.0
    %2064 = vmatpush1.xpose.msra.mxu0 0.0
    %2065 = vmatprep.subr.mxu0 0.0
    %2066 = vmatpush1.xpose.msra.mxu0 0.0
    %2067 = vmatprep.subr.mxu0 0.0
    %2068 = vmatpush1.xpose.msra.mxu0 0.0
    %2069 = vmatprep.subr.mxu0 0.0
    %2070 = vmatpush1.xpose.msra.mxu0 0.0
    %2071 = vmatprep.subr.mxu0 0.0
    %2072 = vmatpush1.xpose.msra.mxu0 0.0
    %2073 = vmatprep.subr.mxu0 0.0
    %2074 = vmatpush1.xpose.msra.mxu0 0.0
    %2075 = vmatprep.subr.mxu0 0.0
    %2076 = vmatpush1.xpose.msra.mxu0 0.0
    %2077 = vmatprep.subr.mxu0 0.0
    %2078 = vmatpush1.xpose.msra.mxu0 0.0
    %2079 = vmatprep.subr.mxu0 0.0
    %2080 = vmatpush1.xpose.msra.mxu0 0.0
    %2081 = vmatprep.subr.mxu0 0.0
    %2082 = vmatpush1.xpose.msra.mxu0 0.0
    %2083 = vmatprep.subr.mxu0 0.0
    %2084 = vmatpush1.xpose.msra.mxu0 0.0
    %2085 = vmatprep.subr.mxu0 0.0
    %2086 = vmatpush1.xpose.msra.mxu0 0.0
    %2087 = vmatprep.subr.mxu0 0.0
    %2088 = vmatpush1.xpose.msra.mxu0 0.0
    %2089 = vmatprep.subr.mxu0 0.0
    %2090 = vmatpush1.xpose.msra.mxu0 0.0
    %2091 = vmatprep.subr.mxu0 0.0
    %2092 = vmatpush1.xpose.msra.mxu0 0.0
    %2093 = vmatprep.subr.mxu0 0.0
    %2094 = vmatpush1.xpose.msra.mxu0 0.0
    %2095 = vmatprep.subr.mxu0 0.0
    %2096 = vmatpush1.xpose.msra.mxu0 0.0
    %2097 = vmatprep.subr.mxu0 0.0
    %2098 = vmatpush1.xpose.msra.mxu0 0.0
    %2099 = vmatprep.subr.mxu0 0.0
    %2100 = vmatpush1.xpose.msra.mxu0 0.0
    %2101 = vmatprep.subr.mxu0 0.0
    %2102 = vmatpush1.xpose.msra.mxu0 0.0
    %2103 = vmatprep.subr.mxu0 0.0
    %2104 = vmatpush1.xpose.msra.mxu0 0.0
    %2105 = vmatprep.subr.mxu0 0.0
    %2106 = vmatpush1.xpose.msra.mxu0 0.0
    %2107 = vmatprep.mubr.f32.mxu0 0.0
    %2108 = vmatmul.mubr.f32.gmra.mrb[0].mxu0 %v2039
    %v2109 = vpop.f32.mrb[0].mxu0
    %v2110 = vadd.f32 0.0, %v2109
    %v2111 = vpop.f32.mrb[0].mxu0
    %2112 = vdwg.mxu0
    %v2113 = vmul.f32 %v2110, 0.35355338
    %v2114 = vadd.f32 %v2113, %v275
    %v2115 = vsel %vm196, %v2114, -inf
    %2116 = vmax.xlane.f32.xlu0 %v2115
    %v2117 = vpop.xlane.xlu0 %2116
    %v2118 = vsub.f32 %v2114, %v2117
    %v2119 = vmul.f32 %v2118, 1.442695
    %v2120 = vpow.pop %v2119
    %v2121 = vsel %vm196, %v2120, 0.0
    %2122 = vadd.xlane.f32.xlu0 %v2121
    %v2123 = vpop.xlane.xlu0 %2122
    %v2124 = vrcp.pop %v2123
    %v2125 = vmul.f32 %v2120, %v2124
    %2126 = vrot.lane.b32.xlu0 %v2028, 64
    %v2127 = vpop.permute.xlu0 %2126
    %v2130 = vsel %vm196, %v2125, 0
    %2132 = vmatprep.subr.mxu0 0.0
    %2133 = vmatpush1.msra.mxu0 %v2127
    %2134 = vmatprep.subr.mxu0 0.0
    %2135 = vmatpush1.msra.mxu0 0.0
    %2136 = vmatprep.subr.mxu0 0.0
    %2137 = vmatpush1.msra.mxu0 0.0
    %2138 = vmatprep.subr.mxu0 0.0
    %2139 = vmatpush1.msra.mxu0 0.0
    %2140 = vmatprep.subr.mxu0 0.0
    %2141 = vmatpush1.msra.mxu0 0.0
    %2142 = vmatprep.subr.mxu0 0.0
    %2143 = vmatpush1.msra.mxu0 0.0
    %2144 = vmatprep.subr.mxu0 0.0
    %2145 = vmatpush1.msra.mxu0 0.0
    %2146 = vmatprep.subr.mxu0 0.0
    %2147 = vmatpush1.msra.mxu0 0.0
    %2148 = vmatprep.subr.mxu0 0.0
    %2149 = vmatpush1.msra.mxu0 0.0
    %2150 = vmatprep.subr.mxu0 0.0
    %2151 = vmatpush1.msra.mxu0 0.0
    %2152 = vmatprep.subr.mxu0 0.0
    %2153 = vmatpush1.msra.mxu0 0.0
    %2154 = vmatprep.subr.mxu0 0.0
    %2155 = vmatpush1.msra.mxu0 0.0
    %2156 = vmatprep.subr.mxu0 0.0
    %2157 = vmatpush1.msra.mxu0 0.0
    %2158 = vmatprep.subr.mxu0 0.0
    %2159 = vmatpush1.msra.mxu0 0.0
    %2160 = vmatprep.subr.mxu0 0.0
    %2161 = vmatpush1.msra.mxu0 0.0
    %2162 = vmatprep.subr.mxu0 0.0
    %2163 = vmatpush1.msra.mxu0 0.0
    %2164 = vmatprep.subr.mxu0 0.0
    %2165 = vmatpush1.msra.mxu0 0.0
    %2166 = vmatprep.subr.mxu0 0.0
    %2167 = vmatpush1.msra.mxu0 0.0
    %2168 = vmatprep.subr.mxu0 0.0
    %2169 = vmatpush1.msra.mxu0 0.0
    %2170 = vmatprep.subr.mxu0 0.0
    %2171 = vmatpush1.msra.mxu0 0.0
    %2172 = vmatprep.subr.mxu0 0.0
    %2173 = vmatpush1.msra.mxu0 0.0
    %2174 = vmatprep.subr.mxu0 0.0
    %2175 = vmatpush1.msra.mxu0 0.0
    %2176 = vmatprep.subr.mxu0 0.0
    %2177 = vmatpush1.msra.mxu0 0.0
    %2178 = vmatprep.subr.mxu0 0.0
    %2179 = vmatpush1.msra.mxu0 0.0
    %2180 = vmatprep.subr.mxu0 0.0
    %2181 = vmatpush1.msra.mxu0 0.0
    %2182 = vmatprep.subr.mxu0 0.0
    %2183 = vmatpush1.msra.mxu0 0.0
    %2184 = vmatprep.subr.mxu0 0.0
    %2185 = vmatpush1.msra.mxu0 0.0
    %2186 = vmatprep.subr.mxu0 0.0
    %2187 = vmatpush1.msra.mxu0 0.0
    %2188 = vmatprep.subr.mxu0 0.0
    %2189 = vmatpush1.msra.mxu0 0.0
    %2190 = vmatprep.subr.mxu0 0.0
    %2191 = vmatpush1.msra.mxu0 0.0
    %2192 = vmatprep.subr.mxu0 0.0
    %2193 = vmatpush1.msra.mxu0 0.0
    %2194 = vmatprep.subr.mxu0 0.0
    %2195 = vmatpush1.msra.mxu0 0.0
    %2196 = vmatprep.mubr.f32.mxu0 0.0
    %2197 = vmatmul.mubr.f32.gmra.mrb[0].mxu0 %v2130
    %v2198 = vpop.f32.mrb[0].mxu0
    %v2199 = vadd.f32 0.0, %v2198
    %v2200 = vpop.f32.mrb[0].mxu0
    %2201 = vdwg.mxu0
    %2202 = vrot.lane.b32.xlu0 %v2028, 120
    %v2203 = vpop.permute.xlu0 %2202
    %2204 = vrot.lane.b32.xlu0 %v2028, 88
    %v2205 = vpop.permute.xlu0 %2204
    %v2206 = vsel %vm196, %v2203, 0
    %v2208 = vsel %vm196, %v2205, 0
    %2210 = vmatprep.subr.mxu0 0.0
    %2211 = vmatpush1.xpose.msra.mxu0 %v2208
    %2212 = vmatprep.subr.mxu0 0.0
    %2213 = vmatpush1.xpose.msra.mxu0 0.0
    %2214 = vmatprep.subr.mxu0 0.0
    %2215 = vmatpush1.xpose.msra.mxu0 0.0
    %2216 = vmatprep.subr.mxu0 0.0
    %2217 = vmatpush1.xpose.msra.mxu0 0.0
    %2218 = vmatprep.subr.mxu0 0.0
    %2219 = vmatpush1.xpose.msra.mxu0 0.0
    %2220 = vmatprep.subr.mxu0 0.0
    %2221 = vmatpush1.xpose.msra.mxu0 0.0
    %2222 = vmatprep.subr.mxu0 0.0
    %2223 = vmatpush1.xpose.msra.mxu0 0.0
    %2224 = vmatprep.subr.mxu0 0.0
    %2225 = vmatpush1.xpose.msra.mxu0 0.0
    %2226 = vmatprep.subr.mxu0 0.0
    %2227 = vmatpush1.xpose.msra.mxu0 0.0
    %2228 = vmatprep.subr.mxu0 0.0
    %2229 = vmatpush1.xpose.msra.mxu0 0.0
    %2230 = vmatprep.subr.mxu0 0.0
    %2231 = vmatpush1.xpose.msra.mxu0 0.0
    %2232 = vmatprep.subr.mxu0 0.0
    %2233 = vmatpush1.xpose.msra.mxu0 0.0
    %2234 = vmatprep.subr.mxu0 0.0
    %2235 = vmatpush1.xpose.msra.mxu0 0.0
    %2236 = vmatprep.subr.mxu0 0.0
    %2237 = vmatpush1.xpose.msra.mxu0 0.0
    %2238 = vmatprep.subr.mxu0 0.0
    %2239 = vmatpush1.xpose.msra.mxu0 0.0
    %2240 = vmatprep.subr.mxu0 0.0
    %2241 = vmatpush1.xpose.msra.mxu0 0.0
    %2242 = vmatprep.subr.mxu0 0.0
    %2243 = vmatpush1.xpose.msra.mxu0 0.0
    %2244 = vmatprep.subr.mxu0 0.0
    %2245 = vmatpush1.xpose.msra.mxu0 0.0
    %2246 = vmatprep.subr.mxu0 0.0
    %2247 = vmatpush1.xpose.msra.mxu0 0.0
    %2248 = vmatprep.subr.mxu0 0.0
    %2249 = vmatpush1.xpose.msra.mxu0 0.0
    %2250 = vmatprep.subr.mxu0 0.0
    %2251 = vmatpush1.xpose.msra.mxu0 0.0
    %2252 = vmatprep.subr.mxu0 0.0
    %2253 = vmatpush1.xpose.msra.mxu0 0.0
    %2254 = vmatprep.subr.mxu0 0.0
    %2255 = vmatpush1.xpose.msra.mxu0 0.0
    %2256 = vmatprep.subr.mxu0 0.0
    %2257 = vmatpush1.xpose.msra.mxu0 0.0
    %2258 = vmatprep.subr.mxu0 0.0
    %2259 = vmatpush1.xpose.msra.mxu0 0.0
    %2260 = vmatprep.subr.mxu0 0.0
    %2261 = vmatpush1.xpose.msra.mxu0 0.0
    %2262 = vmatprep.subr.mxu0 0.0
    %2263 = vmatpush1.xpose.msra.mxu0 0.0
    %2264 = vmatprep.subr.mxu0 0.0
    %2265 = vmatpush1.xpose.msra.mxu0 0.0
    %2266 = vmatprep.subr.mxu0 0.0
    %2267 = vmatpush1.xpose.msra.mxu0 0.0
    %2268 = vmatprep.subr.mxu0 0.0
    %2269 = vmatpush1.xpose.msra.mxu0 0.0
    %2270 = vmatprep.subr.mxu0 0.0
    %2271 = vmatpush1.xpose.msra.mxu0 0.0
    %2272 = vmatprep.subr.mxu0 0.0
    %2273 = vmatpush1.xpose.msra.mxu0 0.0
    %2274 = vmatprep.mubr.f32.mxu0 0.0
    %2275 = vmatmul.mubr.f32.gmra.mrb[0].mxu0 %v2206
    %v2276 = vpop.f32.mrb[0].mxu0
    %v2277 = vadd.f32 0.0, %v2276
    %v2278 = vpop.f32.mrb[0].mxu0
    %2279 = vdwg.mxu0
    %v2280 = vmul.f32 %v2277, 0.35355338
    %v2281 = vadd.f32 %v2280, %v275
    %v2282 = vsel %vm196, %v2281, -inf
    %2283 = vmax.xlane.f32.xlu0 %v2282
    %v2284 = vpop.xlane.xlu0 %2283
    %v2285 = vsub.f32 %v2281, %v2284
    %v2286 = vmul.f32 %v2285, 1.442695
    %v2287 = vpow.pop %v2286
    %v2288 = vsel %vm196, %v2287, 0.0
    %2289 = vadd.xlane.f32.xlu0 %v2288
    %v2290 = vpop.xlane.xlu0 %2289
    %v2291 = vrcp.pop %v2290
    %v2292 = vmul.f32 %v2287, %v2291
    %2293 = vrot.lane.b32.xlu0 %v2028, 56
    %v2294 = vpop.permute.xlu0 %2293
    %v2297 = vsel %vm196, %v2292, 0
    %2299 = vmatprep.subr.mxu0 0.0
    %2300 = vmatpush1.msra.mxu0 %v2294
    %2301 = vmatprep.subr.mxu0 0.0
    %2302 = vmatpush1.msra.mxu0 0.0
    %2303 = vmatprep.subr.mxu0 0.0
    %2304 = vmatpush1.msra.mxu0 0.0
    %2305 = vmatprep.subr.mxu0 0.0
    %2306 = vmatpush1.msra.mxu0 0.0
    %2307 = vmatprep.subr.mxu0 0.0
    %2308 = vmatpush1.msra.mxu0 0.0
    %2309 = vmatprep.subr.mxu0 0.0
    %2310 = vmatpush1.msra.mxu0 0.0
    %2311 = vmatprep.subr.mxu0 0.0
    %2312 = vmatpush1.msra.mxu0 0.0
    %2313 = vmatprep.subr.mxu0 0.0
    %2314 = vmatpush1.msra.mxu0 0.0
    %2315 = vmatprep.subr.mxu0 0.0
    %2316 = vmatpush1.msra.mxu0 0.0
    %2317 = vmatprep.subr.mxu0 0.0
    %2318 = vmatpush1.msra.mxu0 0.0
    %2319 = vmatprep.subr.mxu0 0.0
    %2320 = vmatpush1.msra.mxu0 0.0
    %2321 = vmatprep.subr.mxu0 0.0
    %2322 = vmatpush1.msra.mxu0 0.0
    %2323 = vmatprep.subr.mxu0 0.0
    %2324 = vmatpush1.msra.mxu0 0.0
    %2325 = vmatprep.subr.mxu0 0.0
    %2326 = vmatpush1.msra.mxu0 0.0
    %2327 = vmatprep.subr.mxu0 0.0
    %2328 = vmatpush1.msra.mxu0 0.0
    %2329 = vmatprep.subr.mxu0 0.0
    %2330 = vmatpush1.msra.mxu0 0.0
    %2331 = vmatprep.subr.mxu0 0.0
    %2332 = vmatpush1.msra.mxu0 0.0
    %2333 = vmatprep.subr.mxu0 0.0
    %2334 = vmatpush1.msra.mxu0 0.0
    %2335 = vmatprep.subr.mxu0 0.0
    %2336 = vmatpush1.msra.mxu0 0.0
    %2337 = vmatprep.subr.mxu0 0.0
    %2338 = vmatpush1.msra.mxu0 0.0
    %2339 = vmatprep.subr.mxu0 0.0
    %2340 = vmatpush1.msra.mxu0 0.0
    %2341 = vmatprep.subr.mxu0 0.0
    %2342 = vmatpush1.msra.mxu0 0.0
    %2343 = vmatprep.subr.mxu0 0.0
    %2344 = vmatpush1.msra.mxu0 0.0
    %2345 = vmatprep.subr.mxu0 0.0
    %2346 = vmatpush1.msra.mxu0 0.0
    %2347 = vmatprep.subr.mxu0 0.0
    %2348 = vmatpush1.msra.mxu0 0.0
    %2349 = vmatprep.subr.mxu0 0.0
    %2350 = vmatpush1.msra.mxu0 0.0
    %2351 = vmatprep.subr.mxu0 0.0
    %2352 = vmatpush1.msra.mxu0 0.0
    %2353 = vmatprep.subr.mxu0 0.0
    %2354 = vmatpush1.msra.mxu0 0.0
    %2355 = vmatprep.subr.mxu0 0.0
    %2356 = vmatpush1.msra.mxu0 0.0
    %2357 = vmatprep.subr.mxu0 0.0
    %2358 = vmatpush1.msra.mxu0 0.0
    %2359 = vmatprep.subr.mxu0 0.0
    %2360 = vmatpush1.msra.mxu0 0.0
    %2361 = vmatprep.subr.mxu0 0.0
    %2362 = vmatpush1.msra.mxu0 0.0
    %2363 = vmatprep.mubr.f32.mxu0 0.0
    %2364 = vmatmul.mubr.f32.gmra.mrb[0].mxu0 %v2297
    %v2365 = vpop.f32.mrb[0].mxu0
    %v2366 = vadd.f32 0.0, %v2365
    %v2367 = vpop.f32.mrb[0].mxu0
    %2368 = vdwg.mxu0
    %2369 = vrot.lane.b32.xlu0 %v2028, 112
    %v2370 = vpop.permute.xlu0 %2369
    %2371 = vrot.lane.b32.xlu0 %v2028, 80
    %v2372 = vpop.permute.xlu0 %2371
    %v2373 = vsel %vm196, %v2370, 0
    %v2375 = vsel %vm196, %v2372, 0
    %2377 = vmatprep.subr.mxu0 0.0
    %2378 = vmatpush1.xpose.msra.mxu0 %v2375
    %2379 = vmatprep.subr.mxu0 0.0
    %2380 = vmatpush1.xpose.msra.mxu0 0.0
    %2381 = vmatprep.subr.mxu0 0.0
    %2382 = vmatpush1.xpose.msra.mxu0 0.0
    %2383 = vmatprep.subr.mxu0 0.0
    %2384 = vmatpush1.xpose.msra.mxu0 0.0
    %2385 = vmatprep.subr.mxu0 0.0
    %2386 = vmatpush1.xpose.msra.mxu0 0.0
    %2387 = vmatprep.subr.mxu0 0.0
    %2388 = vmatpush1.xpose.msra.mxu0 0.0
    %2389 = vmatprep.subr.mxu0 0.0
    %2390 = vmatpush1.xpose.msra.mxu0 0.0
    %2391 = vmatprep.subr.mxu0 0.0
    %2392 = vmatpush1.xpose.msra.mxu0 0.0
    %2393 = vmatprep.subr.mxu0 0.0
    %2394 = vmatpush1.xpose.msra.mxu0 0.0
    %2395 = vmatprep.subr.mxu0 0.0
    %2396 = vmatpush1.xpose.msra.mxu0 0.0
    %2397 = vmatprep.subr.mxu0 0.0
    %2398 = vmatpush1.xpose.msra.mxu0 0.0
    %2399 = vmatprep.subr.mxu0 0.0
    %2400 = vmatpush1.xpose.msra.mxu0 0.0
    %2401 = vmatprep.subr.mxu0 0.0
    %2402 = vmatpush1.xpose.msra.mxu0 0.0
    %2403 = vmatprep.subr.mxu0 0.0
    %2404 = vmatpush1.xpose.msra.mxu0 0.0
    %2405 = vmatprep.subr.mxu0 0.0
    %2406 = vmatpush1.xpose.msra.mxu0 0.0
    %2407 = vmatprep.subr.mxu0 0.0
    %2408 = vmatpush1.xpose.msra.mxu0 0.0
    %2409 = vmatprep.subr.mxu0 0.0
    %2410 = vmatpush1.xpose.msra.mxu0 0.0
    %2411 = vmatprep.subr.mxu0 0.0
    %2412 = vmatpush1.xpose.msra.mxu0 0.0
    %2413 = vmatprep.subr.mxu0 0.0
    %2414 = vmatpush1.xpose.msra.mxu0 0.0
    %2415 = vmatprep.subr.mxu0 0.0
    %2416 = vmatpush1.xpose.msra.mxu0 0.0
    %2417 = vmatprep.subr.mxu0 0.0
    %2418 = vmatpush1.xpose.msra.mxu0 0.0
    %2419 = vmatprep.subr.mxu0 0.0
    %2420 = vmatpush1.xpose.msra.mxu0 0.0
    %2421 = vmatprep.subr.mxu0 0.0
    %2422 = vmatpush1.xpose.msra.mxu0 0.0
    %2423 = vmatprep.subr.mxu0 0.0
    %2424 = vmatpush1.xpose.msra.mxu0 0.0
    %2425 = vmatprep.subr.mxu0 0.0
    %2426 = vmatpush1.xpose.msra.mxu0 0.0
    %2427 = vmatprep.subr.mxu0 0.0
    %2428 = vmatpush1.xpose.msra.mxu0 0.0
    %2429 = vmatprep.subr.mxu0 0.0
    %2430 = vmatpush1.xpose.msra.mxu0 0.0
    %2431 = vmatprep.subr.mxu0 0.0
    %2432 = vmatpush1.xpose.msra.mxu0 0.0
    %2433 = vmatprep.subr.mxu0 0.0
    %2434 = vmatpush1.xpose.msra.mxu0 0.0
    %2435 = vmatprep.subr.mxu0 0.0
    %2436 = vmatpush1.xpose.msra.mxu0 0.0
    %2437 = vmatprep.subr.mxu0 0.0
    %2438 = vmatpush1.xpose.msra.mxu0 0.0
    %2439 = vmatprep.subr.mxu0 0.0
    %2440 = vmatpush1.xpose.msra.mxu0 0.0
    %2441 = vmatprep.mubr.f32.mxu0 0.0
    %2442 = vmatmul.mubr.f32.gmra.mrb[0].mxu0 %v2373
    %v2443 = vpop.f32.mrb[0].mxu0
    %v2444 = vadd.f32 0.0, %v2443
    %v2445 = vpop.f32.mrb[0].mxu0
    %2446 = vdwg.mxu0
    %v2447 = vmul.f32 %v2444, 0.35355338
    %v2448 = vadd.f32 %v2447, %v275
    %v2449 = vsel %vm196, %v2448, -inf
    %2450 = vmax.xlane.f32.xlu0 %v2449
    %v2451 = vpop.xlane.xlu0 %2450
    %v2452 = vsub.f32 %v2448, %v2451
    %v2453 = vmul.f32 %v2452, 1.442695
    %v2454 = vpow.pop %v2453
    %v2455 = vsel %vm196, %v2454, 0.0
    %2456 = vadd.xlane.f32.xlu0 %v2455
    %v2457 = vpop.xlane.xlu0 %2456
    %v2458 = vrcp.pop %v2457
    %v2459 = vmul.f32 %v2454, %v2458
    %2460 = vrot.lane.b32.xlu0 %v2028, 48
    %v2461 = vpop.permute.xlu0 %2460
    %v2464 = vsel %vm196, %v2459, 0
    %2466 = vmatprep.subr.mxu0 0.0
    %2467 = vmatpush1.msra.mxu0 %v2461
    %2468 = vmatprep.subr.mxu0 0.0
    %2469 = vmatpush1.msra.mxu0 0.0
    %2470 = vmatprep.subr.mxu0 0.0
    %2471 = vmatpush1.msra.mxu0 0.0
    %2472 = vmatprep.subr.mxu0 0.0
    %2473 = vmatpush1.msra.mxu0 0.0
    %2474 = vmatprep.subr.mxu0 0.0
    %2475 = vmatpush1.msra.mxu0 0.0
    %2476 = vmatprep.subr.mxu0 0.0
    %2477 = vmatpush1.msra.mxu0 0.0
    %2478 = vmatprep.subr.mxu0 0.0
    %2479 = vmatpush1.msra.mxu0 0.0
    %2480 = vmatprep.subr.mxu0 0.0
    %2481 = vmatpush1.msra.mxu0 0.0
    %2482 = vmatprep.subr.mxu0 0.0
    %2483 = vmatpush1.msra.mxu0 0.0
    %2484 = vmatprep.subr.mxu0 0.0
    %2485 = vmatpush1.msra.mxu0 0.0
    %2486 = vmatprep.subr.mxu0 0.0
    %2487 = vmatpush1.msra.mxu0 0.0
    %2488 = vmatprep.subr.mxu0 0.0
    %2489 = vmatpush1.msra.mxu0 0.0
    %2490 = vmatprep.subr.mxu0 0.0
    %2491 = vmatpush1.msra.mxu0 0.0
    %2492 = vmatprep.subr.mxu0 0.0
    %2493 = vmatpush1.msra.mxu0 0.0
    %2494 = vmatprep.subr.mxu0 0.0
    %2495 = vmatpush1.msra.mxu0 0.0
    %2496 = vmatprep.subr.mxu0 0.0
    %2497 = vmatpush1.msra.mxu0 0.0
    %2498 = vmatprep.subr.mxu0 0.0
    %2499 = vmatpush1.msra.mxu0 0.0
    %2500 = vmatprep.subr.mxu0 0.0
    %2501 = vmatpush1.msra.mxu0 0.0
    %2502 = vmatprep.subr.mxu0 0.0
    %2503 = vmatpush1.msra.mxu0 0.0
    %2504 = vmatprep.subr.mxu0 0.0
    %2505 = vmatpush1.msra.mxu0 0.0
    %2506 = vmatprep.subr.mxu0 0.0
    %2507 = vmatpush1.msra.mxu0 0.0
    %2508 = vmatprep.subr.mxu0 0.0
    %2509 = vmatpush1.msra.mxu0 0.0
    %2510 = vmatprep.subr.mxu0 0.0
    %2511 = vmatpush1.msra.mxu0 0.0
    %2512 = vmatprep.subr.mxu0 0.0
    %2513 = vmatpush1.msra.mxu0 0.0
    %2514 = vmatprep.subr.mxu0 0.0
    %2515 = vmatpush1.msra.mxu0 0.0
    %2516 = vmatprep.subr.mxu0 0.0
    %2517 = vmatpush1.msra.mxu0 0.0
    %2518 = vmatprep.subr.mxu0 0.0
    %2519 = vmatpush1.msra.mxu0 0.0
    %2520 = vmatprep.subr.mxu0 0.0
    %2521 = vmatpush1.msra.mxu0 0.0
    %2522 = vmatprep.subr.mxu0 0.0
    %2523 = vmatpush1.msra.mxu0 0.0
    %2524 = vmatprep.subr.mxu0 0.0
    %2525 = vmatpush1.msra.mxu0 0.0
    %2526 = vmatprep.subr.mxu0 0.0
    %2527 = vmatpush1.msra.mxu0 0.0
    %2528 = vmatprep.subr.mxu0 0.0
    %2529 = vmatpush1.msra.mxu0 0.0
    %2530 = vmatprep.mubr.f32.mxu0 0.0
    %2531 = vmatmul.mubr.f32.gmra.mrb[0].mxu0 %v2464
    %v2532 = vpop.f32.mrb[0].mxu0
    %v2533 = vadd.f32 0.0, %v2532
    %v2534 = vpop.f32.mrb[0].mxu0
    %2535 = vdwg.mxu0
    %2536 = vrot.lane.b32.xlu0 %v2028, 104
    %v2537 = vpop.permute.xlu0 %2536
    %2538 = vrot.lane.b32.xlu0 %v2028, 72
    %v2539 = vpop.permute.xlu0 %2538
    %v2540 = vsel %vm196, %v2537, 0
    %v2542 = vsel %vm196, %v2539, 0
    %2544 = vmatprep.subr.mxu0 0.0
    %2545 = vmatpush1.xpose.msra.mxu0 %v2542
    %2546 = vmatprep.subr.mxu0 0.0
    %2547 = vmatpush1.xpose.msra.mxu0 0.0
    %2548 = vmatprep.subr.mxu0 0.0
    %2549 = vmatpush1.xpose.msra.mxu0 0.0
    %2550 = vmatprep.subr.mxu0 0.0
    %2551 = vmatpush1.xpose.msra.mxu0 0.0
    %2552 = vmatprep.subr.mxu0 0.0
    %2553 = vmatpush1.xpose.msra.mxu0 0.0
    %2554 = vmatprep.subr.mxu0 0.0
    %2555 = vmatpush1.xpose.msra.mxu0 0.0
    %2556 = vmatprep.subr.mxu0 0.0
    %2557 = vmatpush1.xpose.msra.mxu0 0.0
    %2558 = vmatprep.subr.mxu0 0.0
    %2559 = vmatpush1.xpose.msra.mxu0 0.0
    %2560 = vmatprep.subr.mxu0 0.0
    %2561 = vmatpush1.xpose.msra.mxu0 0.0
    %2562 = vmatprep.subr.mxu0 0.0
    %2563 = vmatpush1.xpose.msra.mxu0 0.0
    %2564 = vmatprep.subr.mxu0 0.0
    %2565 = vmatpush1.xpose.msra.mxu0 0.0
    %2566 = vmatprep.subr.mxu0 0.0
    %2567 = vmatpush1.xpose.msra.mxu0 0.0
    %2568 = vmatprep.subr.mxu0 0.0
    %2569 = vmatpush1.xpose.msra.mxu0 0.0
    %2570 = vmatprep.subr.mxu0 0.0
    %2571 = vmatpush1.xpose.msra.mxu0 0.0
    %2572 = vmatprep.subr.mxu0 0.0
    %2573 = vmatpush1.xpose.msra.mxu0 0.0
    %2574 = vmatprep.subr.mxu0 0.0
    %2575 = vmatpush1.xpose.msra.mxu0 0.0
    %2576 = vmatprep.subr.mxu0 0.0
    %2577 = vmatpush1.xpose.msra.mxu0 0.0
    %2578 = vmatprep.subr.mxu0 0.0
    %2579 = vmatpush1.xpose.msra.mxu0 0.0
    %2580 = vmatprep.subr.mxu0 0.0
    %2581 = vmatpush1.xpose.msra.mxu0 0.0
    %2582 = vmatprep.subr.mxu0 0.0
    %2583 = vmatpush1.xpose.msra.mxu0 0.0
    %2584 = vmatprep.subr.mxu0 0.0
    %2585 = vmatpush1.xpose.msra.mxu0 0.0
    %2586 = vmatprep.subr.mxu0 0.0
    %2587 = vmatpush1.xpose.msra.mxu0 0.0
    %2588 = vmatprep.subr.mxu0 0.0
    %2589 = vmatpush1.xpose.msra.mxu0 0.0
    %2590 = vmatprep.subr.mxu0 0.0
    %2591 = vmatpush1.xpose.msra.mxu0 0.0
    %2592 = vmatprep.subr.mxu0 0.0
    %2593 = vmatpush1.xpose.msra.mxu0 0.0
    %2594 = vmatprep.subr.mxu0 0.0
    %2595 = vmatpush1.xpose.msra.mxu0 0.0
    %2596 = vmatprep.subr.mxu0 0.0
    %2597 = vmatpush1.xpose.msra.mxu0 0.0
    %2598 = vmatprep.subr.mxu0 0.0
    %2599 = vmatpush1.xpose.msra.mxu0 0.0
    %2600 = vmatprep.subr.mxu0 0.0
    %2601 = vmatpush1.xpose.msra.mxu0 0.0
    %2602 = vmatprep.subr.mxu0 0.0
    %2603 = vmatpush1.xpose.msra.mxu0 0.0
    %2604 = vmatprep.subr.mxu0 0.0
    %2605 = vmatpush1.xpose.msra.mxu0 0.0
    %2606 = vmatprep.subr.mxu0 0.0
    %2607 = vmatpush1.xpose.msra.mxu0 0.0
    %2608 = vmatprep.mubr.f32.mxu0 0.0
    %2609 = vmatmul.mubr.f32.gmra.mrb[0].mxu0 %v2540
    %v2610 = vpop.f32.mrb[0].mxu0
    %v2611 = vadd.f32 0.0, %v2610
    %v2612 = vpop.f32.mrb[0].mxu0
    %2613 = vdwg.mxu0
    %v2614 = vmul.f32 %v2611, 0.35355338
    %v2615 = vadd.f32 %v2614, %v275
    %v2616 = vsel %vm196, %v2615, -inf
    %2617 = vmax.xlane.f32.xlu0 %v2616
    %v2618 = vpop.xlane.xlu0 %2617
    %v2619 = vsub.f32 %v2615, %v2618
    %v2620 = vmul.f32 %v2619, 1.442695
    %v2621 = vpow.pop %v2620
    %v2622 = vsel %vm196, %v2621, 0.0
    %2623 = vadd.xlane.f32.xlu0 %v2622
    %v2624 = vpop.xlane.xlu0 %2623
    %v2625 = vrcp.pop %v2624
    %v2626 = vmul.f32 %v2621, %v2625
    %2627 = vrot.lane.b32.xlu0 %v2028, 40
    %v2628 = vpop.permute.xlu0 %2627
    %v2631 = vsel %vm196, %v2626, 0
    %2633 = vmatprep.subr.mxu0 0.0
    %2634 = vmatpush1.msra.mxu0 %v2628
    %2635 = vmatprep.subr.mxu0 0.0
    %2636 = vmatpush1.msra.mxu0 0.0
    %2637 = vmatprep.subr.mxu0 0.0
    %2638 = vmatpush1.msra.mxu0 0.0
    %2639 = vmatprep.subr.mxu0 0.0
    %2640 = vmatpush1.msra.mxu0 0.0
    %2641 = vmatprep.subr.mxu0 0.0
    %2642 = vmatpush1.msra.mxu0 0.0
    %2643 = vmatprep.subr.mxu0 0.0
    %2644 = vmatpush1.msra.mxu0 0.0
    %2645 = vmatprep.subr.mxu0 0.0
    %2646 = vmatpush1.msra.mxu0 0.0
    %2647 = vmatprep.subr.mxu0 0.0
    %2648 = vmatpush1.msra.mxu0 0.0
    %2649 = vmatprep.subr.mxu0 0.0
    %2650 = vmatpush1.msra.mxu0 0.0
    %2651 = vmatprep.subr.mxu0 0.0
    %2652 = vmatpush1.msra.mxu0 0.0
    %2653 = vmatprep.subr.mxu0 0.0
    %2654 = vmatpush1.msra.mxu0 0.0
    %2655 = vmatprep.subr.mxu0 0.0
    %2656 = vmatpush1.msra.mxu0 0.0
    %2657 = vmatprep.subr.mxu0 0.0
    %2658 = vmatpush1.msra.mxu0 0.0
    %2659 = vmatprep.subr.mxu0 0.0
    %2660 = vmatpush1.msra.mxu0 0.0
    %2661 = vmatprep.subr.mxu0 0.0
    %2662 = vmatpush1.msra.mxu0 0.0
    %2663 = vmatprep.subr.mxu0 0.0
    %2664 = vmatpush1.msra.mxu0 0.0
    %2665 = vmatprep.subr.mxu0 0.0
    %2666 = vmatpush1.msra.mxu0 0.0
    %2667 = vmatprep.subr.mxu0 0.0
    %2668 = vmatpush1.msra.mxu0 0.0
    %2669 = vmatprep.subr.mxu0 0.0
    %2670 = vmatpush1.msra.mxu0 0.0
    %2671 = vmatprep.subr.mxu0 0.0
    %2672 = vmatpush1.msra.mxu0 0.0
    %2673 = vmatprep.subr.mxu0 0.0
    %2674 = vmatpush1.msra.mxu0 0.0
    %2675 = vmatprep.subr.mxu0 0.0
    %2676 = vmatpush1.msra.mxu0 0.0
    %2677 = vmatprep.subr.mxu0 0.0
    %2678 = vmatpush1.msra.mxu0 0.0
    %2679 = vmatprep.subr.mxu0 0.0
    %2680 = vmatpush1.msra.mxu0 0.0
    %2681 = vmatprep.subr.mxu0 0.0
    %2682 = vmatpush1.msra.mxu0 0.0
    %2683 = vmatprep.subr.mxu0 0.0
    %2684 = vmatpush1.msra.mxu0 0.0
    %2685 = vmatprep.subr.mxu0 0.0
    %2686 = vmatpush1.msra.mxu0 0.0
    %2687 = vmatprep.subr.mxu0 0.0
    %2688 = vmatpush1.msra.mxu0 0.0
    %2689 = vmatprep.subr.mxu0 0.0
    %2690 = vmatpush1.msra.mxu0 0.0
    %2691 = vmatprep.subr.mxu0 0.0
    %2692 = vmatpush1.msra.mxu0 0.0
    %2693 = vmatprep.subr.mxu0 0.0
    %2694 = vmatpush1.msra.mxu0 0.0
    %2695 = vmatprep.subr.mxu0 0.0
    %2696 = vmatpush1.msra.mxu0 0.0
    %2697 = vmatprep.mubr.f32.mxu0 0.0
    %2698 = vmatmul.mubr.f32.gmra.mrb[0].mxu0 %v2631
    %v2699 = vpop.f32.mrb[0].mxu0
    %v2700 = vadd.f32 0.0, %v2699
    %v2701 = vpop.f32.mrb[0].mxu0
    %2702 = vdwg.mxu0
    %2704 = vrot.lane.b32.xlu0 %v2366, 8
    %v2705 = vpop.permute.xlu0 %2704
    %2708 = vrot.lane.b32.xlu0 %v2533, 16
    %v2709 = vpop.permute.xlu0 %2708
    %2712 = vrot.lane.b32.xlu0 %v2700, 24
    %v2713 = vpop.permute.xlu0 %2712
    %v2715 = vsel %vm196, %v2199, %v2705
    %v2716 = vsel %vm878, %v2715, %v2709
    %v2717 = vsel %vm880, %v2716, %v2713
    %2719 = vrot.lane.b32.xlu0 %v2033, 96
    %v2720 = vpop.permute.xlu0 %2719
    %v2721 = vsel %vm196, %v2033, 0
    %v2723 = vsel %vm196, %v2720, 0
    %2725 = vmatprep.subr.mxu0 0.0
    %2726 = vmatpush1.xpose.msra.mxu0 %v2723
    %2727 = vmatprep.subr.mxu0 0.0
    %2728 = vmatpush1.xpose.msra.mxu0 0.0
    %2729 = vmatprep.subr.mxu0 0.0
    %2730 = vmatpush1.xpose.msra.mxu0 0.0
    %2731 = vmatprep.subr.mxu0 0.0
    %2732 = vmatpush1.xpose.msra.mxu0 0.0
    %2733 = vmatprep.subr.mxu0 0.0
    %2734 = vmatpush1.xpose.msra.mxu0 0.0
    %2735 = vmatprep.subr.mxu0 0.0
    %2736 = vmatpush1.xpose.msra.mxu0 0.0
    %2737 = vmatprep.subr.mxu0 0.0
    %2738 = vmatpush1.xpose.msra.mxu0 0.0
    %2739 = vmatprep.subr.mxu0 0.0
    %2740 = vmatpush1.xpose.msra.mxu0 0.0
    %2741 = vmatprep.subr.mxu0 0.0
    %2742 = vmatpush1.xpose.msra.mxu0 0.0
    %2743 = vmatprep.subr.mxu0 0.0
    %2744 = vmatpush1.xpose.msra.mxu0 0.0
    %2745 = vmatprep.subr.mxu0 0.0
    %2746 = vmatpush1.xpose.msra.mxu0 0.0
    %2747 = vmatprep.subr.mxu0 0.0
    %2748 = vmatpush1.xpose.msra.mxu0 0.0
    %2749 = vmatprep.subr.mxu0 0.0
    %2750 = vmatpush1.xpose.msra.mxu0 0.0
    %2751 = vmatprep.subr.mxu0 0.0
    %2752 = vmatpush1.xpose.msra.mxu0 0.0
    %2753 = vmatprep.subr.mxu0 0.0
    %2754 = vmatpush1.xpose.msra.mxu0 0.0
    %2755 = vmatprep.subr.mxu0 0.0
    %2756 = vmatpush1.xpose.msra.mxu0 0.0
    %2757 = vmatprep.subr.mxu0 0.0
    %2758 = vmatpush1.xpose.msra.mxu0 0.0
    %2759 = vmatprep.subr.mxu0 0.0
    %2760 = vmatpush1.xpose.msra.mxu0 0.0
    %2761 = vmatprep.subr.mxu0 0.0
    %2762 = vmatpush1.xpose.msra.mxu0 0.0
    %2763 = vmatprep.subr.mxu0 0.0
    %2764 = vmatpush1.xpose.msra.mxu0 0.0
    %2765 = vmatprep.subr.mxu0 0.0
    %2766 = vmatpush1.xpose.msra.mxu0 0.0
    %2767 = vmatprep.subr.mxu0 0.0
    %2768 = vmatpush1.xpose.msra.mxu0 0.0
    %2769 = vmatprep.subr.mxu0 0.0
    %2770 = vmatpush1.xpose.msra.mxu0 0.0
    %2771 = vmatprep.subr.mxu0 0.0
    %2772 = vmatpush1.xpose.msra.mxu0 0.0
    %2773 = vmatprep.subr.mxu0 0.0
    %2774 = vmatpush1.xpose.msra.mxu0 0.0
    %2775 = vmatprep.subr.mxu0 0.0
    %2776 = vmatpush1.xpose.msra.mxu0 0.0
    %2777 = vmatprep.subr.mxu0 0.0
    %2778 = vmatpush1.xpose.msra.mxu0 0.0
    %2779 = vmatprep.subr.mxu0 0.0
    %2780 = vmatpush1.xpose.msra.mxu0 0.0
    %2781 = vmatprep.subr.mxu0 0.0
    %2782 = vmatpush1.xpose.msra.mxu0 0.0
    %2783 = vmatprep.subr.mxu0 0.0
    %2784 = vmatpush1.xpose.msra.mxu0 0.0
    %2785 = vmatprep.subr.mxu0 0.0
    %2786 = vmatpush1.xpose.msra.mxu0 0.0
    %2787 = vmatprep.subr.mxu0 0.0
    %2788 = vmatpush1.xpose.msra.mxu0 0.0
    %2789 = vmatprep.mubr.f32.mxu0 0.0
    %2790 = vmatmul.mubr.f32.gmra.mrb[0].mxu0 %v2721
    %v2791 = vpop.f32.mrb[0].mxu0
    %v2792 = vadd.f32 0.0, %v2791
    %v2793 = vpop.f32.mrb[0].mxu0
    %2794 = vdwg.mxu0
    %v2795 = vmul.f32 %v2792, 0.35355338
    %v2796 = vadd.f32 %v2795, %v963
    %v2797 = vsel %vm196, %v2796, -inf
    %2798 = vmax.xlane.f32.xlu0 %v2797
    %v2799 = vpop.xlane.xlu0 %2798
    %v2800 = vsub.f32 %v2796, %v2799
    %v2801 = vmul.f32 %v2800, 1.442695
    %v2802 = vpow.pop %v2801
    %v2803 = vsel %vm196, %v2802, 0.0
    %2804 = vadd.xlane.f32.xlu0 %v2803
    %v2805 = vpop.xlane.xlu0 %2804
    %v2806 = vrcp.pop %v2805
    %v2807 = vmul.f32 %v2802, %v2806
    %2808 = vrot.lane.b32.xlu0 %v2033, 64
    %v2809 = vpop.permute.xlu0 %2808
    %v2812 = vsel %vm196, %v2807, 0
    %2814 = vmatprep.subr.mxu0 0.0
    %2815 = vmatpush1.msra.mxu0 %v2809
    %2816 = vmatprep.subr.mxu0 0.0
    %2817 = vmatpush1.msra.mxu0 0.0
    %2818 = vmatprep.subr.mxu0 0.0
    %2819 = vmatpush1.msra.mxu0 0.0
    %2820 = vmatprep.subr.mxu0 0.0
    %2821 = vmatpush1.msra.mxu0 0.0
    %2822 = vmatprep.subr.mxu0 0.0
    %2823 = vmatpush1.msra.mxu0 0.0
    %2824 = vmatprep.subr.mxu0 0.0
    %2825 = vmatpush1.msra.mxu0 0.0
    %2826 = vmatprep.subr.mxu0 0.0
    %2827 = vmatpush1.msra.mxu0 0.0
    %2828 = vmatprep.subr.mxu0 0.0
    %2829 = vmatpush1.msra.mxu0 0.0
    %2830 = vmatprep.subr.mxu0 0.0
    %2831 = vmatpush1.msra.mxu0 0.0
    %2832 = vmatprep.subr.mxu0 0.0
    %2833 = vmatpush1.msra.mxu0 0.0
    %2834 = vmatprep.subr.mxu0 0.0
    %2835 = vmatpush1.msra.mxu0 0.0
    %2836 = vmatprep.subr.mxu0 0.0
    %2837 = vmatpush1.msra.mxu0 0.0
    %2838 = vmatprep.subr.mxu0 0.0
    %2839 = vmatpush1.msra.mxu0 0.0
    %2840 = vmatprep.subr.mxu0 0.0
    %2841 = vmatpush1.msra.mxu0 0.0
    %2842 = vmatprep.subr.mxu0 0.0
    %2843 = vmatpush1.msra.mxu0 0.0
    %2844 = vmatprep.subr.mxu0 0.0
    %2845 = vmatpush1.msra.mxu0 0.0
    %2846 = vmatprep.subr.mxu0 0.0
    %2847 = vmatpush1.msra.mxu0 0.0
    %2848 = vmatprep.subr.mxu0 0.0
    %2849 = vmatpush1.msra.mxu0 0.0
    %2850 = vmatprep.subr.mxu0 0.0
    %2851 = vmatpush1.msra.mxu0 0.0
    %2852 = vmatprep.subr.mxu0 0.0
    %2853 = vmatpush1.msra.mxu0 0.0
    %2854 = vmatprep.subr.mxu0 0.0
    %2855 = vmatpush1.msra.mxu0 0.0
    %2856 = vmatprep.subr.mxu0 0.0
    %2857 = vmatpush1.msra.mxu0 0.0
    %2858 = vmatprep.subr.mxu0 0.0
    %2859 = vmatpush1.msra.mxu0 0.0
    %2860 = vmatprep.subr.mxu0 0.0
    %2861 = vmatpush1.msra.mxu0 0.0
    %2862 = vmatprep.subr.mxu0 0.0
    %2863 = vmatpush1.msra.mxu0 0.0
    %2864 = vmatprep.subr.mxu0 0.0
    %2865 = vmatpush1.msra.mxu0 0.0
    %2866 = vmatprep.subr.mxu0 0.0
    %2867 = vmatpush1.msra.mxu0 0.0
    %2868 = vmatprep.subr.mxu0 0.0
    %2869 = vmatpush1.msra.mxu0 0.0
    %2870 = vmatprep.subr.mxu0 0.0
    %2871 = vmatpush1.msra.mxu0 0.0
    %2872 = vmatprep.subr.mxu0 0.0
    %2873 = vmatpush1.msra.mxu0 0.0
    %2874 = vmatprep.subr.mxu0 0.0
    %2875 = vmatpush1.msra.mxu0 0.0
    %2876 = vmatprep.subr.mxu0 0.0
    %2877 = vmatpush1.msra.mxu0 0.0
    %2878 = vmatprep.mubr.f32.mxu0 0.0
    %2879 = vmatmul.mubr.f32.gmra.mrb[0].mxu0 %v2812
    %v2880 = vpop.f32.mrb[0].mxu0
    %v2881 = vadd.f32 0.0, %v2880
    %v2882 = vpop.f32.mrb[0].mxu0
    %2883 = vdwg.mxu0
    %2884 = vrot.lane.b32.xlu0 %v2033, 120
    %v2885 = vpop.permute.xlu0 %2884
    %2886 = vrot.lane.b32.xlu0 %v2033, 88
    %v2887 = vpop.permute.xlu0 %2886
    %v2888 = vsel %vm196, %v2885, 0
    %v2890 = vsel %vm196, %v2887, 0
    %2892 = vmatprep.subr.mxu0 0.0
    %2893 = vmatpush1.xpose.msra.mxu0 %v2890
    %2894 = vmatprep.subr.mxu0 0.0
    %2895 = vmatpush1.xpose.msra.mxu0 0.0
    %2896 = vmatprep.subr.mxu0 0.0
    %2897 = vmatpush1.xpose.msra.mxu0 0.0
    %2898 = vmatprep.subr.mxu0 0.0
    %2899 = vmatpush1.xpose.msra.mxu0 0.0
    %2900 = vmatprep.subr.mxu0 0.0
    %2901 = vmatpush1.xpose.msra.mxu0 0.0
    %2902 = vmatprep.subr.mxu0 0.0
    %2903 = vmatpush1.xpose.msra.mxu0 0.0
    %2904 = vmatprep.subr.mxu0 0.0
    %2905 = vmatpush1.xpose.msra.mxu0 0.0
    %2906 = vmatprep.subr.mxu0 0.0
    %2907 = vmatpush1.xpose.msra.mxu0 0.0
    %2908 = vmatprep.subr.mxu0 0.0
    %2909 = vmatpush1.xpose.msra.mxu0 0.0
    %2910 = vmatprep.subr.mxu0 0.0
    %2911 = vmatpush1.xpose.msra.mxu0 0.0
    %2912 = vmatprep.subr.mxu0 0.0
    %2913 = vmatpush1.xpose.msra.mxu0 0.0
    %2914 = vmatprep.subr.mxu0 0.0
    %2915 = vmatpush1.xpose.msra.mxu0 0.0
    %2916 = vmatprep.subr.mxu0 0.0
    %2917 = vmatpush1.xpose.msra.mxu0 0.0
    %2918 = vmatprep.subr.mxu0 0.0
    %2919 = vmatpush1.xpose.msra.mxu0 0.0
    %2920 = vmatprep.subr.mxu0 0.0
    %2921 = vmatpush1.xpose.msra.mxu0 0.0
    %2922 = vmatprep.subr.mxu0 0.0
    %2923 = vmatpush1.xpose.msra.mxu0 0.0
    %2924 = vmatprep.subr.mxu0 0.0
    %2925 = vmatpush1.xpose.msra.mxu0 0.0
    %2926 = vmatprep.subr.mxu0 0.0
    %2927 = vmatpush1.xpose.msra.mxu0 0.0
    %2928 = vmatprep.subr.mxu0 0.0
    %2929 = vmatpush1.xpose.msra.mxu0 0.0
    %2930 = vmatprep.subr.mxu0 0.0
    %2931 = vmatpush1.xpose.msra.mxu0 0.0
    %2932 = vmatprep.subr.mxu0 0.0
    %2933 = vmatpush1.xpose.msra.mxu0 0.0
    %2934 = vmatprep.subr.mxu0 0.0
    %2935 = vmatpush1.xpose.msra.mxu0 0.0
    %2936 = vmatprep.subr.mxu0 0.0
    %2937 = vmatpush1.xpose.msra.mxu0 0.0
    %2938 = vmatprep.subr.mxu0 0.0
    %2939 = vmatpush1.xpose.msra.mxu0 0.0
    %2940 = vmatprep.subr.mxu0 0.0
    %2941 = vmatpush1.xpose.msra.mxu0 0.0
    %2942 = vmatprep.subr.mxu0 0.0
    %2943 = vmatpush1.xpose.msra.mxu0 0.0
    %2944 = vmatprep.subr.mxu0 0.0
    %2945 = vmatpush1.xpose.msra.mxu0 0.0
    %2946 = vmatprep.subr.mxu0 0.0
    %2947 = vmatpush1.xpose.msra.mxu0 0.0
    %2948 = vmatprep.subr.mxu0 0.0
    %2949 = vmatpush1.xpose.msra.mxu0 0.0
    %2950 = vmatprep.subr.mxu0 0.0
    %2951 = vmatpush1.xpose.msra.mxu0 0.0
    %2952 = vmatprep.subr.mxu0 0.0
    %2953 = vmatpush1.xpose.msra.mxu0 0.0
    %2954 = vmatprep.subr.mxu0 0.0
    %2955 = vmatpush1.xpose.msra.mxu0 0.0
    %2956 = vmatprep.mubr.f32.mxu0 0.0
    %2957 = vmatmul.mubr.f32.gmra.mrb[0].mxu0 %v2888
    %v2958 = vpop.f32.mrb[0].mxu0
    %v2959 = vadd.f32 0.0, %v2958
    %v2960 = vpop.f32.mrb[0].mxu0
    %2961 = vdwg.mxu0
    %v2962 = vmul.f32 %v2959, 0.35355338
    %v2963 = vadd.f32 %v2962, %v963
    %v2964 = vsel %vm196, %v2963, -inf
    %2965 = vmax.xlane.f32.xlu0 %v2964
    %v2966 = vpop.xlane.xlu0 %2965
    %v2967 = vsub.f32 %v2963, %v2966
    %v2968 = vmul.f32 %v2967, 1.442695
    %v2969 = vpow.pop %v2968
    %v2970 = vsel %vm196, %v2969, 0.0
    %2971 = vadd.xlane.f32.xlu0 %v2970
    %v2972 = vpop.xlane.xlu0 %2971
    %v2973 = vrcp.pop %v2972
    %v2974 = vmul.f32 %v2969, %v2973
    %2975 = vrot.lane.b32.xlu0 %v2033, 56
    %v2976 = vpop.permute.xlu0 %2975
    %v2979 = vsel %vm196, %v2974, 0
    %2981 = vmatprep.subr.mxu0 0.0
    %2982 = vmatpush1.msra.mxu0 %v2976
    %2983 = vmatprep.subr.mxu0 0.0
    %2984 = vmatpush1.msra.mxu0 0.0
    %2985 = vmatprep.subr.mxu0 0.0
    %2986 = vmatpush1.msra.mxu0 0.0
    %2987 = vmatprep.subr.mxu0 0.0
    %2988 = vmatpush1.msra.mxu0 0.0
    %2989 = vmatprep.subr.mxu0 0.0
    %2990 = vmatpush1.msra.mxu0 0.0
    %2991 = vmatprep.subr.mxu0 0.0
    %2992 = vmatpush1.msra.mxu0 0.0
    %2993 = vmatprep.subr.mxu0 0.0
    %2994 = vmatpush1.msra.mxu0 0.0
    %2995 = vmatprep.subr.mxu0 0.0
    %2996 = vmatpush1.msra.mxu0 0.0
    %2997 = vmatprep.subr.mxu0 0.0
    %2998 = vmatpush1.msra.mxu0 0.0
    %2999 = vmatprep.subr.mxu0 0.0
    %3000 = vmatpush1.msra.mxu0 0.0
    %3001 = vmatprep.subr.mxu0 0.0
    %3002 = vmatpush1.msra.mxu0 0.0
    %3003 = vmatprep.subr.mxu0 0.0
    %3004 = vmatpush1.msra.mxu0 0.0
    %3005 = vmatprep.subr.mxu0 0.0
    %3006 = vmatpush1.msra.mxu0 0.0
    %3007 = vmatprep.subr.mxu0 0.0
    %3008 = vmatpush1.msra.mxu0 0.0
    %3009 = vmatprep.subr.mxu0 0.0
    %3010 = vmatpush1.msra.mxu0 0.0
    %3011 = vmatprep.subr.mxu0 0.0
    %3012 = vmatpush1.msra.mxu0 0.0
    %3013 = vmatprep.subr.mxu0 0.0
    %3014 = vmatpush1.msra.mxu0 0.0
    %3015 = vmatprep.subr.mxu0 0.0
    %3016 = vmatpush1.msra.mxu0 0.0
    %3017 = vmatprep.subr.mxu0 0.0
    %3018 = vmatpush1.msra.mxu0 0.0
    %3019 = vmatprep.subr.mxu0 0.0
    %3020 = vmatpush1.msra.mxu0 0.0
    %3021 = vmatprep.subr.mxu0 0.0
    %3022 = vmatpush1.msra.mxu0 0.0
    %3023 = vmatprep.subr.mxu0 0.0
    %3024 = vmatpush1.msra.mxu0 0.0
    %3025 = vmatprep.subr.mxu0 0.0
    %3026 = vmatpush1.msra.mxu0 0.0
    %3027 = vmatprep.subr.mxu0 0.0
    %3028 = vmatpush1.msra.mxu0 0.0
    %3029 = vmatprep.subr.mxu0 0.0
    %3030 = vmatpush1.msra.mxu0 0.0
    %3031 = vmatprep.subr.mxu0 0.0
    %3032 = vmatpush1.msra.mxu0 0.0
    %3033 = vmatprep.subr.mxu0 0.0
    %3034 = vmatpush1.msra.mxu0 0.0
    %3035 = vmatprep.subr.mxu0 0.0
    %3036 = vmatpush1.msra.mxu0 0.0
    %3037 = vmatprep.subr.mxu0 0.0
    %3038 = vmatpush1.msra.mxu0 0.0
    %3039 = vmatprep.subr.mxu0 0.0
    %3040 = vmatpush1.msra.mxu0 0.0
    %3041 = vmatprep.subr.mxu0 0.0
    %3042 = vmatpush1.msra.mxu0 0.0
    %3043 = vmatprep.subr.mxu0 0.0
    %3044 = vmatpush1.msra.mxu0 0.0
    %3045 = vmatprep.mubr.f32.mxu0 0.0
    %3046 = vmatmul.mubr.f32.gmra.mrb[0].mxu0 %v2979
    %v3047 = vpop.f32.mrb[0].mxu0
    %v3048 = vadd.f32 0.0, %v3047
    %v3049 = vpop.f32.mrb[0].mxu0
    %3050 = vdwg.mxu0
    %3051 = vrot.lane.b32.xlu0 %v2033, 112
    %v3052 = vpop.permute.xlu0 %3051
    %3053 = vrot.lane.b32.xlu0 %v2033, 80
    %v3054 = vpop.permute.xlu0 %3053
    %v3055 = vsel %vm196, %v3052, 0
    %v3057 = vsel %vm196, %v3054, 0
    %3059 = vmatprep.subr.mxu0 0.0
    %3060 = vmatpush1.xpose.msra.mxu0 %v3057
    %3061 = vmatprep.subr.mxu0 0.0
    %3062 = vmatpush1.xpose.msra.mxu0 0.0
    %3063 = vmatprep.subr.mxu0 0.0
    %3064 = vmatpush1.xpose.msra.mxu0 0.0
    %3065 = vmatprep.subr.mxu0 0.0
    %3066 = vmatpush1.xpose.msra.mxu0 0.0
    %3067 = vmatprep.subr.mxu0 0.0
    %3068 = vmatpush1.xpose.msra.mxu0 0.0
    %3069 = vmatprep.subr.mxu0 0.0
    %3070 = vmatpush1.xpose.msra.mxu0 0.0
    %3071 = vmatprep.subr.mxu0 0.0
    %3072 = vmatpush1.xpose.msra.mxu0 0.0
    %3073 = vmatprep.subr.mxu0 0.0
    %3074 = vmatpush1.xpose.msra.mxu0 0.0
    %3075 = vmatprep.subr.mxu0 0.0
    %3076 = vmatpush1.xpose.msra.mxu0 0.0
    %3077 = vmatprep.subr.mxu0 0.0
    %3078 = vmatpush1.xpose.msra.mxu0 0.0
    %3079 = vmatprep.subr.mxu0 0.0
    %3080 = vmatpush1.xpose.msra.mxu0 0.0
    %3081 = vmatprep.subr.mxu0 0.0
    %3082 = vmatpush1.xpose.msra.mxu0 0.0
    %3083 = vmatprep.subr.mxu0 0.0
    %3084 = vmatpush1.xpose.msra.mxu0 0.0
    %3085 = vmatprep.subr.mxu0 0.0
    %3086 = vmatpush1.xpose.msra.mxu0 0.0
    %3087 = vmatprep.subr.mxu0 0.0
    %3088 = vmatpush1.xpose.msra.mxu0 0.0
    %3089 = vmatprep.subr.mxu0 0.0
    %3090 = vmatpush1.xpose.msra.mxu0 0.0
    %3091 = vmatprep.subr.mxu0 0.0
    %3092 = vmatpush1.xpose.msra.mxu0 0.0
    %3093 = vmatprep.subr.mxu0 0.0
    %3094 = vmatpush1.xpose.msra.mxu0 0.0
    %3095 = vmatprep.subr.mxu0 0.0
    %3096 = vmatpush1.xpose.msra.mxu0 0.0
    %3097 = vmatprep.subr.mxu0 0.0
    %3098 = vmatpush1.xpose.msra.mxu0 0.0
    %3099 = vmatprep.subr.mxu0 0.0
    %3100 = vmatpush1.xpose.msra.mxu0 0.0
    %3101 = vmatprep.subr.mxu0 0.0
    %3102 = vmatpush1.xpose.msra.mxu0 0.0
    %3103 = vmatprep.subr.mxu0 0.0
    %3104 = vmatpush1.xpose.msra.mxu0 0.0
    %3105 = vmatprep.subr.mxu0 0.0
    %3106 = vmatpush1.xpose.msra.mxu0 0.0
    %3107 = vmatprep.subr.mxu0 0.0
    %3108 = vmatpush1.xpose.msra.mxu0 0.0
    %3109 = vmatprep.subr.mxu0 0.0
    %3110 = vmatpush1.xpose.msra.mxu0 0.0
    %3111 = vmatprep.subr.mxu0 0.0
    %3112 = vmatpush1.xpose.msra.mxu0 0.0
    %3113 = vmatprep.subr.mxu0 0.0
    %3114 = vmatpush1.xpose.msra.mxu0 0.0
    %3115 = vmatprep.subr.mxu0 0.0
    %3116 = vmatpush1.xpose.msra.mxu0 0.0
    %3117 = vmatprep.subr.mxu0 0.0
    %3118 = vmatpush1.xpose.msra.mxu0 0.0
    %3119 = vmatprep.subr.mxu0 0.0
    %3120 = vmatpush1.xpose.msra.mxu0 0.0
    %3121 = vmatprep.subr.mxu0 0.0
    %3122 = vmatpush1.xpose.msra.mxu0 0.0
    %3123 = vmatprep.mubr.f32.mxu0 0.0
    %3124 = vmatmul.mubr.f32.gmra.mrb[0].mxu0 %v3055
    %v3125 = vpop.f32.mrb[0].mxu0
    %v3126 = vadd.f32 0.0, %v3125
    %v3127 = vpop.f32.mrb[0].mxu0
    %3128 = vdwg.mxu0
    %v3129 = vmul.f32 %v3126, 0.35355338
    %v3130 = vadd.f32 %v3129, %v963
    %v3131 = vsel %vm196, %v3130, -inf
    %3132 = vmax.xlane.f32.xlu0 %v3131
    %v3133 = vpop.xlane.xlu0 %3132
    %v3134 = vsub.f32 %v3130, %v3133
    %v3135 = vmul.f32 %v3134, 1.442695
    %v3136 = vpow.pop %v3135
    %v3137 = vsel %vm196, %v3136, 0.0
    %3138 = vadd.xlane.f32.xlu0 %v3137
    %v3139 = vpop.xlane.xlu0 %3138
    %v3140 = vrcp.pop %v3139
    %v3141 = vmul.f32 %v3136, %v3140
    %3142 = vrot.lane.b32.xlu0 %v2033, 48
    %v3143 = vpop.permute.xlu0 %3142
    %v3146 = vsel %vm196, %v3141, 0
    %3148 = vmatprep.subr.mxu0 0.0
    %3149 = vmatpush1.msra.mxu0 %v3143
    %3150 = vmatprep.subr.mxu0 0.0
    %3151 = vmatpush1.msra.mxu0 0.0
    %3152 = vmatprep.subr.mxu0 0.0
    %3153 = vmatpush1.msra.mxu0 0.0
    %3154 = vmatprep.subr.mxu0 0.0
    %3155 = vmatpush1.msra.mxu0 0.0
    %3156 = vmatprep.subr.mxu0 0.0
    %3157 = vmatpush1.msra.mxu0 0.0
    %3158 = vmatprep.subr.mxu0 0.0
    %3159 = vmatpush1.msra.mxu0 0.0
    %3160 = vmatprep.subr.mxu0 0.0
    %3161 = vmatpush1.msra.mxu0 0.0
    %3162 = vmatprep.subr.mxu0 0.0
    %3163 = vmatpush1.msra.mxu0 0.0
    %3164 = vmatprep.subr.mxu0 0.0
    %3165 = vmatpush1.msra.mxu0 0.0
    %3166 = vmatprep.subr.mxu0 0.0
    %3167 = vmatpush1.msra.mxu0 0.0
    %3168 = vmatprep.subr.mxu0 0.0
    %3169 = vmatpush1.msra.mxu0 0.0
    %3170 = vmatprep.subr.mxu0 0.0
    %3171 = vmatpush1.msra.mxu0 0.0
    %3172 = vmatprep.subr.mxu0 0.0
    %3173 = vmatpush1.msra.mxu0 0.0
    %3174 = vmatprep.subr.mxu0 0.0
    %3175 = vmatpush1.msra.mxu0 0.0
    %3176 = vmatprep.subr.mxu0 0.0
    %3177 = vmatpush1.msra.mxu0 0.0
    %3178 = vmatprep.subr.mxu0 0.0
    %3179 = vmatpush1.msra.mxu0 0.0
    %3180 = vmatprep.subr.mxu0 0.0
    %3181 = vmatpush1.msra.mxu0 0.0
    %3182 = vmatprep.subr.mxu0 0.0
    %3183 = vmatpush1.msra.mxu0 0.0
    %3184 = vmatprep.subr.mxu0 0.0
    %3185 = vmatpush1.msra.mxu0 0.0
    %3186 = vmatprep.subr.mxu0 0.0
    %3187 = vmatpush1.msra.mxu0 0.0
    %3188 = vmatprep.subr.mxu0 0.0
    %3189 = vmatpush1.msra.mxu0 0.0
    %3190 = vmatprep.subr.mxu0 0.0
    %3191 = vmatpush1.msra.mxu0 0.0
    %3192 = vmatprep.subr.mxu0 0.0
    %3193 = vmatpush1.msra.mxu0 0.0
    %3194 = vmatprep.subr.mxu0 0.0
    %3195 = vmatpush1.msra.mxu0 0.0
    %3196 = vmatprep.subr.mxu0 0.0
    %3197 = vmatpush1.msra.mxu0 0.0
    %3198 = vmatprep.subr.mxu0 0.0
    %3199 = vmatpush1.msra.mxu0 0.0
    %3200 = vmatprep.subr.mxu0 0.0
    %3201 = vmatpush1.msra.mxu0 0.0
    %3202 = vmatprep.subr.mxu0 0.0
    %3203 = vmatpush1.msra.mxu0 0.0
    %3204 = vmatprep.subr.mxu0 0.0
    %3205 = vmatpush1.msra.mxu0 0.0
    %3206 = vmatprep.subr.mxu0 0.0
    %3207 = vmatpush1.msra.mxu0 0.0
    %3208 = vmatprep.subr.mxu0 0.0
    %3209 = vmatpush1.msra.mxu0 0.0
    %3210 = vmatprep.subr.mxu0 0.0
    %3211 = vmatpush1.msra.mxu0 0.0
    %3212 = vmatprep.mubr.f32.mxu0 0.0
    %3213 = vmatmul.mubr.f32.gmra.mrb[0].mxu0 %v3146
    %v3214 = vpop.f32.mrb[0].mxu0
    %v3215 = vadd.f32 0.0, %v3214
    %v3216 = vpop.f32.mrb[0].mxu0
    %3217 = vdwg.mxu0
    %3218 = vrot.lane.b32.xlu0 %v2033, 104
    %v3219 = vpop.permute.xlu0 %3218
    %3220 = vrot.lane.b32.xlu0 %v2033, 72
    %v3221 = vpop.permute.xlu0 %3220
    %v3222 = vsel %vm196, %v3219, 0
    %v3224 = vsel %vm196, %v3221, 0
    %3226 = vmatprep.subr.mxu0 0.0
    %3227 = vmatpush1.xpose.msra.mxu0 %v3224
    %3228 = vmatprep.subr.mxu0 0.0
    %3229 = vmatpush1.xpose.msra.mxu0 0.0
    %3230 = vmatprep.subr.mxu0 0.0
    %3231 = vmatpush1.xpose.msra.mxu0 0.0
    %3232 = vmatprep.subr.mxu0 0.0
    %3233 = vmatpush1.xpose.msra.mxu0 0.0
    %3234 = vmatprep.subr.mxu0 0.0
    %3235 = vmatpush1.xpose.msra.mxu0 0.0
    %3236 = vmatprep.subr.mxu0 0.0
    %3237 = vmatpush1.xpose.msra.mxu0 0.0
    %3238 = vmatprep.subr.mxu0 0.0
    %3239 = vmatpush1.xpose.msra.mxu0 0.0
    %3240 = vmatprep.subr.mxu0 0.0
    %3241 = vmatpush1.xpose.msra.mxu0 0.0
    %3242 = vmatprep.subr.mxu0 0.0
    %3243 = vmatpush1.xpose.msra.mxu0 0.0
    %3244 = vmatprep.subr.mxu0 0.0
    %3245 = vmatpush1.xpose.msra.mxu0 0.0
    %3246 = vmatprep.subr.mxu0 0.0
    %3247 = vmatpush1.xpose.msra.mxu0 0.0
    %3248 = vmatprep.subr.mxu0 0.0
    %3249 = vmatpush1.xpose.msra.mxu0 0.0
    %3250 = vmatprep.subr.mxu0 0.0
    %3251 = vmatpush1.xpose.msra.mxu0 0.0
    %3252 = vmatprep.subr.mxu0 0.0
    %3253 = vmatpush1.xpose.msra.mxu0 0.0
    %3254 = vmatprep.subr.mxu0 0.0
    %3255 = vmatpush1.xpose.msra.mxu0 0.0
    %3256 = vmatprep.subr.mxu0 0.0
    %3257 = vmatpush1.xpose.msra.mxu0 0.0
    %3258 = vmatprep.subr.mxu0 0.0
    %3259 = vmatpush1.xpose.msra.mxu0 0.0
    %3260 = vmatprep.subr.mxu0 0.0
    %3261 = vmatpush1.xpose.msra.mxu0 0.0
    %3262 = vmatprep.subr.mxu0 0.0
    %3263 = vmatpush1.xpose.msra.mxu0 0.0
    %3264 = vmatprep.subr.mxu0 0.0
    %3265 = vmatpush1.xpose.msra.mxu0 0.0
    %3266 = vmatprep.subr.mxu0 0.0
    %3267 = vmatpush1.xpose.msra.mxu0 0.0
    %3268 = vmatprep.subr.mxu0 0.0
    %3269 = vmatpush1.xpose.msra.mxu0 0.0
    %3270 = vmatprep.subr.mxu0 0.0
    %3271 = vmatpush1.xpose.msra.mxu0 0.0
    %3272 = vmatprep.subr.mxu0 0.0
    %3273 = vmatpush1.xpose.msra.mxu0 0.0
    %3274 = vmatprep.subr.mxu0 0.0
    %3275 = vmatpush1.xpose.msra.mxu0 0.0
    %3276 = vmatprep.subr.mxu0 0.0
    %3277 = vmatpush1.xpose.msra.mxu0 0.0
    %3278 = vmatprep.subr.mxu0 0.0
    %3279 = vmatpush1.xpose.msra.mxu0 0.0
    %3280 = vmatprep.subr.mxu0 0.0
    %3281 = vmatpush1.xpose.msra.mxu0 0.0
    %3282 = vmatprep.subr.mxu0 0.0
    %3283 = vmatpush1.xpose.msra.mxu0 0.0
    %3284 = vmatprep.subr.mxu0 0.0
    %3285 = vmatpush1.xpose.msra.mxu0 0.0
    %3286 = vmatprep.subr.mxu0 0.0
    %3287 = vmatpush1.xpose.msra.mxu0 0.0
    %3288 = vmatprep.subr.mxu0 0.0
    %3289 = vmatpush1.xpose.msra.mxu0 0.0
    %3290 = vmatprep.mubr.f32.mxu0 0.0
    %3291 = vmatmul.mubr.f32.gmra.mrb[0].mxu0 %v3222
    %v3292 = vpop.f32.mrb[0].mxu0
    %v3293 = vadd.f32 0.0, %v3292
    %v3294 = vpop.f32.mrb[0].mxu0
    %3295 = vdwg.mxu0
    %v3296 = vmul.f32 %v3293, 0.35355338
    %v3297 = vadd.f32 %v3296, %v963
    %v3298 = vsel %vm196, %v3297, -inf
    %3299 = vmax.xlane.f32.xlu0 %v3298
    %v3300 = vpop.xlane.xlu0 %3299
    %v3301 = vsub.f32 %v3297, %v3300
    %v3302 = vmul.f32 %v3301, 1.442695
    %v3303 = vpow.pop %v3302
    %v3304 = vsel %vm196, %v3303, 0.0
    %3305 = vadd.xlane.f32.xlu0 %v3304
    %v3306 = vpop.xlane.xlu0 %3305
    %v3307 = vrcp.pop %v3306
    %v3308 = vmul.f32 %v3303, %v3307
    %3309 = vrot.lane.b32.xlu0 %v2033, 40
    %v3310 = vpop.permute.xlu0 %3309
    %v3313 = vsel %vm196, %v3308, 0
    %3315 = vmatprep.subr.mxu0 0.0
    %3316 = vmatpush1.msra.mxu0 %v3310
    %3317 = vmatprep.subr.mxu0 0.0
    %3318 = vmatpush1.msra.mxu0 0.0
    %3319 = vmatprep.subr.mxu0 0.0
    %3320 = vmatpush1.msra.mxu0 0.0
    %3321 = vmatprep.subr.mxu0 0.0
    %3322 = vmatpush1.msra.mxu0 0.0
    %3323 = vmatprep.subr.mxu0 0.0
    %3324 = vmatpush1.msra.mxu0 0.0
    %3325 = vmatprep.subr.mxu0 0.0
    %3326 = vmatpush1.msra.mxu0 0.0
    %3327 = vmatprep.subr.mxu0 0.0
    %3328 = vmatpush1.msra.mxu0 0.0
    %3329 = vmatprep.subr.mxu0 0.0
    %3330 = vmatpush1.msra.mxu0 0.0
    %3331 = vmatprep.subr.mxu0 0.0
    %3332 = vmatpush1.msra.mxu0 0.0
    %3333 = vmatprep.subr.mxu0 0.0
    %3334 = vmatpush1.msra.mxu0 0.0
    %3335 = vmatprep.subr.mxu0 0.0
    %3336 = vmatpush1.msra.mxu0 0.0
    %3337 = vmatprep.subr.mxu0 0.0
    %3338 = vmatpush1.msra.mxu0 0.0
    %3339 = vmatprep.subr.mxu0 0.0
    %3340 = vmatpush1.msra.mxu0 0.0
    %3341 = vmatprep.subr.mxu0 0.0
    %3342 = vmatpush1.msra.mxu0 0.0
    %3343 = vmatprep.subr.mxu0 0.0
    %3344 = vmatpush1.msra.mxu0 0.0
    %3345 = vmatprep.subr.mxu0 0.0
    %3346 = vmatpush1.msra.mxu0 0.0
    %3347 = vmatprep.subr.mxu0 0.0
    %3348 = vmatpush1.msra.mxu0 0.0
    %3349 = vmatprep.subr.mxu0 0.0
    %3350 = vmatpush1.msra.mxu0 0.0
    %3351 = vmatprep.subr.mxu0 0.0
    %3352 = vmatpush1.msra.mxu0 0.0
    %3353 = vmatprep.subr.mxu0 0.0
    %3354 = vmatpush1.msra.mxu0 0.0
    %3355 = vmatprep.subr.mxu0 0.0
    %3356 = vmatpush1.msra.mxu0 0.0
    %3357 = vmatprep.subr.mxu0 0.0
    %3358 = vmatpush1.msra.mxu0 0.0
    %3359 = vmatprep.subr.mxu0 0.0
    %3360 = vmatpush1.msra.mxu0 0.0
    %3361 = vmatprep.subr.mxu0 0.0
    %3362 = vmatpush1.msra.mxu0 0.0
    %3363 = vmatprep.subr.mxu0 0.0
    %3364 = vmatpush1.msra.mxu0 0.0
    %3365 = vmatprep.subr.mxu0 0.0
    %3366 = vmatpush1.msra.mxu0 0.0
    %3367 = vmatprep.subr.mxu0 0.0
    %3368 = vmatpush1.msra.mxu0 0.0
    %3369 = vmatprep.subr.mxu0 0.0
    %3370 = vmatpush1.msra.mxu0 0.0
    %3371 = vmatprep.subr.mxu0 0.0
    %3372 = vmatpush1.msra.mxu0 0.0
    %3373 = vmatprep.subr.mxu0 0.0
    %3374 = vmatpush1.msra.mxu0 0.0
    %3375 = vmatprep.subr.mxu0 0.0
    %3376 = vmatpush1.msra.mxu0 0.0
    %3377 = vmatprep.subr.mxu0 0.0
    %3378 = vmatpush1.msra.mxu0 0.0
    %3379 = vmatprep.mubr.f32.mxu0 0.0
    %3380 = vmatmul.mubr.f32.gmra.mrb[0].mxu0 %v3313
    %v3381 = vpop.f32.mrb[0].mxu0
    %v3382 = vadd.f32 0.0, %v3381
    %v3383 = vpop.f32.mrb[0].mxu0
    %3384 = vdwg.mxu0
    %3386 = vrot.lane.b32.xlu0 %v3048, 8
    %v3387 = vpop.permute.xlu0 %3386
    %3390 = vrot.lane.b32.xlu0 %v3215, 16
    %v3391 = vpop.permute.xlu0 %3390
    %3394 = vrot.lane.b32.xlu0 %v3382, 24
    %v3395 = vpop.permute.xlu0 %3394
    %v3397 = vsel %vm196, %v2881, %v3387
    %v3398 = vsel %vm878, %v3397, %v3391
    %v3399 = vsel %vm880, %v3398, %v3395
    %s3400 = scalar_lea.vmem %s3, 32
    %v3401 = vld [vmem:[%s3400] sm:$0xff]
    %v3402 = vld [vmem:[%s3400 + $0x8] sm:$0xff]
    %v3403 = vld [vmem:[%s3400 + $0x10] sm:$0xff]
    %v3404 = vld [vmem:[%s3400 + $0x18] sm:$0xff]
    %v3405 = vld [vmem:[#allocation5 + $0x9] sm:$0x1]
    %v3406 = vlaneseq
    %v3407 = vshrl.u32 %v3406, 7
    %v3408 = vsub.s32 0, %v3407
    %v3409 = vrot.slane %v3405, %v3408
    %v3411 = vsel %vm62, %v2717, 0
    %v3414 = vsel %vm62, %v3399, 0
    %3416 = vmatprep.subr.mxu0 0.0
    %3417 = vmatpush1.msra.mxu0 %v3401
    %3418 = vmatprep.subr.mxu0 0.0
    %3419 = vmatpush1.msra.mxu0 %v3402
    %3420 = vmatprep.subr.mxu0 0.0
    %3421 = vmatpush1.msra.mxu0 %v3403
    %3422 = vmatprep.subr.mxu0 0.0
    %3423 = vmatpush1.msra.mxu0 %v3404
    %3424 = vmatprep.subr.mxu0 0.0
    %3425 = vmatpush1.msra.mxu0 0.0
    %3426 = vmatprep.subr.mxu0 0.0
    %3427 = vmatpush1.msra.mxu0 0.0
    %3428 = vmatprep.subr.mxu0 0.0
    %3429 = vmatpush1.msra.mxu0 0.0
    %3430 = vmatprep.subr.mxu0 0.0
    %3431 = vmatpush1.msra.mxu0 0.0
    %3432 = vmatprep.subr.mxu0 0.0
    %3433 = vmatpush1.msra.mxu0 0.0
    %3434 = vmatprep.subr.mxu0 0.0
    %3435 = vmatpush1.msra.mxu0 0.0
    %3436 = vmatprep.subr.mxu0 0.0
    %3437 = vmatpush1.msra.mxu0 0.0
    %3438 = vmatprep.subr.mxu0 0.0
    %3439 = vmatpush1.msra.mxu0 0.0
    %3440 = vmatprep.subr.mxu0 0.0
    %3441 = vmatpush1.msra.mxu0 0.0
    %3442 = vmatprep.subr.mxu0 0.0
    %3443 = vmatpush1.msra.mxu0 0.0
    %3444 = vmatprep.subr.mxu0 0.0
    %3445 = vmatpush1.msra.mxu0 0.0
    %3446 = vmatprep.subr.mxu0 0.0
    %3447 = vmatpush1.msra.mxu0 0.0
    %3448 = vmatprep.subr.mxu0 0.0
    %3449 = vmatpush1.msra.mxu0 0.0
    %3450 = vmatprep.subr.mxu0 0.0
    %3451 = vmatpush1.msra.mxu0 0.0
    %3452 = vmatprep.subr.mxu0 0.0
    %3453 = vmatpush1.msra.mxu0 0.0
    %3454 = vmatprep.subr.mxu0 0.0
    %3455 = vmatpush1.msra.mxu0 0.0
    %3456 = vmatprep.subr.mxu0 0.0
    %3457 = vmatpush1.msra.mxu0 0.0
    %3458 = vmatprep.subr.mxu0 0.0
    %3459 = vmatpush1.msra.mxu0 0.0
    %3460 = vmatprep.subr.mxu0 0.0
    %3461 = vmatpush1.msra.mxu0 0.0
    %3462 = vmatprep.subr.mxu0 0.0
    %3463 = vmatpush1.msra.mxu0 0.0
    %3464 = vmatprep.subr.mxu0 0.0
    %3465 = vmatpush1.msra.mxu0 0.0
    %3466 = vmatprep.subr.mxu0 0.0
    %3467 = vmatpush1.msra.mxu0 0.0
    %3468 = vmatprep.subr.mxu0 0.0
    %3469 = vmatpush1.msra.mxu0 0.0
    %3470 = vmatprep.subr.mxu0 0.0
    %3471 = vmatpush1.msra.mxu0 0.0
    %3472 = vmatprep.subr.mxu0 0.0
    %3473 = vmatpush1.msra.mxu0 0.0
    %3474 = vmatprep.subr.mxu0 0.0
    %3475 = vmatpush1.msra.mxu0 0.0
    %3476 = vmatprep.subr.mxu0 0.0
    %3477 = vmatpush1.msra.mxu0 0.0
    %3478 = vmatprep.subr.mxu0 0.0
    %3479 = vmatpush1.msra.mxu0 0.0
    %3480 = vmatprep.mubr.f32.mxu0 0.0
    %3481 = vmatmul.mubr.f32.gmra.mrb[0].mxu0 %v3411
    %v3482 = vpop.f32.mrb[0].mxu0
    %v3483 = vadd.f32 %v3409, %v3482
    %v3484 = vpop.f32.mrb[0].mxu0
    %3485 = vmatprep.mubr.f32.mxu0 0.0
    %3486 = vmatmul.mubr.f32.gmra.mrb[0].mxu0 %v3414
    %v3487 = vpop.f32.mrb[0].mxu0
    %v3488 = vadd.f32 %v3409, %v3487
    %v3489 = vpop.f32.mrb[0].mxu0
    %3490 = vdwg.mxu0
    %v3491 = vadd.f32 %v3483, %v1943
    %v3492 = vadd.f32 %v3488, %v1944
    %v3493 = vld [vmem:[#allocation5 + $0xa] sm:$0x1]
    %v3494 = vld [vmem:[#allocation5 + $0xb] sm:$0x1]
    %v3495 = vsel %vm62, %v3491, 0.0
    %3496 = vadd.xlane.f32.xlu0 %v3495
    %v3497 = vpop.xlane.xlu0 %3496
    %v3498 = vsel %vm62, %v3492, 0.0
    %3499 = vadd.xlane.f32.xlu0 %v3498
    %v3500 = vpop.xlane.xlu0 %3499
    %v3501 = vmul.f32 %v3497, %v69
    %v3502 = vmul.f32 %v3500, %v69
    %v3503 = vsub.f32 %v3491, %v3501
    %v3504 = vsub.f32 %v3492, %v3502
    %v3505 = vmul.f32 %v3503, %v3503
    %v3506 = vmul.f32 %v3504, %v3504
    %v3507 = vsel %vm62, %v3505, 0.0
    %3508 = vadd.xlane.f32.xlu0 %v3507
    %v3509 = vpop.xlane.xlu0 %3508
    %v3510 = vsel %vm62, %v3506, 0.0
    %3511 = vadd.xlane.f32.xlu0 %v3510
    %v3512 = vpop.xlane.xlu0 %3511
    %v3513 = vmul.f32 %v3509, %v69
    %v3514 = vmul.f32 %v3512, %v69
    %v3515 = vadd.f32 %v3513, 1e-12
    %v3516 = vadd.f32 %v3514, 1e-12
    %v3517 = vrsqrt.pop %v3515
    %v3518 = vrsqrt.pop %v3516
    %v3519 = vmul.f32 %v3503, %v3517
    %v3520 = vmul.f32 %v3504, %v3518
    %v3521 = vlaneseq
    %v3522 = vshrl.u32 %v3521, 7
    %v3523 = vsub.s32 0, %v3522
    %v3524 = vrot.slane %v3493, %v3523
    %v3525 = vmul.f32 %v3519, %v3524
    %v3526 = vmul.f32 %v3520, %v3524
    %v3527 = vlaneseq
    %v3528 = vshrl.u32 %v3527, 7
    %v3529 = vsub.s32 0, %v3528
    %v3530 = vrot.slane %v3494, %v3529
    %v3531 = vadd.f32 %v3525, %v3530
    %v3532 = vadd.f32 %v3526, %v3530
    %s3533 = scalar_lea.vmem %s4, 32
    %v3534 = vld [vmem:[%s3533] sm:$0xff]
    %v3535 = vld [vmem:[%s3533 + $0x8] sm:$0xff]
    %v3536 = vld [vmem:[%s3533 + $0x10] sm:$0xff]
    %v3537 = vld [vmem:[%s3533 + $0x18] sm:$0xff]
    %v3538 = vld [vmem:[#allocation5 + $0xc] sm:$0x1]
    %v3539 = vlaneseq
    %v3540 = vshrl.u32 %v3539, 7
    %v3541 = vsub.s32 0, %v3540
    %v3542 = vrot.slane %v3538, %v3541
    %v3544 = vsel %vm62, %v3531, 0
    %v3547 = vsel %vm62, %v3532, 0
    %3549 = vmatprep.subr.mxu0 0.0
    %3550 = vmatpush1.msra.mxu0 %v3534
    %3551 = vmatprep.subr.mxu0 0.0
    %3552 = vmatpush1.msra.mxu0 %v3535
    %3553 = vmatprep.subr.mxu0 0.0
    %3554 = vmatpush1.msra.mxu0 %v3536
    %3555 = vmatprep.subr.mxu0 0.0
    %3556 = vmatpush1.msra.mxu0 %v3537
    %3557 = vmatprep.subr.mxu0 0.0
    %3558 = vmatpush1.msra.mxu0 0.0
    %3559 = vmatprep.subr.mxu0 0.0
    %3560 = vmatpush1.msra.mxu0 0.0
    %3561 = vmatprep.subr.mxu0 0.0
    %3562 = vmatpush1.msra.mxu0 0.0
    %3563 = vmatprep.subr.mxu0 0.0
    %3564 = vmatpush1.msra.mxu0 0.0
    %3565 = vmatprep.subr.mxu0 0.0
    %3566 = vmatpush1.msra.mxu0 0.0
    %3567 = vmatprep.subr.mxu0 0.0
    %3568 = vmatpush1.msra.mxu0 0.0
    %3569 = vmatprep.subr.mxu0 0.0
    %3570 = vmatpush1.msra.mxu0 0.0
    %3571 = vmatprep.subr.mxu0 0.0
    %3572 = vmatpush1.msra.mxu0 0.0
    %3573 = vmatprep.subr.mxu0 0.0
    %3574 = vmatpush1.msra.mxu0 0.0
    %3575 = vmatprep.subr.mxu0 0.0
    %3576 = vmatpush1.msra.mxu0 0.0
    %3577 = vmatprep.subr.mxu0 0.0
    %3578 = vmatpush1.msra.mxu0 0.0
    %3579 = vmatprep.subr.mxu0 0.0
    %3580 = vmatpush1.msra.mxu0 0.0
    %3581 = vmatprep.subr.mxu0 0.0
    %3582 = vmatpush1.msra.mxu0 0.0
    %3583 = vmatprep.subr.mxu0 0.0
    %3584 = vmatpush1.msra.mxu0 0.0
    %3585 = vmatprep.subr.mxu0 0.0
    %3586 = vmatpush1.msra.mxu0 0.0
    %3587 = vmatprep.subr.mxu0 0.0
    %3588 = vmatpush1.msra.mxu0 0.0
    %3589 = vmatprep.subr.mxu0 0.0
    %3590 = vmatpush1.msra.mxu0 0.0
    %3591 = vmatprep.subr.mxu0 0.0
    %3592 = vmatpush1.msra.mxu0 0.0
    %3593 = vmatprep.subr.mxu0 0.0
    %3594 = vmatpush1.msra.mxu0 0.0
    %3595 = vmatprep.subr.mxu0 0.0
    %3596 = vmatpush1.msra.mxu0 0.0
    %3597 = vmatprep.subr.mxu0 0.0
    %3598 = vmatpush1.msra.mxu0 0.0
    %3599 = vmatprep.subr.mxu0 0.0
    %3600 = vmatpush1.msra.mxu0 0.0
    %3601 = vmatprep.subr.mxu0 0.0
    %3602 = vmatpush1.msra.mxu0 0.0
    %3603 = vmatprep.subr.mxu0 0.0
    %3604 = vmatpush1.msra.mxu0 0.0
    %3605 = vmatprep.subr.mxu0 0.0
    %3606 = vmatpush1.msra.mxu0 0.0
    %3607 = vmatprep.subr.mxu0 0.0
    %3608 = vmatpush1.msra.mxu0 0.0
    %3609 = vmatprep.subr.mxu0 0.0
    %3610 = vmatpush1.msra.mxu0 0.0
    %3611 = vmatprep.subr.mxu0 0.0
    %3612 = vmatpush1.msra.mxu0 0.0
    %3613 = vmatprep.mubr.f32.mxu0 0.0
    %3614 = vmatmul.mubr.f32.gmra.mrb[0].mxu0 %v3544
    %v3615 = vpop.f32.mrb[0].mxu0
    %v3616 = vadd.f32 %v3542, %v3615
    %v3617 = vpop.f32.mrb[0].mxu0
    %3618 = vmatprep.mubr.f32.mxu0 0.0
    %3619 = vmatmul.mubr.f32.gmra.mrb[0].mxu0 %v3547
    %v3620 = vpop.f32.mrb[0].mxu0
    %v3621 = vadd.f32 %v3542, %v3620
    %v3622 = vpop.f32.mrb[0].mxu0
    %3623 = vdwg.mxu0
    %v3624 = vmul.f32 %v3616, 0.5
    %v3625 = vmul.f32 %v3621, 0.5
    %v3626 = vmul.f32 %v3616, 0.044715
    %v3627 = vmul.f32 %v3621, 0.044715
    %v3628 = vmul.f32 %v3626, %v3616
    %v3629 = vmul.f32 %v3627, %v3621
    %v3630 = vmul.f32 %v3628, %v3616
    %v3631 = vmul.f32 %v3629, %v3621
    %v3632 = vadd.f32 %v3616, %v3630
    %v3633 = vadd.f32 %v3621, %v3631
    %v3634 = vmul.f32 %v3632, 0.7978846
    %v3635 = vmul.f32 %v3633, 0.7978846
    %v3636 = vtanh.pop %v3634
    %v3637 = vtanh.pop %v3635
    %v3638 = vadd.f32 %v3636, 1.0
    %v3639 = vadd.f32 %v3637, 1.0
    %v3640 = vmul.f32 %v3624, %v3638
    %v3641 = vmul.f32 %v3625, %v3639
    %s3642 = scalar_lea.vmem %s5, 64
    %v3643 = vld [vmem:[%s3642] sm:$0xff]
    %v3644 = vld [vmem:[%s3642 + $0x8] sm:$0xff]
    %v3645 = vld [vmem:[%s3642 + $0x10] sm:$0xff]
    %v3646 = vld [vmem:[%s3642 + $0x18] sm:$0xff]
    %v3647 = vld [vmem:[%s3642 + $0x20] sm:$0xff]
    %v3648 = vld [vmem:[%s3642 + $0x28] sm:$0xff]
    %v3649 = vld [vmem:[%s3642 + $0x30] sm:$0xff]
    %v3650 = vld [vmem:[%s3642 + $0x38] sm:$0xff]
    %v3651 = vld [vmem:[#allocation5 + $0xd] sm:$0x1]
    %v3652 = vlaneseq
    %v3653 = vshrl.u32 %v3652, 7
    %v3654 = vsub.s32 0, %v3653
    %v3655 = vrot.slane %v3651, %v3654
    %v3657 = vsel %vm1821, %v3640, 0
    %v3660 = vsel %vm1821, %v3641, 0
    %3662 = vmatprep.subr.mxu0 0.0
    %3663 = vmatpush1.msra.mxu0 %v3643
    %3664 = vmatprep.subr.mxu0 0.0
    %3665 = vmatpush1.msra.mxu0 %v3644
    %3666 = vmatprep.subr.mxu0 0.0
    %3667 = vmatpush1.msra.mxu0 %v3645
    %3668 = vmatprep.subr.mxu0 0.0
    %3669 = vmatpush1.msra.mxu0 %v3646
    %3670 = vmatprep.subr.mxu0 0.0
    %3671 = vmatpush1.msra.mxu0 %v3647
    %3672 = vmatprep.subr.mxu0 0.0
    %3673 = vmatpush1.msra.mxu0 %v3648
    %3674 = vmatprep.subr.mxu0 0.0
    %3675 = vmatpush1.msra.mxu0 %v3649
    %3676 = vmatprep.subr.mxu0 0.0
    %3677 = vmatpush1.msra.mxu0 %v3650
    %3678 = vmatprep.subr.mxu0 0.0
    %3679 = vmatpush1.msra.mxu0 0.0
    %3680 = vmatprep.subr.mxu0 0.0
    %3681 = vmatpush1.msra.mxu0 0.0
    %3682 = vmatprep.subr.mxu0 0.0
    %3683 = vmatpush1.msra.mxu0 0.0
    %3684 = vmatprep.subr.mxu0 0.0
    %3685 = vmatpush1.msra.mxu0 0.0
    %3686 = vmatprep.subr.mxu0 0.0
    %3687 = vmatpush1.msra.mxu0 0.0
    %3688 = vmatprep.subr.mxu0 0.0
    %3689 = vmatpush1.msra.mxu0 0.0
    %3690 = vmatprep.subr.mxu0 0.0
    %3691 = vmatpush1.msra.mxu0 0.0
    %3692 = vmatprep.subr.mxu0 0.0
    %3693 = vmatpush1.msra.mxu0 0.0
    %3694 = vmatprep.subr.mxu0 0.0
    %3695 = vmatpush1.msra.mxu0 0.0
    %3696 = vmatprep.subr.mxu0 0.0
    %3697 = vmatpush1.msra.mxu0 0.0
    %3698 = vmatprep.subr.mxu0 0.0
    %3699 = vmatpush1.msra.mxu0 0.0
    %3700 = vmatprep.subr.mxu0 0.0
    %3701 = vmatpush1.msra.mxu0 0.0
    %3702 = vmatprep.subr.mxu0 0.0
    %3703 = vmatpush1.msra.mxu0 0.0
    %3704 = vmatprep.subr.mxu0 0.0
    %3705 = vmatpush1.msra.mxu0 0.0
    %3706 = vmatprep.subr.mxu0 0.0
    %3707 = vmatpush1.msra.mxu0 0.0
    %3708 = vmatprep.subr.mxu0 0.0
    %3709 = vmatpush1.msra.mxu0 0.0
    %3710 = vmatprep.subr.mxu0 0.0
    %3711 = vmatpush1.msra.mxu0 0.0
    %3712 = vmatprep.subr.mxu0 0.0
    %3713 = vmatpush1.msra.mxu0 0.0
    %3714 = vmatprep.subr.mxu0 0.0
    %3715 = vmatpush1.msra.mxu0 0.0
    %3716 = vmatprep.subr.mxu0 0.0
    %3717 = vmatpush1.msra.mxu0 0.0
    %3718 = vmatprep.subr.mxu0 0.0
    %3719 = vmatpush1.msra.mxu0 0.0
    %3720 = vmatprep.subr.mxu0 0.0
    %3721 = vmatpush1.msra.mxu0 0.0
    %3722 = vmatprep.subr.mxu0 0.0
    %3723 = vmatpush1.msra.mxu0 0.0
    %3724 = vmatprep.subr.mxu0 0.0
    %3725 = vmatpush1.msra.mxu0 0.0
    %3726 = vmatprep.mubr.f32.mxu0 0.0
    %3727 = vmatmul.mubr.f32.gmra.mrb[0].mxu0 %v3657
    %v3728 = vpop.f32.mrb[0].mxu0
    %v3729 = vadd.f32 %v3655, %v3728
    %v3730 = vpop.f32.mrb[0].mxu0
    %3731 = vmatprep.mubr.f32.mxu0 0.0
    %3732 = vmatmul.mubr.f32.gmra.mrb[0].mxu0 %v3660
    %v3733 = vpop.f32.mrb[0].mxu0
    %v3734 = vadd.f32 %v3655, %v3733
    %v3735 = vpop.f32.mrb[0].mxu0
    %3736 = vdwg.mxu0
    %v3737 = vadd.f32 %v3729, %v3531
    %v3738 = vadd.f32 %v3734, %v3532
    %v3739 = vld [vmem:[#allocation5 + $0xe] sm:$0x1]
    %v3740 = vld [vmem:[#allocation5 + $0xf] sm:$0x1]
    %v3741 = vsel %vm62, %v3737, 0.0
    %3742 = vadd.xlane.f32.xlu0 %v3741
    %v3743 = vpop.xlane.xlu0 %3742
    %v3744 = vsel %vm62, %v3738, 0.0
    %3745 = vadd.xlane.f32.xlu0 %v3744
    %v3746 = vpop.xlane.xlu0 %3745
    %v3747 = vmul.f32 %v3743, %v69
    %v3748 = vmul.f32 %v3746, %v69
    %v3749 = vsub.f32 %v3737, %v3747
    %v3750 = vsub.f32 %v3738, %v3748
    %v3751 = vmul.f32 %v3749, %v3749
    %v3752 = vmul.f32 %v3750, %v3750
    %v3753 = vsel %vm62, %v3751, 0.0
    %3754 = vadd.xlane.f32.xlu0 %v3753
    %v3755 = vpop.xlane.xlu0 %3754
    %v3756 = vsel %vm62, %v3752, 0.0
    %3757 = vadd.xlane.f32.xlu0 %v3756
    %v3758 = vpop.xlane.xlu0 %3757
    %v3759 = vmul.f32 %v3755, %v69
    %v3760 = vmul.f32 %v3758, %v69
    %v3761 = vadd.f32 %v3759, 1e-12
    %v3762 = vadd.f32 %v3760, 1e-12
    %v3763 = vrsqrt.pop %v3761
    %v3764 = vrsqrt.pop %v3762
    %v3765 = vmul.f32 %v3749, %v3763
    %v3766 = vmul.f32 %v3750, %v3764
    %v3767 = vlaneseq
    %v3768 = vshrl.u32 %v3767, 7
    %v3769 = vsub.s32 0, %v3768
    %v3770 = vrot.slane %v3739, %v3769
    %v3771 = vmul.f32 %v3765, %v3770
    %v3772 = vmul.f32 %v3766, %v3770
    %v3773 = vlaneseq
    %v3774 = vshrl.u32 %v3773, 7
    %v3775 = vsub.s32 0, %v3774
    %v3776 = vrot.slane %v3740, %v3775
    %v3777 = vadd.f32 %v3771, %v3776
    %v3778 = vadd.f32 %v3772, %v3776
    %v3779 = vld [vmem:[%s7] sm:$0xff]
    %v3780 = vld [vmem:[%s7 + $0x8] sm:$0xff]
    %v3781 = vld [vmem:[%s7 + $0x10] sm:$0xff]
    %v3782 = vld [vmem:[%s7 + $0x18] sm:$0xff]
    %v3783 = vld [vmem:[#allocation5 + $0x12] sm:$0x1]
    %v3784 = vlaneseq
    %v3785 = vshrl.u32 %v3784, 7
    %v3786 = vsub.s32 0, %v3785
    %v3787 = vrot.slane %v3783, %v3786
    %v3789 = vsel %vm62, %v3777, 0
    %v3792 = vsel %vm62, %v3778, 0
    %3794 = vmatprep.subr.mxu0 0.0
    %3795 = vmatpush1.msra.mxu0 %v3779
    %3796 = vmatprep.subr.mxu0 0.0
    %3797 = vmatpush1.msra.mxu0 %v3780
    %3798 = vmatprep.subr.mxu0 0.0
    %3799 = vmatpush1.msra.mxu0 %v3781
    %3800 = vmatprep.subr.mxu0 0.0
    %3801 = vmatpush1.msra.mxu0 %v3782
    %3802 = vmatprep.subr.mxu0 0.0
    %3803 = vmatpush1.msra.mxu0 0.0
    %3804 = vmatprep.subr.mxu0 0.0
    %3805 = vmatpush1.msra.mxu0 0.0
    %3806 = vmatprep.subr.mxu0 0.0
    %3807 = vmatpush1.msra.mxu0 0.0
    %3808 = vmatprep.subr.mxu0 0.0
    %3809 = vmatpush1.msra.mxu0 0.0
    %3810 = vmatprep.subr.mxu0 0.0
    %3811 = vmatpush1.msra.mxu0 0.0
    %3812 = vmatprep.subr.mxu0 0.0
    %3813 = vmatpush1.msra.mxu0 0.0
    %3814 = vmatprep.subr.mxu0 0.0
    %3815 = vmatpush1.msra.mxu0 0.0
    %3816 = vmatprep.subr.mxu0 0.0
    %3817 = vmatpush1.msra.mxu0 0.0
    %3818 = vmatprep.subr.mxu0 0.0
    %3819 = vmatpush1.msra.mxu0 0.0
    %3820 = vmatprep.subr.mxu0 0.0
    %3821 = vmatpush1.msra.mxu0 0.0
    %3822 = vmatprep.subr.mxu0 0.0
    %3823 = vmatpush1.msra.mxu0 0.0
    %3824 = vmatprep.subr.mxu0 0.0
    %3825 = vmatpush1.msra.mxu0 0.0
    %3826 = vmatprep.subr.mxu0 0.0
    %3827 = vmatpush1.msra.mxu0 0.0
    %3828 = vmatprep.subr.mxu0 0.0
    %3829 = vmatpush1.msra.mxu0 0.0
    %3830 = vmatprep.subr.mxu0 0.0
    %3831 = vmatpush1.msra.mxu0 0.0
    %3832 = vmatprep.subr.mxu0 0.0
    %3833 = vmatpush1.msra.mxu0 0.0
    %3834 = vmatprep.subr.mxu0 0.0
    %3835 = vmatpush1.msra.mxu0 0.0
    %3836 = vmatprep.subr.mxu0 0.0
    %3837 = vmatpush1.msra.mxu0 0.0
    %3838 = vmatprep.subr.mxu0 0.0
    %3839 = vmatpush1.msra.mxu0 0.0
    %3840 = vmatprep.subr.mxu0 0.0
    %3841 = vmatpush1.msra.mxu0 0.0
    %3842 = vmatprep.subr.mxu0 0.0
    %3843 = vmatpush1.msra.mxu0 0.0
    %3844 = vmatprep.subr.mxu0 0.0
    %3845 = vmatpush1.msra.mxu0 0.0
    %3846 = vmatprep.subr.mxu0 0.0
    %3847 = vmatpush1.msra.mxu0 0.0
    %3848 = vmatprep.subr.mxu0 0.0
    %3849 = vmatpush1.msra.mxu0 0.0
    %3850 = vmatprep.subr.mxu0 0.0
    %3851 = vmatpush1.msra.mxu0 0.0
    %3852 = vmatprep.subr.mxu0 0.0
    %3853 = vmatpush1.msra.mxu0 0.0
    %3854 = vmatprep.subr.mxu0 0.0
    %3855 = vmatpush1.msra.mxu0 0.0
    %3856 = vmatprep.subr.mxu0 0.0
    %3857 = vmatpush1.msra.mxu0 0.0
    %3858 = vmatprep.mubr.f32.mxu0 0.0
    %3859 = vmatmul.mubr.f32.gmra.mrb[0].mxu0 %v3789
    %v3860 = vpop.f32.mrb[0].mxu0
    %v3861 = vadd.f32 %v3787, %v3860
    %v3862 = vpop.f32.mrb[0].mxu0
    %3863 = vmatprep.mubr.f32.mxu0 0.0
    %3864 = vmatmul.mubr.f32.gmra.mrb[0].mxu0 %v3792
    %v3865 = vpop.f32.mrb[0].mxu0
    %v3866 = vadd.f32 %v3787, %v3865
    %v3867 = vpop.f32.mrb[0].mxu0
    %3868 = vdwg.mxu0
    %v3869 = vmax.f32 %v3861, 0.0
    %v3870 = vmax.f32 %v3866, 0.0
    %3871 = vst.msk [vmem:[#allocation7] sm:$0xff] %vm878, %v3869
    %3872 = vst.msk [vmem:[#allocation7 + $0x8] sm:$0xff] %vm878, %v3870
    // Predicated region
    $region42: #{tpu_custom_call.1} parent=1 // pred_check
      _
    $region43: #{tpu_custom_call.1} parent=1 // pred_check_branch
      %3874 = sbr.rel (0) target = $region45
    $region44: #{tpu_custom_call.1} parent=1 // pred_region
      %s3876 = ssub.s32 256, 256
      %3877 = vsyncadd [#allocation4], %s3876
      %s3878 = sshll.u32 [#allocation7], 4
      %s3879 = int_to_ptr.vmem [resolvable:$true] %s3878
      %3884 = dma.vmem_to_hbm [thread:$0]  %s3879, 256, %s8, [#allocation4], 128, 128, 8
    $region45: #{tpu_custom_call.1} parent=1 // pred_fallthru
      _
    // Predicated region
    $region46: #{tpu_custom_call.1} parent=1 // pred_check
      _
    $region47: #{tpu_custom_call.1} parent=1 // pred_check_branch
      %3886 = sbr.rel (0) target = $region49
    $region48: #{tpu_custom_call.1} parent=1 // pred_region
      %3887 = dma.done [#allocation4], 256
    $region49: #{tpu_custom_call.1} parent=1 // pred_fallthru
      _
    %3888 = vsyncpa [#allocation3], 1
    %3889 = vsyncpa [#allocation6], 1
    %3890 = vsyncpa [#allocation4], 1

</llo_original>
